<compile_context>
chip_gen: v7x
topology: tpu7x:2x2x1
jax: 0.10.0
libtpu: 0.0.40
codegen_flags: <defaults>
</compile_context>

<pallas_src>
import functools

import jax
import jax.numpy as jnp
from jax import lax
from jax.experimental import pallas as pl
from jax.experimental.pallas import tpu as pltpu


def _round_up(x, m):
    return -(-x // m) * m


def _rpn_head_kernel(x_ref, wconv_ref, bconv_ref, whead_ref, bhead_ref,
                     out_ref, acc_ref, *, TH, Wp):
    """One (batch, H-tile) grid step.

    x_ref    : (1, (H+2)*Wp + 8, Cin)  bf16  flattened zero-padded image.
    wconv_ref: (9, Cin, Cout)          bf16  3x3 taps, index = dy*3 + dx.
    bconv_ref: (1, Cout)               f32.
    whead_ref: (Cout, Npad)            bf16  fused cls|box 1x1 weight (lane padded).
    bhead_ref: (1, Npad)               f32.
    out_ref  : (1, TH*Wp, Npad)        f32   lane-dense, padded-width frame.
    acc_ref  : (TH*Wp, Cout)           f32   VMEM scratch accumulator.
    """
    rows = TH * Wp                 # output rows (padded-width frame) per tile
    ts = (TH + 2) * Wp             # input rows needed (2-row halo)
    t = pl.program_id(1)
    base = pl.multiple_of(t * rows, 8)

    # Halo'd input slab for this H-tile, loaded once (sublane-aligned slice).
    s_ext = x_ref[0, pl.ds(base, ts + 8), :]

    acc_ref[...] = jnp.zeros_like(acc_ref)

    # 3x3 conv as 9 MXU matmuls.  Only the dx shift needs any relayout and it
    # is hoisted to one shifted view per dx; all dy slices of it are aligned
    # contiguous views (offsets are multiples of Wp, Wp % 8 == 0).
    for dx in range(3):
        sdx = s_ext[dx:dx + ts, :]
        for dy in range(3):
            acc_ref[...] += jnp.dot(
                sdx[dy * Wp:dy * Wp + rows, :],
                wconv_ref[dy * 3 + dx],
                preferred_element_type=jnp.float32)

    rpn_conv = jnp.maximum(acc_ref[...] + bconv_ref[...], 0.0)
    rpn_conv = rpn_conv.astype(whead_ref.dtype)

    # Fused cls+box heads: one lane-dense (rows, Npad) matmul and one store.
    head = jnp.dot(rpn_conv, whead_ref[...],
                   preferred_element_type=jnp.float32) + bhead_ref[...]
    out_ref[0] = head.astype(out_ref.dtype)


def rpn_head_pallas(x_nchw, w_conv_oihw, b_conv, w_cls_oihw, b_cls,
                    w_box_oihw, b_box, *, h_tile=8):
    """Runs the RPN conv head. Returns dict with NCHW f32 outputs."""
    B, Cin, H, W = x_nchw.shape
    Cout = w_conv_oihw.shape[0]
    A = w_cls_oihw.shape[0]
    assert w_box_oihw.shape[0] == 4 * A

    # Largest divisor of H that is <= h_tile.
    TH = max(d for d in range(1, min(H, h_tile) + 1) if H % d == 0)
    n_t = H // TH

    Wp = _round_up(W + 2, 8)            # padded width (sublane aligned)
    Npad = _round_up(5 * A, 128)        # fused cls+box channels (lane dense)
    rows = TH * Wp
    n_in_rows = (H + 2) * Wp + 8        # +8 zero rows so the halo load never OOBs

    # --- layout prep: NCHW -> flattened padded NHWC, bf16 activations/weights.
    x_nhwc = jnp.transpose(x_nchw, (0, 2, 3, 1))
    x_pad = jnp.pad(x_nhwc, ((0, 0), (1, 1), (1, Wp - W - 1), (0, 0)))
    x_flat = x_pad.reshape(B, (H + 2) * Wp, Cin)
    x_flat = jnp.pad(x_flat, ((0, 0), (0, 8), (0, 0))).astype(jnp.bfloat16)
    # TODO(synk): the transpose+pad above is one extra HBM pass over the
    # feature map; fold into the producer or a manual halo DMA if it matters.

    w_conv = jnp.transpose(w_conv_oihw, (2, 3, 1, 0)).reshape(9, Cin, Cout)
    w_conv = w_conv.astype(jnp.bfloat16)

    w_head = jnp.concatenate(
        [w_cls_oihw[:, :, 0, 0], w_box_oihw[:, :, 0, 0]], axis=0)   # (5A, Cout)
    w_head = jnp.pad(jnp.transpose(w_head, (1, 0)),
                     ((0, 0), (0, Npad - 5 * A))).astype(jnp.bfloat16)  # (Cout, Npad)

    b_conv2 = b_conv.reshape(1, Cout).astype(jnp.float32)
    b_head = jnp.pad(jnp.concatenate([b_cls, b_box]), (0, Npad - 5 * A))
    b_head = b_head.reshape(1, Npad).astype(jnp.float32)

    kernel = functools.partial(_rpn_head_kernel, TH=TH, Wp=Wp)

    def full(shape):
        return pl.BlockSpec(shape, lambda b, t: (0,) * len(shape))

    # Advisory VMEM budget derived from actual block sizes (2x for pipelining).
    xb = n_in_rows * Cin * 2
    wb = 9 * Cin * Cout * 2 + Cout * 4 + Cout * Npad * 2 + Npad * 4
    ob = rows * Npad * 4
    acc_b = rows * Cout * 4
    vmem_limit = max(16 << 20, min(2 * (xb + wb + ob) + acc_b + (4 << 20),
                                   100 << 20))

    head = pl.pallas_call(
        kernel,
        out_shape=jax.ShapeDtypeStruct((B, H * Wp, Npad), jnp.float32),
        grid_spec=pltpu.PrefetchScalarGridSpec(
            num_scalar_prefetch=0,
            grid=(B, n_t),
            in_specs=[
                pl.BlockSpec((1, n_in_rows, Cin), lambda b, t: (b, 0, 0)),
                full((9, Cin, Cout)),
                full((1, Cout)),
                full((Cout, Npad)),
                full((1, Npad)),
            ],
            out_specs=pl.BlockSpec((1, rows, Npad), lambda b, t: (b, t, 0)),
            scratch_shapes=[pltpu.VMEM((rows, Cout), jnp.float32)],
        ),
        compiler_params=pltpu.CompilerParams(
            dimension_semantics=("parallel", "parallel"),
            vmem_limit_bytes=int(vmem_limit)),
    )(x_flat, w_conv, b_conv2, w_head, b_head)

    # Drop padded-width junk columns and split the fused lane-dense slab.
    head = head.reshape(B, H, Wp, Npad)[:, :, :W, :]
    cls_nhwc = head[..., :A]
    box_nhwc = head[..., A:5 * A]
    prob_nhwc = jax.nn.sigmoid(cls_nhwc)

    to_nchw = lambda t: jnp.transpose(t, (0, 3, 1, 2))
    return {
        "rpn_cls_logits": to_nchw(cls_nhwc),
        "rpn_bbox_pred": to_nchw(box_nhwc),
        "rpn_cls_prob": to_nchw(prob_nhwc),
    }


def rpn_head_reference(x_nchw, w_conv, b_conv, w_cls, b_cls, w_box, b_box):
    """Pure-JAX f32 reference matching the PyTorch module (NCHW / OIHW)."""
    dn = ("NCHW", "OIHW", "NCHW")
    conv = lax.conv_general_dilated(x_nchw, w_conv, (1, 1), "SAME",
                                    dimension_numbers=dn)
    conv = jax.nn.relu(conv + b_conv[None, :, None, None])
    cls = lax.conv_general_dilated(conv, w_cls, (1, 1), "VALID",
                                   dimension_numbers=dn)
    cls = cls + b_cls[None, :, None, None]
    box = lax.conv_general_dilated(conv, w_box, (1, 1), "VALID",
                                   dimension_numbers=dn)
    box = box + b_box[None, :, None, None]
    return {
        "rpn_cls_logits": cls,
        "rpn_bbox_pred": box,
        "rpn_cls_prob": jax.nn.sigmoid(cls),
    }


if __name__ == "__main__":
    # Small, module-consistent shapes.
    B, dim_in, H, W = 2, 32, 16, 16
    dim_out = dim_in                      # cfg.RPN.OUT_DIM_AS_IN_DIM = True
    num_anchors = 9                       # 3 sizes x 3 aspect ratios
    n_score_out = num_anchors             # cfg.RPN.CLS_ACTIVATION == 'sigmoid'

    key = jax.random.PRNGKey(0)
    kx, k1, k2, k3 = jax.random.split(key, 4)

    x = jax.random.normal(kx, (B, dim_in, H, W), dtype=jnp.float32)

    # Deterministic init mirroring _init_weights (normal std=0.01, zero bias).
    w_conv = 0.01 * jax.random.normal(k1, (dim_out, dim_in, 3, 3), jnp.float32)
    b_conv = jnp.zeros((dim_out,), jnp.float32)
    w_cls = 0.01 * jax.random.normal(k2, (n_score_out, dim_out, 1, 1), jnp.float32)
    b_cls = jnp.zeros((n_score_out,), jnp.float32)
    w_box = 0.01 * jax.random.normal(k3, (num_anchors * 4, dim_out, 1, 1), jnp.float32)
    b_box = jnp.zeros((num_anchors * 4,), jnp.float32)

    out = rpn_head_pallas(x, w_conv, b_conv, w_cls, b_cls, w_box, b_box)
    jax.block_until_ready(out)

    ref = rpn_head_reference(x, w_conv, b_conv, w_cls, b_cls, w_box, b_box)
    # bf16 activations/weights in the kernel vs. f32 reference -> loose tol.
    for name in ("rpn_cls_logits", "rpn_bbox_pred", "rpn_cls_prob"):
        assert out[name].shape == ref[name].shape, name
        assert jnp.allclose(out[name], ref[name], atol=3e-3, rtol=3e-2), name

    print("KERNEL_OK")
</pallas_src>

<mosaic_0001>
module attributes {stable_mosaic.version = 11 : i64} {
  func.func @_rpn_head_kernel(%arg0: i32, %arg1: i32, %arg2: memref<1x440x32xbf16, #tpu.memory_space<vmem>>, %arg3: memref<9x32x32xbf16, #tpu.memory_space<vmem>>, %arg4: memref<1x32xf32, #tpu.memory_space<vmem>>, %arg5: memref<32x128xbf16, #tpu.memory_space<vmem>>, %arg6: memref<1x128xf32, #tpu.memory_space<vmem>>, %arg7: memref<1x192x128xf32, #tpu.memory_space<vmem>>, %arg8: memref<192x32xf32, #tpu.memory_space<vmem>>) attributes {dimension_semantics = [#tpu.dimension_semantics<parallel>, #tpu.dimension_semantics<parallel>], iteration_bounds = array<i64: 2, 2>, scalar_prefetch = 0 : i64, scratch_operands = 1 : i64, tpu.core_type = #tpu.core_type<tc>, window_params = [{transform_indices = @transform_0, window_bounds = array<i64: 1, 440, 32>}, {pipeline_mode = #tpu.pipeline_mode<synchronous>, transform_indices = @transform_1, window_bounds = array<i64: 9, 32, 32>}, {pipeline_mode = #tpu.pipeline_mode<synchronous>, transform_indices = @transform_2, window_bounds = array<i64: 1, 32>}, {pipeline_mode = #tpu.pipeline_mode<synchronous>, transform_indices = @transform_3, window_bounds = array<i64: 32, 128>}, {pipeline_mode = #tpu.pipeline_mode<synchronous>, transform_indices = @transform_4, window_bounds = array<i64: 1, 128>}, {transform_indices = @transform_5, window_bounds = array<i64: 1, 192, 128>}]} {
    %c192_i32 = arith.constant 192 : i32
    %0 = arith.muli %arg1, %c192_i32 : i32
    %1 = tpu.assume_multiple %0, 8 : i32
    %c0 = arith.constant 0 : index
    %2 = arith.index_cast %1 : i32 to index
    %c0_0 = arith.constant 0 : index
    %3 = vector.load %arg2[%c0, %2, %c0_0] : memref<1x440x32xbf16, #tpu.memory_space<vmem>>, vector<1x248x32xbf16>
    %4 = vector.shape_cast %3 : vector<1x248x32xbf16> to vector<248x32xbf16>
    %cst = arith.constant 0.000000e+00 : f32
    %5 = vector.broadcast %cst : f32 to vector<192x32xf32>
    %c0_1 = arith.constant 0 : index
    %c0_2 = arith.constant 0 : index
    %6 = vector.load %arg8[%c0_1, %c0_2] : memref<192x32xf32, #tpu.memory_space<vmem>>, vector<192x32xf32>
    tpu.vector_store %arg8[%c0_1, %c0_2], %5 {strides = array<i32>} : memref<192x32xf32, #tpu.memory_space<vmem>>, vector<192x32xf32>,
    %7 = vector.extract_strided_slice %4 {offsets = [0, 0], sizes = [240, 32], strides = [1, 1]} : vector<248x32xbf16> to vector<240x32xbf16>
    %c0_3 = arith.constant 0 : index
    %c0_4 = arith.constant 0 : index
    %8 = vector.load %arg8[%c0_3, %c0_4] : memref<192x32xf32, #tpu.memory_space<vmem>>, vector<192x32xf32>
    %9 = vector.extract_strided_slice %7 {offsets = [0, 0], sizes = [192, 32], strides = [1, 1]} : vector<240x32xbf16> to vector<192x32xbf16>
    %c0_5 = arith.constant 0 : index
    %c0_6 = arith.constant 0 : index
    %c0_7 = arith.constant 0 : index
    %10 = vector.load %arg3[%c0_5, %c0_6, %c0_7] : memref<9x32x32xbf16, #tpu.memory_space<vmem>>, vector<1x32x32xbf16>
    %11 = vector.shape_cast %10 : vector<1x32x32xbf16> to vector<32x32xbf16>
    %cst_8 = arith.constant dense<0.000000e+00> : vector<192x32xf32>
    %12 = tpu.matmul %9, %11, %cst_8 {dimension_numbers = #tpu.dot_dimension_numbers<[1], [0], [0], [1], [0, 0, 1, 1], [], []>} : vector<192x32xbf16>, vector<32x32xbf16>, vector<192x32xf32> -> vector<192x32xf32>
    %13 = arith.addf %8, %12 : vector<192x32xf32>
    %c0_9 = arith.constant 0 : index
    %c0_10 = arith.constant 0 : index
    %14 = vector.load %arg8[%c0_9, %c0_10] : memref<192x32xf32, #tpu.memory_space<vmem>>, vector<192x32xf32>
    tpu.vector_store %arg8[%c0_9, %c0_10], %13 {strides = array<i32>} : memref<192x32xf32, #tpu.memory_space<vmem>>, vector<192x32xf32>,
    %c0_11 = arith.constant 0 : index
    %c0_12 = arith.constant 0 : index
    %15 = vector.load %arg8[%c0_11, %c0_12] : memref<192x32xf32, #tpu.memory_space<vmem>>, vector<192x32xf32>
    %16 = vector.extract_strided_slice %7 {offsets = [24, 0], sizes = [192, 32], strides = [1, 1]} : vector<240x32xbf16> to vector<192x32xbf16>
    %c3 = arith.constant 3 : index
    %c0_13 = arith.constant 0 : index
    %c0_14 = arith.constant 0 : index
    %17 = vector.load %arg3[%c3, %c0_13, %c0_14] : memref<9x32x32xbf16, #tpu.memory_space<vmem>>, vector<1x32x32xbf16>
    %18 = vector.shape_cast %17 : vector<1x32x32xbf16> to vector<32x32xbf16>
    %cst_15 = arith.constant dense<0.000000e+00> : vector<192x32xf32>
    %19 = tpu.matmul %16, %18, %cst_15 {dimension_numbers = #tpu.dot_dimension_numbers<[1], [0], [0], [1], [0, 0, 1, 1], [], []>} : vector<192x32xbf16>, vector<32x32xbf16>, vector<192x32xf32> -> vector<192x32xf32>
    %20 = arith.addf %15, %19 : vector<192x32xf32>
    %c0_16 = arith.constant 0 : index
    %c0_17 = arith.constant 0 : index
    %21 = vector.load %arg8[%c0_16, %c0_17] : memref<192x32xf32, #tpu.memory_space<vmem>>, vector<192x32xf32>
    tpu.vector_store %arg8[%c0_16, %c0_17], %20 {strides = array<i32>} : memref<192x32xf32, #tpu.memory_space<vmem>>, vector<192x32xf32>,
    %c0_18 = arith.constant 0 : index
    %c0_19 = arith.constant 0 : index
    %22 = vector.load %arg8[%c0_18, %c0_19] : memref<192x32xf32, #tpu.memory_space<vmem>>, vector<192x32xf32>
    %23 = vector.extract_strided_slice %7 {offsets = [48, 0], sizes = [192, 32], strides = [1, 1]} : vector<240x32xbf16> to vector<192x32xbf16>
    %c6 = arith.constant 6 : index
    %c0_20 = arith.constant 0 : index
    %c0_21 = arith.constant 0 : index
    %24 = vector.load %arg3[%c6, %c0_20, %c0_21] : memref<9x32x32xbf16, #tpu.memory_space<vmem>>, vector<1x32x32xbf16>
    %25 = vector.shape_cast %24 : vector<1x32x32xbf16> to vector<32x32xbf16>
    %cst_22 = arith.constant dense<0.000000e+00> : vector<192x32xf32>
    %26 = tpu.matmul %23, %25, %cst_22 {dimension_numbers = #tpu.dot_dimension_numbers<[1], [0], [0], [1], [0, 0, 1, 1], [], []>} : vector<192x32xbf16>, vector<32x32xbf16>, vector<192x32xf32> -> vector<192x32xf32>
    %27 = arith.addf %22, %26 : vector<192x32xf32>
    %c0_23 = arith.constant 0 : index
    %c0_24 = arith.constant 0 : index
    %28 = vector.load %arg8[%c0_23, %c0_24] : memref<192x32xf32, #tpu.memory_space<vmem>>, vector<192x32xf32>
    tpu.vector_store %arg8[%c0_23, %c0_24], %27 {strides = array<i32>} : memref<192x32xf32, #tpu.memory_space<vmem>>, vector<192x32xf32>,
    %29 = vector.extract_strided_slice %4 {offsets = [1, 0], sizes = [240, 32], strides = [1, 1]} : vector<248x32xbf16> to vector<240x32xbf16>
    %c0_25 = arith.constant 0 : index
    %c0_26 = arith.constant 0 : index
    %30 = vector.load %arg8[%c0_25, %c0_26] : memref<192x32xf32, #tpu.memory_space<vmem>>, vector<192x32xf32>
    %31 = vector.extract_strided_slice %29 {offsets = [0, 0], sizes = [192, 32], strides = [1, 1]} : vector<240x32xbf16> to vector<192x32xbf16>
    %c1 = arith.constant 1 : index
    %c0_27 = arith.constant 0 : index
    %c0_28 = arith.constant 0 : index
    %32 = vector.load %arg3[%c1, %c0_27, %c0_28] : memref<9x32x32xbf16, #tpu.memory_space<vmem>>, vector<1x32x32xbf16>
    %33 = vector.shape_cast %32 : vector<1x32x32xbf16> to vector<32x32xbf16>
    %cst_29 = arith.constant dense<0.000000e+00> : vector<192x32xf32>
    %34 = tpu.matmul %31, %33, %cst_29 {dimension_numbers = #tpu.dot_dimension_numbers<[1], [0], [0], [1], [0, 0, 1, 1], [], []>} : vector<192x32xbf16>, vector<32x32xbf16>, vector<192x32xf32> -> vector<192x32xf32>
    %35 = arith.addf %30, %34 : vector<192x32xf32>
    %c0_30 = arith.constant 0 : index
    %c0_31 = arith.constant 0 : index
    %36 = vector.load %arg8[%c0_30, %c0_31] : memref<192x32xf32, #tpu.memory_space<vmem>>, vector<192x32xf32>
    tpu.vector_store %arg8[%c0_30, %c0_31], %35 {strides = array<i32>} : memref<192x32xf32, #tpu.memory_space<vmem>>, vector<192x32xf32>,
    %c0_32 = arith.constant 0 : index
    %c0_33 = arith.constant 0 : index
    %37 = vector.load %arg8[%c0_32, %c0_33] : memref<192x32xf32, #tpu.memory_space<vmem>>, vector<192x32xf32>
    %38 = vector.extract_strided_slice %29 {offsets = [24, 0], sizes = [192, 32], strides = [1, 1]} : vector<240x32xbf16> to vector<192x32xbf16>
    %c4 = arith.constant 4 : index
    %c0_34 = arith.constant 0 : index
    %c0_35 = arith.constant 0 : index
    %39 = vector.load %arg3[%c4, %c0_34, %c0_35] : memref<9x32x32xbf16, #tpu.memory_space<vmem>>, vector<1x32x32xbf16>
    %40 = vector.shape_cast %39 : vector<1x32x32xbf16> to vector<32x32xbf16>
    %cst_36 = arith.constant dense<0.000000e+00> : vector<192x32xf32>
    %41 = tpu.matmul %38, %40, %cst_36 {dimension_numbers = #tpu.dot_dimension_numbers<[1], [0], [0], [1], [0, 0, 1, 1], [], []>} : vector<192x32xbf16>, vector<32x32xbf16>, vector<192x32xf32> -> vector<192x32xf32>
    %42 = arith.addf %37, %41 : vector<192x32xf32>
    %c0_37 = arith.constant 0 : index
    %c0_38 = arith.constant 0 : index
    %43 = vector.load %arg8[%c0_37, %c0_38] : memref<192x32xf32, #tpu.memory_space<vmem>>, vector<192x32xf32>
    tpu.vector_store %arg8[%c0_37, %c0_38], %42 {strides = array<i32>} : memref<192x32xf32, #tpu.memory_space<vmem>>, vector<192x32xf32>,
    %c0_39 = arith.constant 0 : index
    %c0_40 = arith.constant 0 : index
    %44 = vector.load %arg8[%c0_39, %c0_40] : memref<192x32xf32, #tpu.memory_space<vmem>>, vector<192x32xf32>
    %45 = vector.extract_strided_slice %29 {offsets = [48, 0], sizes = [192, 32], strides = [1, 1]} : vector<240x32xbf16> to vector<192x32xbf16>
    %c7 = arith.constant 7 : index
    %c0_41 = arith.constant 0 : index
    %c0_42 = arith.constant 0 : index
    %46 = vector.load %arg3[%c7, %c0_41, %c0_42] : memref<9x32x32xbf16, #tpu.memory_space<vmem>>, vector<1x32x32xbf16>
    %47 = vector.shape_cast %46 : vector<1x32x32xbf16> to vector<32x32xbf16>
    %cst_43 = arith.constant dense<0.000000e+00> : vector<192x32xf32>
    %48 = tpu.matmul %45, %47, %cst_43 {dimension_numbers = #tpu.dot_dimension_numbers<[1], [0], [0], [1], [0, 0, 1, 1], [], []>} : vector<192x32xbf16>, vector<32x32xbf16>, vector<192x32xf32> -> vector<192x32xf32>
    %49 = arith.addf %44, %48 : vector<192x32xf32>
    %c0_44 = arith.constant 0 : index
    %c0_45 = arith.constant 0 : index
    %50 = vector.load %arg8[%c0_44, %c0_45] : memref<192x32xf32, #tpu.memory_space<vmem>>, vector<192x32xf32>
    tpu.vector_store %arg8[%c0_44, %c0_45], %49 {strides = array<i32>} : memref<192x32xf32, #tpu.memory_space<vmem>>, vector<192x32xf32>,
    %51 = vector.extract_strided_slice %4 {offsets = [2, 0], sizes = [240, 32], strides = [1, 1]} : vector<248x32xbf16> to vector<240x32xbf16>
    %c0_46 = arith.constant 0 : index
    %c0_47 = arith.constant 0 : index
    %52 = vector.load %arg8[%c0_46, %c0_47] : memref<192x32xf32, #tpu.memory_space<vmem>>, vector<192x32xf32>
    %53 = vector.extract_strided_slice %51 {offsets = [0, 0], sizes = [192, 32], strides = [1, 1]} : vector<240x32xbf16> to vector<192x32xbf16>
    %c2 = arith.constant 2 : index
    %c0_48 = arith.constant 0 : index
    %c0_49 = arith.constant 0 : index
    %54 = vector.load %arg3[%c2, %c0_48, %c0_49] : memref<9x32x32xbf16, #tpu.memory_space<vmem>>, vector<1x32x32xbf16>
    %55 = vector.shape_cast %54 : vector<1x32x32xbf16> to vector<32x32xbf16>
    %cst_50 = arith.constant dense<0.000000e+00> : vector<192x32xf32>
    %56 = tpu.matmul %53, %55, %cst_50 {dimension_numbers = #tpu.dot_dimension_numbers<[1], [0], [0], [1], [0, 0, 1, 1], [], []>} : vector<192x32xbf16>, vector<32x32xbf16>, vector<192x32xf32> -> vector<192x32xf32>
    %57 = arith.addf %52, %56 : vector<192x32xf32>
    %c0_51 = arith.constant 0 : index
    %c0_52 = arith.constant 0 : index
    %58 = vector.load %arg8[%c0_51, %c0_52] : memref<192x32xf32, #tpu.memory_space<vmem>>, vector<192x32xf32>
    tpu.vector_store %arg8[%c0_51, %c0_52], %57 {strides = array<i32>} : memref<192x32xf32, #tpu.memory_space<vmem>>, vector<192x32xf32>,
    %c0_53 = arith.constant 0 : index
    %c0_54 = arith.constant 0 : index
    %59 = vector.load %arg8[%c0_53, %c0_54] : memref<192x32xf32, #tpu.memory_space<vmem>>, vector<192x32xf32>
    %60 = vector.extract_strided_slice %51 {offsets = [24, 0], sizes = [192, 32], strides = [1, 1]} : vector<240x32xbf16> to vector<192x32xbf16>
    %c5 = arith.constant 5 : index
    %c0_55 = arith.constant 0 : index
    %c0_56 = arith.constant 0 : index
    %61 = vector.load %arg3[%c5, %c0_55, %c0_56] : memref<9x32x32xbf16, #tpu.memory_space<vmem>>, vector<1x32x32xbf16>
    %62 = vector.shape_cast %61 : vector<1x32x32xbf16> to vector<32x32xbf16>
    %cst_57 = arith.constant dense<0.000000e+00> : vector<192x32xf32>
    %63 = tpu.matmul %60, %62, %cst_57 {dimension_numbers = #tpu.dot_dimension_numbers<[1], [0], [0], [1], [0, 0, 1, 1], [], []>} : vector<192x32xbf16>, vector<32x32xbf16>, vector<192x32xf32> -> vector<192x32xf32>
    %64 = arith.addf %59, %63 : vector<192x32xf32>
    %c0_58 = arith.constant 0 : index
    %c0_59 = arith.constant 0 : index
    %65 = vector.load %arg8[%c0_58, %c0_59] : memref<192x32xf32, #tpu.memory_space<vmem>>, vector<192x32xf32>
    tpu.vector_store %arg8[%c0_58, %c0_59], %64 {strides = array<i32>} : memref<192x32xf32, #tpu.memory_space<vmem>>, vector<192x32xf32>,
    %c0_60 = arith.constant 0 : index
    %c0_61 = arith.constant 0 : index
    %66 = vector.load %arg8[%c0_60, %c0_61] : memref<192x32xf32, #tpu.memory_space<vmem>>, vector<192x32xf32>
    %67 = vector.extract_strided_slice %51 {offsets = [48, 0], sizes = [192, 32], strides = [1, 1]} : vector<240x32xbf16> to vector<192x32xbf16>
    %c8 = arith.constant 8 : index
    %c0_62 = arith.constant 0 : index
    %c0_63 = arith.constant 0 : index
    %68 = vector.load %arg3[%c8, %c0_62, %c0_63] : memref<9x32x32xbf16, #tpu.memory_space<vmem>>, vector<1x32x32xbf16>
    %69 = vector.shape_cast %68 : vector<1x32x32xbf16> to vector<32x32xbf16>
    %cst_64 = arith.constant dense<0.000000e+00> : vector<192x32xf32>
    %70 = tpu.matmul %67, %69, %cst_64 {dimension_numbers = #tpu.dot_dimension_numbers<[1], [0], [0], [1], [0, 0, 1, 1], [], []>} : vector<192x32xbf16>, vector<32x32xbf16>, vector<192x32xf32> -> vector<192x32xf32>
    %71 = arith.addf %66, %70 : vector<192x32xf32>
    %c0_65 = arith.constant 0 : index
    %c0_66 = arith.constant 0 : index
    %72 = vector.load %arg8[%c0_65, %c0_66] : memref<192x32xf32, #tpu.memory_space<vmem>>, vector<192x32xf32>
    tpu.vector_store %arg8[%c0_65, %c0_66], %71 {strides = array<i32>} : memref<192x32xf32, #tpu.memory_space<vmem>>, vector<192x32xf32>,
    %c0_67 = arith.constant 0 : index
    %c0_68 = arith.constant 0 : index
    %73 = vector.load %arg8[%c0_67, %c0_68] : memref<192x32xf32, #tpu.memory_space<vmem>>, vector<192x32xf32>
    %c0_69 = arith.constant 0 : index
    %c0_70 = arith.constant 0 : index
    %74 = vector.load %arg4[%c0_69, %c0_70] : memref<1x32xf32, #tpu.memory_space<vmem>>, vector<1x32xf32>
    %75 = vector.broadcast %74 : vector<1x32xf32> to vector<192x32xf32>
    %76 = arith.addf %73, %75 : vector<192x32xf32>
    %cst_71 = arith.constant 0.000000e+00 : f32
    %77 = vector.broadcast %cst_71 : f32 to vector<192x32xf32>
    %78 = arith.maximumf %76, %77 : vector<192x32xf32>
    %79 = arith.truncf %78 : vector<192x32xf32> to vector<192x32xbf16>
    %c0_72 = arith.constant 0 : index
    %c0_73 = arith.constant 0 : index
    %80 = vector.load %arg5[%c0_72, %c0_73] : memref<32x128xbf16, #tpu.memory_space<vmem>>, vector<32x128xbf16>
    %cst_74 = arith.constant dense<0.000000e+00> : vector<192x128xf32>
    %81 = tpu.matmul %79, %80, %cst_74 {dimension_numbers = #tpu.dot_dimension_numbers<[1], [0], [0], [1], [0, 0, 1, 1], [], []>} : vector<192x32xbf16>, vector<32x128xbf16>, vector<192x128xf32> -> vector<192x128xf32>
    %c0_75 = arith.constant 0 : index
    %c0_76 = arith.constant 0 : index
    %82 = vector.load %arg6[%c0_75, %c0_76] : memref<1x128xf32, #tpu.memory_space<vmem>>, vector<1x128xf32>
    %83 = vector.broadcast %82 : vector<1x128xf32> to vector<192x128xf32>
    %84 = arith.addf %81, %83 : vector<192x128xf32>
    %c0_77 = arith.constant 0 : index
    %c0_78 = arith.constant 0 : index
    %c0_79 = arith.constant 0 : index
    %85 = vector.load %arg7[%c0_77, %c0_78, %c0_79] : memref<1x192x128xf32, #tpu.memory_space<vmem>>, vector<1x192x128xf32>
    %86 = vector.shape_cast %85 : vector<1x192x128xf32> to vector<192x128xf32>
    %87 = vector.shape_cast %84 : vector<192x128xf32> to vector<1x192x128xf32>
    tpu.vector_store %arg7[%c0_77, %c0_78, %c0_79], %87 {strides = array<i32>} : memref<1x192x128xf32, #tpu.memory_space<vmem>>, vector<1x192x128xf32>,
    return
  }
  func.func @transform_0(%arg0: i32, %arg1: i32) -> (i32, i32, i32) {
    %c0_i32 = arith.constant 0 : i32
    %c0_i32_0 = arith.constant 0 : i32
    %c0_i32_1 = arith.constant 0 : i32
    return %arg0, %c0_i32, %c0_i32_0 : i32, i32, i32
  }
  func.func @transform_1(%arg0: i32, %arg1: i32) -> (i32, i32, i32) {
    %c0_i32 = arith.constant 0 : i32
    %c0_i32_0 = arith.constant 0 : i32
    %c0_i32_1 = arith.constant 0 : i32
    %c0_i32_2 = arith.constant 0 : i32
    return %c0_i32, %c0_i32_0, %c0_i32_1 : i32, i32, i32
  }
  func.func @transform_2(%arg0: i32, %arg1: i32) -> (i32, i32) {
    %c0_i32 = arith.constant 0 : i32
    %c0_i32_0 = arith.constant 0 : i32
    %c0_i32_1 = arith.constant 0 : i32
    return %c0_i32, %c0_i32_0 : i32, i32
  }
  func.func @transform_3(%arg0: i32, %arg1: i32) -> (i32, i32) {
    %c0_i32 = arith.constant 0 : i32
    %c0_i32_0 = arith.constant 0 : i32
    %c0_i32_1 = arith.constant 0 : i32
    return %c0_i32, %c0_i32_0 : i32, i32
  }
  func.func @transform_4(%arg0: i32, %arg1: i32) -> (i32, i32) {
    %c0_i32 = arith.constant 0 : i32
    %c0_i32_0 = arith.constant 0 : i32
    %c0_i32_1 = arith.constant 0 : i32
    return %c0_i32, %c0_i32_0 : i32, i32
  }
  func.func @transform_5(%arg0: i32, %arg1: i32) -> (i32, i32, i32) {
    %c0_i32 = arith.constant 0 : i32
    %c0_i32_0 = arith.constant 0 : i32
    return %arg0, %arg1, %c0_i32 : i32, i32, i32
  }
}

</mosaic_0001>

<llo_original>
// kernel: tpu_custom_call.1
$region0: #{tpu_custom_call.1}
  #allocation0 [shape = 'u32[]', space=smem, size = 0x4, offset = 0x4, fixed_abs, tag = 'smem constant byte address 0x4 - core index']
  #allocation1 [shape = 'u32[144,128]{1,0:T(1,128)}', space=vmem, size = 0x12000, scoped, tag = 'internal scratch']
  #allocation2 [shape = 'f32[192,32]{1,0:T(8,128)}', space=vmem, size = 0x18000, scoped, tag = 'scratch operand']
  %s0 = inlined_call_operand.vmem [shape: bf16[2,440,32], index: 0, kind: input, shape index: {}]
  %s1 = inlined_call_operand.vmem [shape: bf16[9,32,32], index: 1, kind: input, shape index: {}]
  %s2 = inlined_call_operand.vmem [shape: f32[1,32], index: 2, kind: input, shape index: {}]
  %s3 = inlined_call_operand.vmem [shape: bf16[32,128], index: 3, kind: input, shape index: {}]
  %s4 = inlined_call_operand.vmem [shape: f32[1,128], index: 4, kind: input, shape index: {}]
  %s5 = inlined_call_operand.hbm [shape: f32[2,384,128], index: 5, kind: output, shape index: {}]
  %s6 = sld [smem:[#allocation0]]
  $region53: #{tpu_custom_call.1} parent=0
    _
  %s8 = ssub.s32 1, %s6
  %s9 = scalar_select 0, %s8, %s6
  $region1: #{tpu_custom_call.1} parent=0
    #allocation3 [shape = 'u8[196608]{0}', space=vmem, size = 0x30000, scoped, tag = 'output window, operand 0']
    #allocation4 [shape = 's32[2]{0}', space=sflag, size = 0x8, scoped, tag = 'scoped memory for tpu_custom_call.1']
    %10 = vsyncpa [#allocation4], 0
    %s11 = scalar_lea.sflag [#allocation4], 1
    %12 = vsyncpa %s11, 0
    loop: start=0, step=1, limit=6
    $region2: #{tpu_custom_call.1} parent=1 // loop_pre_header
      _
    $region3: #{tpu_custom_call.1} parent=1 // loop_header
      %s14 = sphi 0, %s18
      %p15 = scmp.ge.s32.totalorder %s14, 6
      %s21 = sphi 0, %s33
      %s22 = sphi 0, %s29
      %s23 = sphi 0, %s21
      %s24 = sphi 0, %s22
      %s25 = sphi 0, %s23
      %s26 = sphi 0, %s24
      %s36 = sphi 0, %s38
      %s39 = sphi 0, %s36
      %s40 = sphi 0, %s39
      %s56 = sphi 0, %s40
      %s60 = sphi 0, %s60
      %s62 = sphi 0, %s60
      %s63 = sphi 0, %s62
      %s77 = sphi 0, %s63
      %s81 = sphi 0, %s81
      %s83 = sphi 0, %s81
      %s84 = sphi 0, %s83
      %s98 = sphi 0, %s84
      %s102 = sphi 0, %s102
      %s104 = sphi 0, %s102
      %s105 = sphi 0, %s104
      %s119 = sphi 0, %s105
      %s123 = sphi 0, %s123
      %s125 = sphi 0, %s123
      %s126 = sphi 0, %s125
      %s140 = sphi 0, %s126
      %s148 = sphi 0, %s150
      %s151 = sphi 0, %s148
      %s152 = sphi 0, %s151
      %s168 = sphi 0, %s152
    $region4: #{tpu_custom_call.1} parent=1 // loop_header_branch
      %17 = sbr.rel (%p15) target = $region8
    $region5: #{tpu_custom_call.1} parent=1 // loop_body
      %s19 = ssub.s32 %s14, 1
      %s20 = ssub.s32 %s14, 2
      %s27 = sadd.s32 1, %s22
      %p28 = scmp.ge.s32.totalorder %s27, 2
      %s29 = scalar_select %p28, 0, %s27
      %s30 = sadd.s32 1, %s21
      %s31 = scalar_select %p28, %s30, %s21
      %p32 = scmp.ge.s32.totalorder %s31, 2
      %s33 = scalar_select %p32, 0, %s31
      %s34 = ssub.s32 %s21, %s33
      %p35 = scmp.eq.s32.totalorder %s34, 0
      %s37 = sadd.s32 %s36, 1
      %s38 = scalar_select %p35, %s36, %s37
      %p41 = pneg %p35
      %p42 = scmp.eq.s32.totalorder %s14, 3
      %p43 = por %p41, %p42
      %p44 = scmp.ne.s32.totalorder %s36, %s39
      %p45 = scmp.eq.s32.totalorder %s14, 0
      %p46 = por %p44, %p45
      %p47 = scmp.ne.s32.totalorder %s36, %s39
      %p48 = scmp.eq.s32.totalorder %s19, 3
      %p49 = por %p47, %p48
      %p50 = scmp.ne.s32.totalorder %s39, %s40
      %p51 = scmp.eq.s32.totalorder %s19, 0
      %p52 = por %p50, %p51
      %p53 = scmp.ne.s32.totalorder %s39, %s40
      %p54 = scmp.eq.s32.totalorder %s20, 3
      %p55 = por %p53, %p54
      %p57 = scmp.ne.s32.totalorder %s40, %s56
      %p58 = scmp.eq.s32.totalorder %s20, 0
      %p59 = por %p57, %p58
      %s61 = sadd.s32 %s60, 1
      %p64 = scmp.eq.s32.totalorder %s14, 3
      %p65 = scmp.ne.s32.totalorder %s60, %s62
      %p66 = scmp.eq.s32.totalorder %s14, 0
      %p67 = por %p65, %p66
      %p68 = scmp.ne.s32.totalorder %s60, %s62
      %p69 = scmp.eq.s32.totalorder %s19, 3
      %p70 = por %p68, %p69
      %p71 = scmp.ne.s32.totalorder %s62, %s63
      %p72 = scmp.eq.s32.totalorder %s19, 0
      %p73 = por %p71, %p72
      %p74 = scmp.ne.s32.totalorder %s62, %s63
      %p75 = scmp.eq.s32.totalorder %s20, 3
      %p76 = por %p74, %p75
      %p78 = scmp.ne.s32.totalorder %s63, %s77
      %p79 = scmp.eq.s32.totalorder %s20, 0
      %p80 = por %p78, %p79
      %s82 = sadd.s32 %s81, 1
      %p85 = scmp.eq.s32.totalorder %s14, 3
      %p86 = scmp.ne.s32.totalorder %s81, %s83
      %p87 = scmp.eq.s32.totalorder %s14, 0
      %p88 = por %p86, %p87
      %p89 = scmp.ne.s32.totalorder %s81, %s83
      %p90 = scmp.eq.s32.totalorder %s19, 3
      %p91 = por %p89, %p90
      %p92 = scmp.ne.s32.totalorder %s83, %s84
      %p93 = scmp.eq.s32.totalorder %s19, 0
      %p94 = por %p92, %p93
      %p95 = scmp.ne.s32.totalorder %s83, %s84
      %p96 = scmp.eq.s32.totalorder %s20, 3
      %p97 = por %p95, %p96
      %p99 = scmp.ne.s32.totalorder %s84, %s98
      %p100 = scmp.eq.s32.totalorder %s20, 0
      %p101 = por %p99, %p100
      %s103 = sadd.s32 %s102, 1
      %p106 = scmp.eq.s32.totalorder %s14, 3
      %p107 = scmp.ne.s32.totalorder %s102, %s104
      %p108 = scmp.eq.s32.totalorder %s14, 0
      %p109 = por %p107, %p108
      %p110 = scmp.ne.s32.totalorder %s102, %s104
      %p111 = scmp.eq.s32.totalorder %s19, 3
      %p112 = por %p110, %p111
      %p113 = scmp.ne.s32.totalorder %s104, %s105
      %p114 = scmp.eq.s32.totalorder %s19, 0
      %p115 = por %p113, %p114
      %p116 = scmp.ne.s32.totalorder %s104, %s105
      %p117 = scmp.eq.s32.totalorder %s20, 3
      %p118 = por %p116, %p117
      %p120 = scmp.ne.s32.totalorder %s105, %s119
      %p121 = scmp.eq.s32.totalorder %s20, 0
      %p122 = por %p120, %p121
      %s124 = sadd.s32 %s123, 1
      %p127 = scmp.eq.s32.totalorder %s14, 3
      %p128 = scmp.ne.s32.totalorder %s123, %s125
      %p129 = scmp.eq.s32.totalorder %s14, 0
      %p130 = por %p128, %p129
      %p131 = scmp.ne.s32.totalorder %s123, %s125
      %p132 = scmp.eq.s32.totalorder %s19, 3
      %p133 = por %p131, %p132
      %p134 = scmp.ne.s32.totalorder %s125, %s126
      %p135 = scmp.eq.s32.totalorder %s19, 0
      %p136 = por %p134, %p135
      %p137 = scmp.ne.s32.totalorder %s125, %s126
      %p138 = scmp.eq.s32.totalorder %s20, 3
      %p139 = por %p137, %p138
      %p141 = scmp.ne.s32.totalorder %s126, %s140
      %p142 = scmp.eq.s32.totalorder %s20, 0
      %p143 = por %p141, %p142
      %s144 = ssub.s32 %s21, %s33
      %s145 = ssub.s32 %s22, %s29
      %s146 = sor.u32 %s144, %s145
      %p147 = scmp.eq.s32.totalorder %s146, 0
      %s149 = sadd.s32 %s148, 1
      %s150 = scalar_select %p147, %s148, %s149
      %p153 = pneg %p147
      %p154 = scmp.eq.s32.totalorder %s14, 3
      %p155 = por %p153, %p154
      %p156 = scmp.ne.s32.totalorder %s148, %s151
      %p157 = scmp.eq.s32.totalorder %s14, 0
      %p158 = por %p156, %p157
      %p159 = scmp.ne.s32.totalorder %s148, %s151
      %p160 = scmp.eq.s32.totalorder %s19, 3
      %p161 = por %p159, %p160
      %p162 = scmp.ne.s32.totalorder %s151, %s152
      %p163 = scmp.eq.s32.totalorder %s19, 0
      %p164 = por %p162, %p163
      %p165 = scmp.ne.s32.totalorder %s151, %s152
      %p166 = scmp.eq.s32.totalorder %s20, 3
      %p167 = por %p165, %p166
      %p169 = scmp.ne.s32.totalorder %s152, %s168
      %p170 = scmp.eq.s32.totalorder %s20, 0
      %p171 = por %p169, %p170
      %p172 = scmp.le.s32.totalorder 1, %s14
      %p173 = scmp.lt.s32.totalorder %s14, 5
      %p174 = pnand %p172, %p173
      %p175 = pneg %p174
      // Predicated region
      $region9: #{tpu_custom_call.1} parent=5 // pred_check
        _
      $region10: #{tpu_custom_call.1} parent=5 // pred_check_branch
        %177 = sbr.rel (%p174) target = $region12
      $region11: #{tpu_custom_call.1} parent=5 // pred_region
        %s178 = ssub.s32 %s14, 1
        // Predicated region
        $region13: #{tpu_custom_call.1} parent=11 // pred_check
          %p179 = pneg %p73
        $region14: #{tpu_custom_call.1} parent=11 // pred_check_branch
          %181 = sbr.rel (%p179) target = $region16
        $region15: #{tpu_custom_call.1} parent=11 // pred_region
          _
        $region16: #{tpu_custom_call.1} parent=11 // pred_fallthru
          _
        // Predicated region
        $region17: #{tpu_custom_call.1} parent=11 // pred_check
          %p182 = pneg %p94
        $region18: #{tpu_custom_call.1} parent=11 // pred_check_branch
          %184 = sbr.rel (%p182) target = $region20
        $region19: #{tpu_custom_call.1} parent=11 // pred_region
          _
        $region20: #{tpu_custom_call.1} parent=11 // pred_fallthru
          _
        // Predicated region
        $region21: #{tpu_custom_call.1} parent=11 // pred_check
          %p185 = pneg %p115
        $region22: #{tpu_custom_call.1} parent=11 // pred_check_branch
          %187 = sbr.rel (%p185) target = $region24
        $region23: #{tpu_custom_call.1} parent=11 // pred_region
          _
        $region24: #{tpu_custom_call.1} parent=11 // pred_fallthru
          _
        // Predicated region
        $region25: #{tpu_custom_call.1} parent=11 // pred_check
          %p188 = pneg %p136
        $region26: #{tpu_custom_call.1} parent=11 // pred_check_branch
          %190 = sbr.rel (%p188) target = $region28
        $region27: #{tpu_custom_call.1} parent=11 // pred_region
          _
        $region28: #{tpu_custom_call.1} parent=11 // pred_fallthru
          _
      $region12: #{tpu_custom_call.1} parent=5 // pred_fallthru
        _
      %p191 = scmp.lt.s32.totalorder %s14, 4
      // Predicated region
      $region29: #{tpu_custom_call.1} parent=5 // pred_check
        %p192 = pneg %p191
      $region30: #{tpu_custom_call.1} parent=5 // pred_check_branch
        %194 = sbr.rel (%p192) target = $region32
      $region31: #{tpu_custom_call.1} parent=5 // pred_region
        // Predicated region
        $region33: #{tpu_custom_call.1} parent=31 // pred_check
          %p195 = pneg %p46
        $region34: #{tpu_custom_call.1} parent=31 // pred_check_branch
          %197 = sbr.rel (%p195) target = $region36
        $region35: #{tpu_custom_call.1} parent=31 // pred_region
          %p198 = scmp.lt.s32.totalorder %s21, 1
          %s199 = scalar_select %p198, %s21, 1
          %s200 = smul.addr %s199, 55
          %s201 = smul.addr %s200, 4
          %s202 = scalar_lea.vmem %s0, %s201
        $region36: #{tpu_custom_call.1} parent=31 // pred_fallthru
          _
      $region32: #{tpu_custom_call.1} parent=5 // pred_fallthru
        _
      %p203 = scmp.le.s32.totalorder 1, %s14
      %p204 = scmp.lt.s32.totalorder %s14, 5
      %p205 = pnand %p203, %p204
      %p206 = pneg %p205
      // Predicated region
      $region37: #{tpu_custom_call.1} parent=5 // pred_check
        _
      $region38: #{tpu_custom_call.1} parent=5 // pred_check_branch
        %208 = sbr.rel (%p205) target = $region40
      $region39: #{tpu_custom_call.1} parent=5 // pred_region
        %s209 = ssub.s32 %s14, 1
        %p210 = scmp.lt.s32.totalorder %s23, 1
        %s211 = scalar_select %p210, %s23, 1
        %s212 = smul.addr %s211, 55
        %s213 = smul.addr %s212, 4
        %s214 = scalar_lea.vmem %s0, %s213
        %p215 = pneg %p52
        %p216 = pneg %p49
        %p217 = pneg %p73
        %p218 = pneg %p70
        %p219 = pneg %p94
        %p220 = pneg %p91
        %p221 = pneg %p115
        %p222 = pneg %p112
        %p223 = pneg %p136
        %p224 = pneg %p133
        %p225 = pneg %p164
        %p226 = pneg %p161
        %s227 = sand.u32 %s151, 1
        %s228 = scalar_lea.sflag [#allocation4], %s227
        %s229 = sand.u32 %s151, 1
        %s230 = smul.addr %s229, 192
        %s231 = scalar_lea.vmem [#allocation3], %s230
        %p232 = scmp.lt.s32.totalorder %s23, 1
        %s233 = scalar_select %p232, %s23, 1
        %s234 = smul.addr %s233, 55
        %s235 = smul.addr %s234, 4
        %s236 = scalar_lea.vmem %s0, %s235
        %s237 = smul.u32 24, %s24
        %s239 = smul.u32 %s24, 192
        %s240 = sshra.s32 %s239, 3
        %s241 = sand.u32 %s239, 7
        %s242 = smul.addr %s240, 4
        %s243 = scalar_lea.vmem %s236, %s242
        %v244 = vld [vmem:[%s243] sm:$0xf]
        %v245 = vld [vmem:[%s243 + $0x4] sm:$0xf]
        %v246 = vld [vmem:[%s243 + $0x8] sm:$0xf]
        %v247 = vld [vmem:[%s243 + $0xc] sm:$0xf]
        %v248 = vld [vmem:[%s243 + $0x10] sm:$0xf]
        %v249 = vld [vmem:[%s243 + $0x14] sm:$0xf]
        %v250 = vld [vmem:[%s243 + $0x18] sm:$0xf]
        %v251 = vld [vmem:[%s243 + $0x1c] sm:$0xf]
        %v252 = vld [vmem:[%s243 + $0x20] sm:$0xf]
        %v253 = vld [vmem:[%s243 + $0x24] sm:$0xf]
        %v254 = vld [vmem:[%s243 + $0x28] sm:$0xf]
        %v255 = vld [vmem:[%s243 + $0x2c] sm:$0xf]
        %v256 = vld [vmem:[%s243 + $0x30] sm:$0xf]
        %v257 = vld [vmem:[%s243 + $0x34] sm:$0xf]
        %v258 = vld [vmem:[%s243 + $0x38] sm:$0xf]
        %v259 = vld [vmem:[%s243 + $0x3c] sm:$0xf]
        %v260 = vld [vmem:[%s243 + $0x40] sm:$0xf]
        %v261 = vld [vmem:[%s243 + $0x44] sm:$0xf]
        %v262 = vld [vmem:[%s243 + $0x48] sm:$0xf]
        %v263 = vld [vmem:[%s243 + $0x4c] sm:$0xf]
        %v264 = vld [vmem:[%s243 + $0x50] sm:$0xf]
        %v265 = vld [vmem:[%s243 + $0x54] sm:$0xf]
        %v266 = vld [vmem:[%s243 + $0x58] sm:$0xf]
        %v267 = vld [vmem:[%s243 + $0x5c] sm:$0xf]
        %v268 = vld [vmem:[%s243 + $0x60] sm:$0xf]
        %v269 = vld [vmem:[%s243 + $0x64] sm:$0xf]
        %v270 = vld [vmem:[%s243 + $0x68] sm:$0xf]
        %v271 = vld [vmem:[%s243 + $0x6c] sm:$0xf]
        %v272 = vld [vmem:[%s243 + $0x70] sm:$0xf]
        %v273 = vld [vmem:[%s243 + $0x74] sm:$0xf]
        %v274 = vld [vmem:[%s243 + $0x78] sm:$0xf]
        %vm275 = vcmask 261120
        %276 = vst.msk [vmem:[#allocation2] sm:$0xff] %vm275, 0.0
        %277 = vst.msk [vmem:[#allocation2 + $0x8] sm:$0xff] %vm275, 0.0
        %278 = vst.msk [vmem:[#allocation2 + $0x10] sm:$0xff] %vm275, 0.0
        %279 = vst.msk [vmem:[#allocation2 + $0x18] sm:$0xff] %vm275, 0.0
        %280 = vst.msk [vmem:[#allocation2 + $0x20] sm:$0xff] %vm275, 0.0
        %281 = vst.msk [vmem:[#allocation2 + $0x28] sm:$0xff] %vm275, 0.0
        %282 = vst.msk [vmem:[#allocation2 + $0x30] sm:$0xff] %vm275, 0.0
        %283 = vst.msk [vmem:[#allocation2 + $0x38] sm:$0xff] %vm275, 0.0
        %284 = vst.msk [vmem:[#allocation2 + $0x40] sm:$0xff] %vm275, 0.0
        %285 = vst.msk [vmem:[#allocation2 + $0x48] sm:$0xff] %vm275, 0.0
        %286 = vst.msk [vmem:[#allocation2 + $0x50] sm:$0xff] %vm275, 0.0
        %287 = vst.msk [vmem:[#allocation2 + $0x58] sm:$0xff] %vm275, 0.0
        %288 = vst.msk [vmem:[#allocation2 + $0x60] sm:$0xff] %vm275, 0.0
        %289 = vst.msk [vmem:[#allocation2 + $0x68] sm:$0xff] %vm275, 0.0
        %290 = vst.msk [vmem:[#allocation2 + $0x70] sm:$0xff] %vm275, 0.0
        %291 = vst.msk [vmem:[#allocation2 + $0x78] sm:$0xff] %vm275, 0.0
        %292 = vst.msk [vmem:[#allocation2 + $0x80] sm:$0xff] %vm275, 0.0
        %293 = vst.msk [vmem:[#allocation2 + $0x88] sm:$0xff] %vm275, 0.0
        %294 = vst.msk [vmem:[#allocation2 + $0x90] sm:$0xff] %vm275, 0.0
        %295 = vst.msk [vmem:[#allocation2 + $0x98] sm:$0xff] %vm275, 0.0
        %296 = vst.msk [vmem:[#allocation2 + $0xa0] sm:$0xff] %vm275, 0.0
        %297 = vst.msk [vmem:[#allocation2 + $0xa8] sm:$0xff] %vm275, 0.0
        %298 = vst.msk [vmem:[#allocation2 + $0xb0] sm:$0xff] %vm275, 0.0
        %299 = vst.msk [vmem:[#allocation2 + $0xb8] sm:$0xff] %vm275, 0.0
        %v300 = vld [vmem:[#allocation2] sm:$0xff]
        %v301 = vld [vmem:[#allocation2 + $0x8] sm:$0xff]
        %v302 = vld [vmem:[#allocation2 + $0x10] sm:$0xff]
        %v303 = vld [vmem:[#allocation2 + $0x18] sm:$0xff]
        %v304 = vld [vmem:[#allocation2 + $0x20] sm:$0xff]
        %v305 = vld [vmem:[#allocation2 + $0x28] sm:$0xff]
        %v306 = vld [vmem:[#allocation2 + $0x30] sm:$0xff]
        %v307 = vld [vmem:[#allocation2 + $0x38] sm:$0xff]
        %v308 = vld [vmem:[#allocation2 + $0x40] sm:$0xff]
        %v309 = vld [vmem:[#allocation2 + $0x48] sm:$0xff]
        %v310 = vld [vmem:[#allocation2 + $0x50] sm:$0xff]
        %v311 = vld [vmem:[#allocation2 + $0x58] sm:$0xff]
        %v312 = vld [vmem:[#allocation2 + $0x60] sm:$0xff]
        %v313 = vld [vmem:[#allocation2 + $0x68] sm:$0xff]
        %v314 = vld [vmem:[#allocation2 + $0x70] sm:$0xff]
        %v315 = vld [vmem:[#allocation2 + $0x78] sm:$0xff]
        %v316 = vld [vmem:[#allocation2 + $0x80] sm:$0xff]
        %v317 = vld [vmem:[#allocation2 + $0x88] sm:$0xff]
        %v318 = vld [vmem:[#allocation2 + $0x90] sm:$0xff]
        %v319 = vld [vmem:[#allocation2 + $0x98] sm:$0xff]
        %v320 = vld [vmem:[#allocation2 + $0xa0] sm:$0xff]
        %v321 = vld [vmem:[#allocation2 + $0xa8] sm:$0xff]
        %v322 = vld [vmem:[#allocation2 + $0xb0] sm:$0xff]
        %v323 = vld [vmem:[#allocation2 + $0xb8] sm:$0xff]
        %v324 = vld [vmem:[%s1] sm:$0xf]
        %v325 = vld [vmem:[%s1 + $0x4] sm:$0xf]
        %v326 = vld [vmem:[%s1 + $0x8] sm:$0xf]
        %v327 = vld [vmem:[%s1 + $0xc] sm:$0xf]
        %v352 = vunpack.c.l.b16 %v244
        %v353 = vunpack.c.l.b16 %v245
        %v354 = vunpack.c.l.b16 %v246
        %v355 = vunpack.c.l.b16 %v247
        %v356 = vunpack.c.l.b16 %v248
        %v357 = vunpack.c.l.b16 %v249
        %v358 = vunpack.c.l.b16 %v250
        %v359 = vunpack.c.l.b16 %v251
        %v360 = vunpack.c.l.b16 %v252
        %v361 = vunpack.c.l.b16 %v253
        %v362 = vunpack.c.l.b16 %v254
        %v363 = vunpack.c.l.b16 %v255
        %v364 = vunpack.c.l.b16 %v256
        %v365 = vunpack.c.l.b16 %v257
        %v366 = vunpack.c.l.b16 %v258
        %v367 = vunpack.c.l.b16 %v259
        %v368 = vunpack.c.l.b16 %v260
        %v369 = vunpack.c.l.b16 %v261
        %v370 = vunpack.c.l.b16 %v262
        %v371 = vunpack.c.l.b16 %v263
        %v372 = vunpack.c.l.b16 %v264
        %v373 = vunpack.c.l.b16 %v265
        %v374 = vunpack.c.l.b16 %v266
        %v375 = vunpack.c.l.b16 %v267
        %v376 = vpack.c.b16 %v353, %v352
        %v377 = vpack.c.b16 %v355, %v354
        %v378 = vpack.c.b16 %v357, %v356
        %v379 = vpack.c.b16 %v359, %v358
        %v380 = vpack.c.b16 %v361, %v360
        %v381 = vpack.c.b16 %v363, %v362
        %v382 = vpack.c.b16 %v365, %v364
        %v383 = vpack.c.b16 %v367, %v366
        %v384 = vpack.c.b16 %v369, %v368
        %v385 = vpack.c.b16 %v371, %v370
        %v386 = vpack.c.b16 %v373, %v372
        %v387 = vpack.c.b16 %v375, %v374
        %v392 = vunpack.c.l.b16 %v324
        %v393 = vunpack.c.l.b16 %v325
        %v394 = vunpack.c.l.b16 %v326
        %v395 = vunpack.c.l.b16 %v327
        %v396 = vpack.c.b16 %v393, %v392
        %v397 = vpack.c.b16 %v395, %v394
        %v401 = vsel %vm275, %v376, 0
        %v404 = vsel %vm275, %v377, 0
        %v407 = vsel %vm275, %v378, 0
        %v410 = vsel %vm275, %v379, 0
        %v413 = vsel %vm275, %v380, 0
        %v416 = vsel %vm275, %v381, 0
        %v419 = vsel %vm275, %v382, 0
        %v422 = vsel %vm275, %v383, 0
        %v425 = vsel %vm275, %v384, 0
        %v428 = vsel %vm275, %v385, 0
        %v431 = vsel %vm275, %v386, 0
        %v434 = vsel %vm275, %v387, 0
        %436 = vmatprep.subr.bf16.mxu0 0
        %437 = vmatpush1.bf16.msra.mxu0 %v396
        %438 = vmatprep.subr.bf16.mxu0 0
        %439 = vmatpush1.bf16.msra.mxu0 %v397
        %440 = vmatprep.subr.bf16.mxu0 0
        %441 = vmatpush1.bf16.msra.mxu0 0
        %442 = vmatprep.subr.bf16.mxu0 0
        %443 = vmatpush1.bf16.msra.mxu0 0
        %444 = vmatprep.subr.bf16.mxu0 0
        %445 = vmatpush1.bf16.msra.mxu0 0
        %446 = vmatprep.subr.bf16.mxu0 0
        %447 = vmatpush1.bf16.msra.mxu0 0
        %448 = vmatprep.subr.bf16.mxu0 0
        %449 = vmatpush1.bf16.msra.mxu0 0
        %450 = vmatprep.subr.bf16.mxu0 0
        %451 = vmatpush1.bf16.msra.mxu0 0
        %452 = vmatprep.subr.bf16.mxu0 0
        %453 = vmatpush1.bf16.msra.mxu0 0
        %454 = vmatprep.subr.bf16.mxu0 0
        %455 = vmatpush1.bf16.msra.mxu0 0
        %456 = vmatprep.subr.bf16.mxu0 0
        %457 = vmatpush1.bf16.msra.mxu0 0
        %458 = vmatprep.subr.bf16.mxu0 0
        %459 = vmatpush1.bf16.msra.mxu0 0
        %460 = vmatprep.subr.bf16.mxu0 0
        %461 = vmatpush1.bf16.msra.mxu0 0
        %462 = vmatprep.subr.bf16.mxu0 0
        %463 = vmatpush1.bf16.msra.mxu0 0
        %464 = vmatprep.subr.bf16.mxu0 0
        %465 = vmatpush1.bf16.msra.mxu0 0
        %466 = vmatprep.subr.bf16.mxu0 0
        %467 = vmatpush1.bf16.msra.mxu0 0
        %468 = vmatprep.mubr.bf16.mxu0 0
        %469 = vmatmul.mubr.bf16.gmra.mrb[0].mxu0 %v401
        %v470 = vpop.f32.mrb[0].mxu0
        %v471 = vadd.f32 0.0, %v470
        %v472 = vpop.f32.mrb[0].mxu0
        %v473 = vpop.f32.mrb[0].mxu0
        %v474 = vadd.f32 0.0, %v473
        %v475 = vpop.f32.mrb[0].mxu0
        %476 = vmatprep.mubr.bf16.mxu0 0
        %477 = vmatmul.mubr.bf16.gmra.mrb[0].mxu0 %v404
        %v478 = vpop.f32.mrb[0].mxu0
        %v479 = vadd.f32 0.0, %v478
        %v480 = vpop.f32.mrb[0].mxu0
        %v481 = vpop.f32.mrb[0].mxu0
        %v482 = vadd.f32 0.0, %v481
        %v483 = vpop.f32.mrb[0].mxu0
        %484 = vmatprep.mubr.bf16.mxu0 0
        %485 = vmatmul.mubr.bf16.gmra.mrb[0].mxu0 %v407
        %v486 = vpop.f32.mrb[0].mxu0
        %v487 = vadd.f32 0.0, %v486
        %v488 = vpop.f32.mrb[0].mxu0
        %v489 = vpop.f32.mrb[0].mxu0
        %v490 = vadd.f32 0.0, %v489
        %v491 = vpop.f32.mrb[0].mxu0
        %492 = vmatprep.mubr.bf16.mxu0 0
        %493 = vmatmul.mubr.bf16.gmra.mrb[0].mxu0 %v410
        %v494 = vpop.f32.mrb[0].mxu0
        %v495 = vadd.f32 0.0, %v494
        %v496 = vpop.f32.mrb[0].mxu0
        %v497 = vpop.f32.mrb[0].mxu0
        %v498 = vadd.f32 0.0, %v497
        %v499 = vpop.f32.mrb[0].mxu0
        %500 = vmatprep.mubr.bf16.mxu0 0
        %501 = vmatmul.mubr.bf16.gmra.mrb[0].mxu0 %v413
        %v502 = vpop.f32.mrb[0].mxu0
        %v503 = vadd.f32 0.0, %v502
        %v504 = vpop.f32.mrb[0].mxu0
        %v505 = vpop.f32.mrb[0].mxu0
        %v506 = vadd.f32 0.0, %v505
        %v507 = vpop.f32.mrb[0].mxu0
        %508 = vmatprep.mubr.bf16.mxu0 0
        %509 = vmatmul.mubr.bf16.gmra.mrb[0].mxu0 %v416
        %v510 = vpop.f32.mrb[0].mxu0
        %v511 = vadd.f32 0.0, %v510
        %v512 = vpop.f32.mrb[0].mxu0
        %v513 = vpop.f32.mrb[0].mxu0
        %v514 = vadd.f32 0.0, %v513
        %v515 = vpop.f32.mrb[0].mxu0
        %516 = vmatprep.mubr.bf16.mxu0 0
        %517 = vmatmul.mubr.bf16.gmra.mrb[0].mxu0 %v419
        %v518 = vpop.f32.mrb[0].mxu0
        %v519 = vadd.f32 0.0, %v518
        %v520 = vpop.f32.mrb[0].mxu0
        %v521 = vpop.f32.mrb[0].mxu0
        %v522 = vadd.f32 0.0, %v521
        %v523 = vpop.f32.mrb[0].mxu0
        %524 = vmatprep.mubr.bf16.mxu0 0
        %525 = vmatmul.mubr.bf16.gmra.mrb[0].mxu0 %v422
        %v526 = vpop.f32.mrb[0].mxu0
        %v527 = vadd.f32 0.0, %v526
        %v528 = vpop.f32.mrb[0].mxu0
        %v529 = vpop.f32.mrb[0].mxu0
        %v530 = vadd.f32 0.0, %v529
        %v531 = vpop.f32.mrb[0].mxu0
        %532 = vmatprep.mubr.bf16.mxu0 0
        %533 = vmatmul.mubr.bf16.gmra.mrb[0].mxu0 %v425
        %v534 = vpop.f32.mrb[0].mxu0
        %v535 = vadd.f32 0.0, %v534
        %v536 = vpop.f32.mrb[0].mxu0
        %v537 = vpop.f32.mrb[0].mxu0
        %v538 = vadd.f32 0.0, %v537
        %v539 = vpop.f32.mrb[0].mxu0
        %540 = vmatprep.mubr.bf16.mxu0 0
        %541 = vmatmul.mubr.bf16.gmra.mrb[0].mxu0 %v428
        %v542 = vpop.f32.mrb[0].mxu0
        %v543 = vadd.f32 0.0, %v542
        %v544 = vpop.f32.mrb[0].mxu0
        %v545 = vpop.f32.mrb[0].mxu0
        %v546 = vadd.f32 0.0, %v545
        %v547 = vpop.f32.mrb[0].mxu0
        %548 = vmatprep.mubr.bf16.mxu0 0
        %549 = vmatmul.mubr.bf16.gmra.mrb[0].mxu0 %v431
        %v550 = vpop.f32.mrb[0].mxu0
        %v551 = vadd.f32 0.0, %v550
        %v552 = vpop.f32.mrb[0].mxu0
        %v553 = vpop.f32.mrb[0].mxu0
        %v554 = vadd.f32 0.0, %v553
        %v555 = vpop.f32.mrb[0].mxu0
        %556 = vmatprep.mubr.bf16.mxu0 0
        %557 = vmatmul.mubr.bf16.gmra.mrb[0].mxu0 %v434
        %v558 = vpop.f32.mrb[0].mxu0
        %v559 = vadd.f32 0.0, %v558
        %v560 = vpop.f32.mrb[0].mxu0
        %v561 = vpop.f32.mrb[0].mxu0
        %v562 = vadd.f32 0.0, %v561
        %v563 = vpop.f32.mrb[0].mxu0
        %564 = vdwg.mxu0
        %v565 = vadd.f32 %v300, %v471
        %v566 = vadd.f32 %v301, %v474
        %v567 = vadd.f32 %v302, %v479
        %v568 = vadd.f32 %v303, %v482
        %v569 = vadd.f32 %v304, %v487
        %v570 = vadd.f32 %v305, %v490
        %v571 = vadd.f32 %v306, %v495
        %v572 = vadd.f32 %v307, %v498
        %v573 = vadd.f32 %v308, %v503
        %v574 = vadd.f32 %v309, %v506
        %v575 = vadd.f32 %v310, %v511
        %v576 = vadd.f32 %v311, %v514
        %v577 = vadd.f32 %v312, %v519
        %v578 = vadd.f32 %v313, %v522
        %v579 = vadd.f32 %v314, %v527
        %v580 = vadd.f32 %v315, %v530
        %v581 = vadd.f32 %v316, %v535
        %v582 = vadd.f32 %v317, %v538
        %v583 = vadd.f32 %v318, %v543
        %v584 = vadd.f32 %v319, %v546
        %v585 = vadd.f32 %v320, %v551
        %v586 = vadd.f32 %v321, %v554
        %v587 = vadd.f32 %v322, %v559
        %v588 = vadd.f32 %v323, %v562
        %589 = vst.msk [vmem:[#allocation2] sm:$0xff] %vm275, %v565
        %590 = vst.msk [vmem:[#allocation2 + $0x8] sm:$0xff] %vm275, %v566
        %591 = vst.msk [vmem:[#allocation2 + $0x10] sm:$0xff] %vm275, %v567
        %592 = vst.msk [vmem:[#allocation2 + $0x18] sm:$0xff] %vm275, %v568
        %593 = vst.msk [vmem:[#allocation2 + $0x20] sm:$0xff] %vm275, %v569
        %594 = vst.msk [vmem:[#allocation2 + $0x28] sm:$0xff] %vm275, %v570
        %595 = vst.msk [vmem:[#allocation2 + $0x30] sm:$0xff] %vm275, %v571
        %596 = vst.msk [vmem:[#allocation2 + $0x38] sm:$0xff] %vm275, %v572
        %597 = vst.msk [vmem:[#allocation2 + $0x40] sm:$0xff] %vm275, %v573
        %598 = vst.msk [vmem:[#allocation2 + $0x48] sm:$0xff] %vm275, %v574
        %599 = vst.msk [vmem:[#allocation2 + $0x50] sm:$0xff] %vm275, %v575
        %600 = vst.msk [vmem:[#allocation2 + $0x58] sm:$0xff] %vm275, %v576
        %601 = vst.msk [vmem:[#allocation2 + $0x60] sm:$0xff] %vm275, %v577
        %602 = vst.msk [vmem:[#allocation2 + $0x68] sm:$0xff] %vm275, %v578
        %603 = vst.msk [vmem:[#allocation2 + $0x70] sm:$0xff] %vm275, %v579
        %604 = vst.msk [vmem:[#allocation2 + $0x78] sm:$0xff] %vm275, %v580
        %605 = vst.msk [vmem:[#allocation2 + $0x80] sm:$0xff] %vm275, %v581
        %606 = vst.msk [vmem:[#allocation2 + $0x88] sm:$0xff] %vm275, %v582
        %607 = vst.msk [vmem:[#allocation2 + $0x90] sm:$0xff] %vm275, %v583
        %608 = vst.msk [vmem:[#allocation2 + $0x98] sm:$0xff] %vm275, %v584
        %609 = vst.msk [vmem:[#allocation2 + $0xa0] sm:$0xff] %vm275, %v585
        %610 = vst.msk [vmem:[#allocation2 + $0xa8] sm:$0xff] %vm275, %v586
        %611 = vst.msk [vmem:[#allocation2 + $0xb0] sm:$0xff] %vm275, %v587
        %612 = vst.msk [vmem:[#allocation2 + $0xb8] sm:$0xff] %vm275, %v588
        %v613 = vld [vmem:[#allocation2] sm:$0xff]
        %v614 = vld [vmem:[#allocation2 + $0x8] sm:$0xff]
        %v615 = vld [vmem:[#allocation2 + $0x10] sm:$0xff]
        %v616 = vld [vmem:[#allocation2 + $0x18] sm:$0xff]
        %v617 = vld [vmem:[#allocation2 + $0x20] sm:$0xff]
        %v618 = vld [vmem:[#allocation2 + $0x28] sm:$0xff]
        %v619 = vld [vmem:[#allocation2 + $0x30] sm:$0xff]
        %v620 = vld [vmem:[#allocation2 + $0x38] sm:$0xff]
        %v621 = vld [vmem:[#allocation2 + $0x40] sm:$0xff]
        %v622 = vld [vmem:[#allocation2 + $0x48] sm:$0xff]
        %v623 = vld [vmem:[#allocation2 + $0x50] sm:$0xff]
        %v624 = vld [vmem:[#allocation2 + $0x58] sm:$0xff]
        %v625 = vld [vmem:[#allocation2 + $0x60] sm:$0xff]
        %v626 = vld [vmem:[#allocation2 + $0x68] sm:$0xff]
        %v627 = vld [vmem:[#allocation2 + $0x70] sm:$0xff]
        %v628 = vld [vmem:[#allocation2 + $0x78] sm:$0xff]
        %v629 = vld [vmem:[#allocation2 + $0x80] sm:$0xff]
        %v630 = vld [vmem:[#allocation2 + $0x88] sm:$0xff]
        %v631 = vld [vmem:[#allocation2 + $0x90] sm:$0xff]
        %v632 = vld [vmem:[#allocation2 + $0x98] sm:$0xff]
        %v633 = vld [vmem:[#allocation2 + $0xa0] sm:$0xff]
        %v634 = vld [vmem:[#allocation2 + $0xa8] sm:$0xff]
        %v635 = vld [vmem:[#allocation2 + $0xb0] sm:$0xff]
        %v636 = vld [vmem:[#allocation2 + $0xb8] sm:$0xff]
        %s637 = scalar_lea.vmem %s1, 48
        %v638 = vld [vmem:[%s637] sm:$0xf]
        %v639 = vld [vmem:[%s637 + $0x4] sm:$0xf]
        %v640 = vld [vmem:[%s637 + $0x8] sm:$0xf]
        %v641 = vld [vmem:[%s637 + $0xc] sm:$0xf]
        %v645 = vunpack.c.l.b16 %v268
        %v646 = vunpack.c.l.b16 %v269
        %v647 = vunpack.c.l.b16 %v270
        %v648 = vpack.c.b16 %v356, %v355
        %v649 = vpack.c.b16 %v358, %v357
        %v650 = vpack.c.b16 %v360, %v359
        %v651 = vpack.c.b16 %v362, %v361
        %v652 = vpack.c.b16 %v364, %v363
        %v653 = vpack.c.b16 %v366, %v365
        %v654 = vpack.c.b16 %v368, %v367
        %v655 = vpack.c.b16 %v370, %v369
        %v656 = vpack.c.b16 %v372, %v371
        %v657 = vpack.c.b16 %v374, %v373
        %v658 = vpack.c.b16 %v645, %v375
        %v659 = vpack.c.b16 %v647, %v646
        %v664 = vunpack.c.l.b16 %v638
        %v665 = vunpack.c.l.b16 %v639
        %v666 = vunpack.c.l.b16 %v640
        %v667 = vunpack.c.l.b16 %v641
        %v668 = vpack.c.b16 %v665, %v664
        %v669 = vpack.c.b16 %v667, %v666
        %v673 = vsel %vm275, %v648, 0
        %v676 = vsel %vm275, %v649, 0
        %v679 = vsel %vm275, %v650, 0
        %v682 = vsel %vm275, %v651, 0
        %v685 = vsel %vm275, %v652, 0
        %v688 = vsel %vm275, %v653, 0
        %v691 = vsel %vm275, %v654, 0
        %v694 = vsel %vm275, %v655, 0
        %v697 = vsel %vm275, %v656, 0
        %v700 = vsel %vm275, %v657, 0
        %v703 = vsel %vm275, %v658, 0
        %v706 = vsel %vm275, %v659, 0
        %708 = vmatprep.subr.bf16.mxu0 0
        %709 = vmatpush1.bf16.msra.mxu0 %v668
        %710 = vmatprep.subr.bf16.mxu0 0
        %711 = vmatpush1.bf16.msra.mxu0 %v669
        %712 = vmatprep.subr.bf16.mxu0 0
        %713 = vmatpush1.bf16.msra.mxu0 0
        %714 = vmatprep.subr.bf16.mxu0 0
        %715 = vmatpush1.bf16.msra.mxu0 0
        %716 = vmatprep.subr.bf16.mxu0 0
        %717 = vmatpush1.bf16.msra.mxu0 0
        %718 = vmatprep.subr.bf16.mxu0 0
        %719 = vmatpush1.bf16.msra.mxu0 0
        %720 = vmatprep.subr.bf16.mxu0 0
        %721 = vmatpush1.bf16.msra.mxu0 0
        %722 = vmatprep.subr.bf16.mxu0 0
        %723 = vmatpush1.bf16.msra.mxu0 0
        %724 = vmatprep.subr.bf16.mxu0 0
        %725 = vmatpush1.bf16.msra.mxu0 0
        %726 = vmatprep.subr.bf16.mxu0 0
        %727 = vmatpush1.bf16.msra.mxu0 0
        %728 = vmatprep.subr.bf16.mxu0 0
        %729 = vmatpush1.bf16.msra.mxu0 0
        %730 = vmatprep.subr.bf16.mxu0 0
        %731 = vmatpush1.bf16.msra.mxu0 0
        %732 = vmatprep.subr.bf16.mxu0 0
        %733 = vmatpush1.bf16.msra.mxu0 0
        %734 = vmatprep.subr.bf16.mxu0 0
        %735 = vmatpush1.bf16.msra.mxu0 0
        %736 = vmatprep.subr.bf16.mxu0 0
        %737 = vmatpush1.bf16.msra.mxu0 0
        %738 = vmatprep.subr.bf16.mxu0 0
        %739 = vmatpush1.bf16.msra.mxu0 0
        %740 = vmatprep.mubr.bf16.mxu0 0
        %741 = vmatmul.mubr.bf16.gmra.mrb[0].mxu0 %v673
        %v742 = vpop.f32.mrb[0].mxu0
        %v743 = vadd.f32 0.0, %v742
        %v744 = vpop.f32.mrb[0].mxu0
        %v745 = vpop.f32.mrb[0].mxu0
        %v746 = vadd.f32 0.0, %v745
        %v747 = vpop.f32.mrb[0].mxu0
        %748 = vmatprep.mubr.bf16.mxu0 0
        %749 = vmatmul.mubr.bf16.gmra.mrb[0].mxu0 %v676
        %v750 = vpop.f32.mrb[0].mxu0
        %v751 = vadd.f32 0.0, %v750
        %v752 = vpop.f32.mrb[0].mxu0
        %v753 = vpop.f32.mrb[0].mxu0
        %v754 = vadd.f32 0.0, %v753
        %v755 = vpop.f32.mrb[0].mxu0
        %756 = vmatprep.mubr.bf16.mxu0 0
        %757 = vmatmul.mubr.bf16.gmra.mrb[0].mxu0 %v679
        %v758 = vpop.f32.mrb[0].mxu0
        %v759 = vadd.f32 0.0, %v758
        %v760 = vpop.f32.mrb[0].mxu0
        %v761 = vpop.f32.mrb[0].mxu0
        %v762 = vadd.f32 0.0, %v761
        %v763 = vpop.f32.mrb[0].mxu0
        %764 = vmatprep.mubr.bf16.mxu0 0
        %765 = vmatmul.mubr.bf16.gmra.mrb[0].mxu0 %v682
        %v766 = vpop.f32.mrb[0].mxu0
        %v767 = vadd.f32 0.0, %v766
        %v768 = vpop.f32.mrb[0].mxu0
        %v769 = vpop.f32.mrb[0].mxu0
        %v770 = vadd.f32 0.0, %v769
        %v771 = vpop.f32.mrb[0].mxu0
        %772 = vmatprep.mubr.bf16.mxu0 0
        %773 = vmatmul.mubr.bf16.gmra.mrb[0].mxu0 %v685
        %v774 = vpop.f32.mrb[0].mxu0
        %v775 = vadd.f32 0.0, %v774
        %v776 = vpop.f32.mrb[0].mxu0
        %v777 = vpop.f32.mrb[0].mxu0
        %v778 = vadd.f32 0.0, %v777
        %v779 = vpop.f32.mrb[0].mxu0
        %780 = vmatprep.mubr.bf16.mxu0 0
        %781 = vmatmul.mubr.bf16.gmra.mrb[0].mxu0 %v688
        %v782 = vpop.f32.mrb[0].mxu0
        %v783 = vadd.f32 0.0, %v782
        %v784 = vpop.f32.mrb[0].mxu0
        %v785 = vpop.f32.mrb[0].mxu0
        %v786 = vadd.f32 0.0, %v785
        %v787 = vpop.f32.mrb[0].mxu0
        %788 = vmatprep.mubr.bf16.mxu0 0
        %789 = vmatmul.mubr.bf16.gmra.mrb[0].mxu0 %v691
        %v790 = vpop.f32.mrb[0].mxu0
        %v791 = vadd.f32 0.0, %v790
        %v792 = vpop.f32.mrb[0].mxu0
        %v793 = vpop.f32.mrb[0].mxu0
        %v794 = vadd.f32 0.0, %v793
        %v795 = vpop.f32.mrb[0].mxu0
        %796 = vmatprep.mubr.bf16.mxu0 0
        %797 = vmatmul.mubr.bf16.gmra.mrb[0].mxu0 %v694
        %v798 = vpop.f32.mrb[0].mxu0
        %v799 = vadd.f32 0.0, %v798
        %v800 = vpop.f32.mrb[0].mxu0
        %v801 = vpop.f32.mrb[0].mxu0
        %v802 = vadd.f32 0.0, %v801
        %v803 = vpop.f32.mrb[0].mxu0
        %804 = vmatprep.mubr.bf16.mxu0 0
        %805 = vmatmul.mubr.bf16.gmra.mrb[0].mxu0 %v697
        %v806 = vpop.f32.mrb[0].mxu0
        %v807 = vadd.f32 0.0, %v806
        %v808 = vpop.f32.mrb[0].mxu0
        %v809 = vpop.f32.mrb[0].mxu0
        %v810 = vadd.f32 0.0, %v809
        %v811 = vpop.f32.mrb[0].mxu0
        %812 = vmatprep.mubr.bf16.mxu0 0
        %813 = vmatmul.mubr.bf16.gmra.mrb[0].mxu0 %v700
        %v814 = vpop.f32.mrb[0].mxu0
        %v815 = vadd.f32 0.0, %v814
        %v816 = vpop.f32.mrb[0].mxu0
        %v817 = vpop.f32.mrb[0].mxu0
        %v818 = vadd.f32 0.0, %v817
        %v819 = vpop.f32.mrb[0].mxu0
        %820 = vmatprep.mubr.bf16.mxu0 0
        %821 = vmatmul.mubr.bf16.gmra.mrb[0].mxu0 %v703
        %v822 = vpop.f32.mrb[0].mxu0
        %v823 = vadd.f32 0.0, %v822
        %v824 = vpop.f32.mrb[0].mxu0
        %v825 = vpop.f32.mrb[0].mxu0
        %v826 = vadd.f32 0.0, %v825
        %v827 = vpop.f32.mrb[0].mxu0
        %828 = vmatprep.mubr.bf16.mxu0 0
        %829 = vmatmul.mubr.bf16.gmra.mrb[0].mxu0 %v706
        %v830 = vpop.f32.mrb[0].mxu0
        %v831 = vadd.f32 0.0, %v830
        %v832 = vpop.f32.mrb[0].mxu0
        %v833 = vpop.f32.mrb[0].mxu0
        %v834 = vadd.f32 0.0, %v833
        %v835 = vpop.f32.mrb[0].mxu0
        %836 = vdwg.mxu0
        %v837 = vadd.f32 %v613, %v743
        %v838 = vadd.f32 %v614, %v746
        %v839 = vadd.f32 %v615, %v751
        %v840 = vadd.f32 %v616, %v754
        %v841 = vadd.f32 %v617, %v759
        %v842 = vadd.f32 %v618, %v762
        %v843 = vadd.f32 %v619, %v767
        %v844 = vadd.f32 %v620, %v770
        %v845 = vadd.f32 %v621, %v775
        %v846 = vadd.f32 %v622, %v778
        %v847 = vadd.f32 %v623, %v783
        %v848 = vadd.f32 %v624, %v786
        %v849 = vadd.f32 %v625, %v791
        %v850 = vadd.f32 %v626, %v794
        %v851 = vadd.f32 %v627, %v799
        %v852 = vadd.f32 %v628, %v802
        %v853 = vadd.f32 %v629, %v807
        %v854 = vadd.f32 %v630, %v810
        %v855 = vadd.f32 %v631, %v815
        %v856 = vadd.f32 %v632, %v818
        %v857 = vadd.f32 %v633, %v823
        %v858 = vadd.f32 %v634, %v826
        %v859 = vadd.f32 %v635, %v831
        %v860 = vadd.f32 %v636, %v834
        %861 = vst.msk [vmem:[#allocation2] sm:$0xff] %vm275, %v837
        %862 = vst.msk [vmem:[#allocation2 + $0x8] sm:$0xff] %vm275, %v838
        %863 = vst.msk [vmem:[#allocation2 + $0x10] sm:$0xff] %vm275, %v839
        %864 = vst.msk [vmem:[#allocation2 + $0x18] sm:$0xff] %vm275, %v840
        %865 = vst.msk [vmem:[#allocation2 + $0x20] sm:$0xff] %vm275, %v841
        %866 = vst.msk [vmem:[#allocation2 + $0x28] sm:$0xff] %vm275, %v842
        %867 = vst.msk [vmem:[#allocation2 + $0x30] sm:$0xff] %vm275, %v843
        %868 = vst.msk [vmem:[#allocation2 + $0x38] sm:$0xff] %vm275, %v844
        %869 = vst.msk [vmem:[#allocation2 + $0x40] sm:$0xff] %vm275, %v845
        %870 = vst.msk [vmem:[#allocation2 + $0x48] sm:$0xff] %vm275, %v846
        %871 = vst.msk [vmem:[#allocation2 + $0x50] sm:$0xff] %vm275, %v847
        %872 = vst.msk [vmem:[#allocation2 + $0x58] sm:$0xff] %vm275, %v848
        %873 = vst.msk [vmem:[#allocation2 + $0x60] sm:$0xff] %vm275, %v849
        %874 = vst.msk [vmem:[#allocation2 + $0x68] sm:$0xff] %vm275, %v850
        %875 = vst.msk [vmem:[#allocation2 + $0x70] sm:$0xff] %vm275, %v851
        %876 = vst.msk [vmem:[#allocation2 + $0x78] sm:$0xff] %vm275, %v852
        %877 = vst.msk [vmem:[#allocation2 + $0x80] sm:$0xff] %vm275, %v853
        %878 = vst.msk [vmem:[#allocation2 + $0x88] sm:$0xff] %vm275, %v854
        %879 = vst.msk [vmem:[#allocation2 + $0x90] sm:$0xff] %vm275, %v855
        %880 = vst.msk [vmem:[#allocation2 + $0x98] sm:$0xff] %vm275, %v856
        %881 = vst.msk [vmem:[#allocation2 + $0xa0] sm:$0xff] %vm275, %v857
        %882 = vst.msk [vmem:[#allocation2 + $0xa8] sm:$0xff] %vm275, %v858
        %883 = vst.msk [vmem:[#allocation2 + $0xb0] sm:$0xff] %vm275, %v859
        %884 = vst.msk [vmem:[#allocation2 + $0xb8] sm:$0xff] %vm275, %v860
        %v885 = vld [vmem:[#allocation2] sm:$0xff]
        %v886 = vld [vmem:[#allocation2 + $0x8] sm:$0xff]
        %v887 = vld [vmem:[#allocation2 + $0x10] sm:$0xff]
        %v888 = vld [vmem:[#allocation2 + $0x18] sm:$0xff]
        %v889 = vld [vmem:[#allocation2 + $0x20] sm:$0xff]
        %v890 = vld [vmem:[#allocation2 + $0x28] sm:$0xff]
        %v891 = vld [vmem:[#allocation2 + $0x30] sm:$0xff]
        %v892 = vld [vmem:[#allocation2 + $0x38] sm:$0xff]
        %v893 = vld [vmem:[#allocation2 + $0x40] sm:$0xff]
        %v894 = vld [vmem:[#allocation2 + $0x48] sm:$0xff]
        %v895 = vld [vmem:[#allocation2 + $0x50] sm:$0xff]
        %v896 = vld [vmem:[#allocation2 + $0x58] sm:$0xff]
        %v897 = vld [vmem:[#allocation2 + $0x60] sm:$0xff]
        %v898 = vld [vmem:[#allocation2 + $0x68] sm:$0xff]
        %v899 = vld [vmem:[#allocation2 + $0x70] sm:$0xff]
        %v900 = vld [vmem:[#allocation2 + $0x78] sm:$0xff]
        %v901 = vld [vmem:[#allocation2 + $0x80] sm:$0xff]
        %v902 = vld [vmem:[#allocation2 + $0x88] sm:$0xff]
        %v903 = vld [vmem:[#allocation2 + $0x90] sm:$0xff]
        %v904 = vld [vmem:[#allocation2 + $0x98] sm:$0xff]
        %v905 = vld [vmem:[#allocation2 + $0xa0] sm:$0xff]
        %v906 = vld [vmem:[#allocation2 + $0xa8] sm:$0xff]
        %v907 = vld [vmem:[#allocation2 + $0xb0] sm:$0xff]
        %v908 = vld [vmem:[#allocation2 + $0xb8] sm:$0xff]
        %s909 = scalar_lea.vmem %s1, 96
        %v910 = vld [vmem:[%s909] sm:$0xf]
        %v911 = vld [vmem:[%s909 + $0x4] sm:$0xf]
        %v912 = vld [vmem:[%s909 + $0x8] sm:$0xf]
        %v913 = vld [vmem:[%s909 + $0xc] sm:$0xf]
        %v917 = vunpack.c.l.b16 %v271
        %v918 = vunpack.c.l.b16 %v272
        %v919 = vunpack.c.l.b16 %v273
        %v920 = vpack.c.b16 %v646, %v645
        %v921 = vpack.c.b16 %v917, %v647
        %v922 = vpack.c.b16 %v919, %v918
        %v927 = vunpack.c.l.b16 %v910
        %v928 = vunpack.c.l.b16 %v911
        %v929 = vunpack.c.l.b16 %v912
        %v930 = vunpack.c.l.b16 %v913
        %v931 = vpack.c.b16 %v928, %v927
        %v932 = vpack.c.b16 %v930, %v929
        %v936 = vsel %vm275, %v920, 0
        %v939 = vsel %vm275, %v921, 0
        %v942 = vsel %vm275, %v922, 0
        %944 = vmatprep.subr.bf16.mxu0 0
        %945 = vmatpush1.bf16.msra.mxu0 %v931
        %946 = vmatprep.subr.bf16.mxu0 0
        %947 = vmatpush1.bf16.msra.mxu0 %v932
        %948 = vmatprep.subr.bf16.mxu0 0
        %949 = vmatpush1.bf16.msra.mxu0 0
        %950 = vmatprep.subr.bf16.mxu0 0
        %951 = vmatpush1.bf16.msra.mxu0 0
        %952 = vmatprep.subr.bf16.mxu0 0
        %953 = vmatpush1.bf16.msra.mxu0 0
        %954 = vmatprep.subr.bf16.mxu0 0
        %955 = vmatpush1.bf16.msra.mxu0 0
        %956 = vmatprep.subr.bf16.mxu0 0
        %957 = vmatpush1.bf16.msra.mxu0 0
        %958 = vmatprep.subr.bf16.mxu0 0
        %959 = vmatpush1.bf16.msra.mxu0 0
        %960 = vmatprep.subr.bf16.mxu0 0
        %961 = vmatpush1.bf16.msra.mxu0 0
        %962 = vmatprep.subr.bf16.mxu0 0
        %963 = vmatpush1.bf16.msra.mxu0 0
        %964 = vmatprep.subr.bf16.mxu0 0
        %965 = vmatpush1.bf16.msra.mxu0 0
        %966 = vmatprep.subr.bf16.mxu0 0
        %967 = vmatpush1.bf16.msra.mxu0 0
        %968 = vmatprep.subr.bf16.mxu0 0
        %969 = vmatpush1.bf16.msra.mxu0 0
        %970 = vmatprep.subr.bf16.mxu0 0
        %971 = vmatpush1.bf16.msra.mxu0 0
        %972 = vmatprep.subr.bf16.mxu0 0
        %973 = vmatpush1.bf16.msra.mxu0 0
        %974 = vmatprep.subr.bf16.mxu0 0
        %975 = vmatpush1.bf16.msra.mxu0 0
        %976 = vmatprep.mubr.bf16.mxu0 0
        %977 = vmatmul.mubr.bf16.gmra.mrb[0].mxu0 %v410
        %v978 = vpop.f32.mrb[0].mxu0
        %v979 = vadd.f32 0.0, %v978
        %v980 = vpop.f32.mrb[0].mxu0
        %v981 = vpop.f32.mrb[0].mxu0
        %v982 = vadd.f32 0.0, %v981
        %v983 = vpop.f32.mrb[0].mxu0
        %984 = vmatprep.mubr.bf16.mxu0 0
        %985 = vmatmul.mubr.bf16.gmra.mrb[0].mxu0 %v413
        %v986 = vpop.f32.mrb[0].mxu0
        %v987 = vadd.f32 0.0, %v986
        %v988 = vpop.f32.mrb[0].mxu0
        %v989 = vpop.f32.mrb[0].mxu0
        %v990 = vadd.f32 0.0, %v989
        %v991 = vpop.f32.mrb[0].mxu0
        %992 = vmatprep.mubr.bf16.mxu0 0
        %993 = vmatmul.mubr.bf16.gmra.mrb[0].mxu0 %v416
        %v994 = vpop.f32.mrb[0].mxu0
        %v995 = vadd.f32 0.0, %v994
        %v996 = vpop.f32.mrb[0].mxu0
        %v997 = vpop.f32.mrb[0].mxu0
        %v998 = vadd.f32 0.0, %v997
        %v999 = vpop.f32.mrb[0].mxu0
        %1000 = vmatprep.mubr.bf16.mxu0 0
        %1001 = vmatmul.mubr.bf16.gmra.mrb[0].mxu0 %v419
        %v1002 = vpop.f32.mrb[0].mxu0
        %v1003 = vadd.f32 0.0, %v1002
        %v1004 = vpop.f32.mrb[0].mxu0
        %v1005 = vpop.f32.mrb[0].mxu0
        %v1006 = vadd.f32 0.0, %v1005
        %v1007 = vpop.f32.mrb[0].mxu0
        %1008 = vmatprep.mubr.bf16.mxu0 0
        %1009 = vmatmul.mubr.bf16.gmra.mrb[0].mxu0 %v422
        %v1010 = vpop.f32.mrb[0].mxu0
        %v1011 = vadd.f32 0.0, %v1010
        %v1012 = vpop.f32.mrb[0].mxu0
        %v1013 = vpop.f32.mrb[0].mxu0
        %v1014 = vadd.f32 0.0, %v1013
        %v1015 = vpop.f32.mrb[0].mxu0
        %1016 = vmatprep.mubr.bf16.mxu0 0
        %1017 = vmatmul.mubr.bf16.gmra.mrb[0].mxu0 %v425
        %v1018 = vpop.f32.mrb[0].mxu0
        %v1019 = vadd.f32 0.0, %v1018
        %v1020 = vpop.f32.mrb[0].mxu0
        %v1021 = vpop.f32.mrb[0].mxu0
        %v1022 = vadd.f32 0.0, %v1021
        %v1023 = vpop.f32.mrb[0].mxu0
        %1024 = vmatprep.mubr.bf16.mxu0 0
        %1025 = vmatmul.mubr.bf16.gmra.mrb[0].mxu0 %v428
        %v1026 = vpop.f32.mrb[0].mxu0
        %v1027 = vadd.f32 0.0, %v1026
        %v1028 = vpop.f32.mrb[0].mxu0
        %v1029 = vpop.f32.mrb[0].mxu0
        %v1030 = vadd.f32 0.0, %v1029
        %v1031 = vpop.f32.mrb[0].mxu0
        %1032 = vmatprep.mubr.bf16.mxu0 0
        %1033 = vmatmul.mubr.bf16.gmra.mrb[0].mxu0 %v431
        %v1034 = vpop.f32.mrb[0].mxu0
        %v1035 = vadd.f32 0.0, %v1034
        %v1036 = vpop.f32.mrb[0].mxu0
        %v1037 = vpop.f32.mrb[0].mxu0
        %v1038 = vadd.f32 0.0, %v1037
        %v1039 = vpop.f32.mrb[0].mxu0
        %1040 = vmatprep.mubr.bf16.mxu0 0
        %1041 = vmatmul.mubr.bf16.gmra.mrb[0].mxu0 %v434
        %v1042 = vpop.f32.mrb[0].mxu0
        %v1043 = vadd.f32 0.0, %v1042
        %v1044 = vpop.f32.mrb[0].mxu0
        %v1045 = vpop.f32.mrb[0].mxu0
        %v1046 = vadd.f32 0.0, %v1045
        %v1047 = vpop.f32.mrb[0].mxu0
        %1048 = vmatprep.mubr.bf16.mxu0 0
        %1049 = vmatmul.mubr.bf16.gmra.mrb[0].mxu0 %v936
        %v1050 = vpop.f32.mrb[0].mxu0
        %v1051 = vadd.f32 0.0, %v1050
        %v1052 = vpop.f32.mrb[0].mxu0
        %v1053 = vpop.f32.mrb[0].mxu0
        %v1054 = vadd.f32 0.0, %v1053
        %v1055 = vpop.f32.mrb[0].mxu0
        %1056 = vmatprep.mubr.bf16.mxu0 0
        %1057 = vmatmul.mubr.bf16.gmra.mrb[0].mxu0 %v939
        %v1058 = vpop.f32.mrb[0].mxu0
        %v1059 = vadd.f32 0.0, %v1058
        %v1060 = vpop.f32.mrb[0].mxu0
        %v1061 = vpop.f32.mrb[0].mxu0
        %v1062 = vadd.f32 0.0, %v1061
        %v1063 = vpop.f32.mrb[0].mxu0
        %1064 = vmatprep.mubr.bf16.mxu0 0
        %1065 = vmatmul.mubr.bf16.gmra.mrb[0].mxu0 %v942
        %v1066 = vpop.f32.mrb[0].mxu0
        %v1067 = vadd.f32 0.0, %v1066
        %v1068 = vpop.f32.mrb[0].mxu0
        %v1069 = vpop.f32.mrb[0].mxu0
        %v1070 = vadd.f32 0.0, %v1069
        %v1071 = vpop.f32.mrb[0].mxu0
        %1072 = vdwg.mxu0
        %v1073 = vadd.f32 %v885, %v979
        %v1074 = vadd.f32 %v886, %v982
        %v1075 = vadd.f32 %v887, %v987
        %v1076 = vadd.f32 %v888, %v990
        %v1077 = vadd.f32 %v889, %v995
        %v1078 = vadd.f32 %v890, %v998
        %v1079 = vadd.f32 %v891, %v1003
        %v1080 = vadd.f32 %v892, %v1006
        %v1081 = vadd.f32 %v893, %v1011
        %v1082 = vadd.f32 %v894, %v1014
        %v1083 = vadd.f32 %v895, %v1019
        %v1084 = vadd.f32 %v896, %v1022
        %v1085 = vadd.f32 %v897, %v1027
        %v1086 = vadd.f32 %v898, %v1030
        %v1087 = vadd.f32 %v899, %v1035
        %v1088 = vadd.f32 %v900, %v1038
        %v1089 = vadd.f32 %v901, %v1043
        %v1090 = vadd.f32 %v902, %v1046
        %v1091 = vadd.f32 %v903, %v1051
        %v1092 = vadd.f32 %v904, %v1054
        %v1093 = vadd.f32 %v905, %v1059
        %v1094 = vadd.f32 %v906, %v1062
        %v1095 = vadd.f32 %v907, %v1067
        %v1096 = vadd.f32 %v908, %v1070
        %1097 = vst.msk [vmem:[#allocation2] sm:$0xff] %vm275, %v1073
        %1098 = vst.msk [vmem:[#allocation2 + $0x8] sm:$0xff] %vm275, %v1074
        %1099 = vst.msk [vmem:[#allocation2 + $0x10] sm:$0xff] %vm275, %v1075
        %1100 = vst.msk [vmem:[#allocation2 + $0x18] sm:$0xff] %vm275, %v1076
        %1101 = vst.msk [vmem:[#allocation2 + $0x20] sm:$0xff] %vm275, %v1077
        %1102 = vst.msk [vmem:[#allocation2 + $0x28] sm:$0xff] %vm275, %v1078
        %1103 = vst.msk [vmem:[#allocation2 + $0x30] sm:$0xff] %vm275, %v1079
        %1104 = vst.msk [vmem:[#allocation2 + $0x38] sm:$0xff] %vm275, %v1080
        %1105 = vst.msk [vmem:[#allocation2 + $0x40] sm:$0xff] %vm275, %v1081
        %1106 = vst.msk [vmem:[#allocation2 + $0x48] sm:$0xff] %vm275, %v1082
        %1107 = vst.msk [vmem:[#allocation2 + $0x50] sm:$0xff] %vm275, %v1083
        %1108 = vst.msk [vmem:[#allocation2 + $0x58] sm:$0xff] %vm275, %v1084
        %1109 = vst.msk [vmem:[#allocation2 + $0x60] sm:$0xff] %vm275, %v1085
        %1110 = vst.msk [vmem:[#allocation2 + $0x68] sm:$0xff] %vm275, %v1086
        %1111 = vst.msk [vmem:[#allocation2 + $0x70] sm:$0xff] %vm275, %v1087
        %1112 = vst.msk [vmem:[#allocation2 + $0x78] sm:$0xff] %vm275, %v1088
        %1113 = vst.msk [vmem:[#allocation2 + $0x80] sm:$0xff] %vm275, %v1089
        %1114 = vst.msk [vmem:[#allocation2 + $0x88] sm:$0xff] %vm275, %v1090
        %1115 = vst.msk [vmem:[#allocation2 + $0x90] sm:$0xff] %vm275, %v1091
        %1116 = vst.msk [vmem:[#allocation2 + $0x98] sm:$0xff] %vm275, %v1092
        %1117 = vst.msk [vmem:[#allocation2 + $0xa0] sm:$0xff] %vm275, %v1093
        %1118 = vst.msk [vmem:[#allocation2 + $0xa8] sm:$0xff] %vm275, %v1094
        %1119 = vst.msk [vmem:[#allocation2 + $0xb0] sm:$0xff] %vm275, %v1095
        %1120 = vst.msk [vmem:[#allocation2 + $0xb8] sm:$0xff] %vm275, %v1096
        %v1121 = vld [vmem:[#allocation2] sm:$0xff]
        %v1122 = vld [vmem:[#allocation2 + $0x8] sm:$0xff]
        %v1123 = vld [vmem:[#allocation2 + $0x10] sm:$0xff]
        %v1124 = vld [vmem:[#allocation2 + $0x18] sm:$0xff]
        %v1125 = vld [vmem:[#allocation2 + $0x20] sm:$0xff]
        %v1126 = vld [vmem:[#allocation2 + $0x28] sm:$0xff]
        %v1127 = vld [vmem:[#allocation2 + $0x30] sm:$0xff]
        %v1128 = vld [vmem:[#allocation2 + $0x38] sm:$0xff]
        %v1129 = vld [vmem:[#allocation2 + $0x40] sm:$0xff]
        %v1130 = vld [vmem:[#allocation2 + $0x48] sm:$0xff]
        %v1131 = vld [vmem:[#allocation2 + $0x50] sm:$0xff]
        %v1132 = vld [vmem:[#allocation2 + $0x58] sm:$0xff]
        %v1133 = vld [vmem:[#allocation2 + $0x60] sm:$0xff]
        %v1134 = vld [vmem:[#allocation2 + $0x68] sm:$0xff]
        %v1135 = vld [vmem:[#allocation2 + $0x70] sm:$0xff]
        %v1136 = vld [vmem:[#allocation2 + $0x78] sm:$0xff]
        %v1137 = vld [vmem:[#allocation2 + $0x80] sm:$0xff]
        %v1138 = vld [vmem:[#allocation2 + $0x88] sm:$0xff]
        %v1139 = vld [vmem:[#allocation2 + $0x90] sm:$0xff]
        %v1140 = vld [vmem:[#allocation2 + $0x98] sm:$0xff]
        %v1141 = vld [vmem:[#allocation2 + $0xa0] sm:$0xff]
        %v1142 = vld [vmem:[#allocation2 + $0xa8] sm:$0xff]
        %v1143 = vld [vmem:[#allocation2 + $0xb0] sm:$0xff]
        %v1144 = vld [vmem:[#allocation2 + $0xb8] sm:$0xff]
        %s1145 = scalar_lea.vmem %s1, 16
        %v1146 = vld [vmem:[%s1145] sm:$0xf]
        %v1147 = vld [vmem:[%s1145 + $0x4] sm:$0xf]
        %v1148 = vld [vmem:[%s1145 + $0x8] sm:$0xf]
        %v1149 = vld [vmem:[%s1145 + $0xc] sm:$0xf]
        %v1150 = vpack.c.b16 %v645, %v645
        %vm1151 = vsmask.f32 7424
        %v1152 = vshrl.u32 %v376, 16
        %v1154 = vshll.u32 %v376, 16
        %v1156 = vrot.slane %v1154, 1
        %v1157 = vor.u32 %v1152, %v1156
        %v1158 = vshll.u32 %v377, 16
        %v1160 = vrot.slane %v1158, 1
        %v1161 = vsel %vm1151, %v1157, %v1160
        %v1162 = vshrl.u32 %v377, 16
        %v1164 = vor.u32 %v1162, %v1160
        %v1165 = vshll.u32 %v378, 16
        %v1167 = vrot.slane %v1165, 1
        %v1168 = vsel %vm1151, %v1164, %v1167
        %v1169 = vshrl.u32 %v378, 16
        %v1171 = vor.u32 %v1169, %v1167
        %v1172 = vshll.u32 %v379, 16
        %v1174 = vrot.slane %v1172, 1
        %v1175 = vsel %vm1151, %v1171, %v1174
        %v1176 = vshrl.u32 %v379, 16
        %v1178 = vor.u32 %v1176, %v1174
        %v1179 = vshll.u32 %v380, 16
        %v1181 = vrot.slane %v1179, 1
        %v1182 = vsel %vm1151, %v1178, %v1181
        %v1183 = vshrl.u32 %v380, 16
        %v1185 = vor.u32 %v1183, %v1181
        %v1186 = vshll.u32 %v381, 16
        %v1188 = vrot.slane %v1186, 1
        %v1189 = vsel %vm1151, %v1185, %v1188
        %v1190 = vshrl.u32 %v381, 16
        %v1192 = vor.u32 %v1190, %v1188
        %v1193 = vshll.u32 %v382, 16
        %v1195 = vrot.slane %v1193, 1
        %v1196 = vsel %vm1151, %v1192, %v1195
        %v1197 = vshrl.u32 %v382, 16
        %v1199 = vor.u32 %v1197, %v1195
        %v1200 = vshll.u32 %v383, 16
        %v1202 = vrot.slane %v1200, 1
        %v1203 = vsel %vm1151, %v1199, %v1202
        %v1204 = vshrl.u32 %v383, 16
        %v1206 = vor.u32 %v1204, %v1202
        %v1207 = vshll.u32 %v384, 16
        %v1209 = vrot.slane %v1207, 1
        %v1210 = vsel %vm1151, %v1206, %v1209
        %v1211 = vshrl.u32 %v384, 16
        %v1213 = vor.u32 %v1211, %v1209
        %v1214 = vshll.u32 %v385, 16
        %v1216 = vrot.slane %v1214, 1
        %v1217 = vsel %vm1151, %v1213, %v1216
        %v1218 = vshrl.u32 %v385, 16
        %v1220 = vor.u32 %v1218, %v1216
        %v1221 = vshll.u32 %v386, 16
        %v1223 = vrot.slane %v1221, 1
        %v1224 = vsel %vm1151, %v1220, %v1223
        %v1225 = vshrl.u32 %v386, 16
        %v1227 = vor.u32 %v1225, %v1223
        %v1228 = vshll.u32 %v387, 16
        %v1230 = vrot.slane %v1228, 1
        %v1231 = vsel %vm1151, %v1227, %v1230
        %v1232 = vshrl.u32 %v387, 16
        %v1234 = vor.u32 %v1232, %v1230
        %v1236 = vshll.u32 %v1150, 16
        %v1238 = vrot.slane %v1236, 1
        %v1239 = vsel %vm1151, %v1234, %v1238
        %v1244 = vunpack.c.l.b16 %v1146
        %v1245 = vunpack.c.l.b16 %v1147
        %v1246 = vunpack.c.l.b16 %v1148
        %v1247 = vunpack.c.l.b16 %v1149
        %v1248 = vpack.c.b16 %v1245, %v1244
        %v1249 = vpack.c.b16 %v1247, %v1246
        %v1253 = vsel %vm275, %v1161, 0
        %v1256 = vsel %vm275, %v1168, 0
        %v1259 = vsel %vm275, %v1175, 0
        %v1262 = vsel %vm275, %v1182, 0
        %v1265 = vsel %vm275, %v1189, 0
        %v1268 = vsel %vm275, %v1196, 0
        %v1271 = vsel %vm275, %v1203, 0
        %v1274 = vsel %vm275, %v1210, 0
        %v1277 = vsel %vm275, %v1217, 0
        %v1280 = vsel %vm275, %v1224, 0
        %v1283 = vsel %vm275, %v1231, 0
        %v1286 = vsel %vm275, %v1239, 0
        %1288 = vmatprep.subr.bf16.mxu0 0
        %1289 = vmatpush1.bf16.msra.mxu0 %v1248
        %1290 = vmatprep.subr.bf16.mxu0 0
        %1291 = vmatpush1.bf16.msra.mxu0 %v1249
        %1292 = vmatprep.subr.bf16.mxu0 0
        %1293 = vmatpush1.bf16.msra.mxu0 0
        %1294 = vmatprep.subr.bf16.mxu0 0
        %1295 = vmatpush1.bf16.msra.mxu0 0
        %1296 = vmatprep.subr.bf16.mxu0 0
        %1297 = vmatpush1.bf16.msra.mxu0 0
        %1298 = vmatprep.subr.bf16.mxu0 0
        %1299 = vmatpush1.bf16.msra.mxu0 0
        %1300 = vmatprep.subr.bf16.mxu0 0
        %1301 = vmatpush1.bf16.msra.mxu0 0
        %1302 = vmatprep.subr.bf16.mxu0 0
        %1303 = vmatpush1.bf16.msra.mxu0 0
        %1304 = vmatprep.subr.bf16.mxu0 0
        %1305 = vmatpush1.bf16.msra.mxu0 0
        %1306 = vmatprep.subr.bf16.mxu0 0
        %1307 = vmatpush1.bf16.msra.mxu0 0
        %1308 = vmatprep.subr.bf16.mxu0 0
        %1309 = vmatpush1.bf16.msra.mxu0 0
        %1310 = vmatprep.subr.bf16.mxu0 0
        %1311 = vmatpush1.bf16.msra.mxu0 0
        %1312 = vmatprep.subr.bf16.mxu0 0
        %1313 = vmatpush1.bf16.msra.mxu0 0
        %1314 = vmatprep.subr.bf16.mxu0 0
        %1315 = vmatpush1.bf16.msra.mxu0 0
        %1316 = vmatprep.subr.bf16.mxu0 0
        %1317 = vmatpush1.bf16.msra.mxu0 0
        %1318 = vmatprep.subr.bf16.mxu0 0
        %1319 = vmatpush1.bf16.msra.mxu0 0
        %1320 = vmatprep.mubr.bf16.mxu0 0
        %1321 = vmatmul.mubr.bf16.gmra.mrb[0].mxu0 %v1253
        %v1322 = vpop.f32.mrb[0].mxu0
        %v1323 = vadd.f32 0.0, %v1322
        %v1324 = vpop.f32.mrb[0].mxu0
        %v1325 = vpop.f32.mrb[0].mxu0
        %v1326 = vadd.f32 0.0, %v1325
        %v1327 = vpop.f32.mrb[0].mxu0
        %1328 = vmatprep.mubr.bf16.mxu0 0
        %1329 = vmatmul.mubr.bf16.gmra.mrb[0].mxu0 %v1256
        %v1330 = vpop.f32.mrb[0].mxu0
        %v1331 = vadd.f32 0.0, %v1330
        %v1332 = vpop.f32.mrb[0].mxu0
        %v1333 = vpop.f32.mrb[0].mxu0
        %v1334 = vadd.f32 0.0, %v1333
        %v1335 = vpop.f32.mrb[0].mxu0
        %1336 = vmatprep.mubr.bf16.mxu0 0
        %1337 = vmatmul.mubr.bf16.gmra.mrb[0].mxu0 %v1259
        %v1338 = vpop.f32.mrb[0].mxu0
        %v1339 = vadd.f32 0.0, %v1338
        %v1340 = vpop.f32.mrb[0].mxu0
        %v1341 = vpop.f32.mrb[0].mxu0
        %v1342 = vadd.f32 0.0, %v1341
        %v1343 = vpop.f32.mrb[0].mxu0
        %1344 = vmatprep.mubr.bf16.mxu0 0
        %1345 = vmatmul.mubr.bf16.gmra.mrb[0].mxu0 %v1262
        %v1346 = vpop.f32.mrb[0].mxu0
        %v1347 = vadd.f32 0.0, %v1346
        %v1348 = vpop.f32.mrb[0].mxu0
        %v1349 = vpop.f32.mrb[0].mxu0
        %v1350 = vadd.f32 0.0, %v1349
        %v1351 = vpop.f32.mrb[0].mxu0
        %1352 = vmatprep.mubr.bf16.mxu0 0
        %1353 = vmatmul.mubr.bf16.gmra.mrb[0].mxu0 %v1265
        %v1354 = vpop.f32.mrb[0].mxu0
        %v1355 = vadd.f32 0.0, %v1354
        %v1356 = vpop.f32.mrb[0].mxu0
        %v1357 = vpop.f32.mrb[0].mxu0
        %v1358 = vadd.f32 0.0, %v1357
        %v1359 = vpop.f32.mrb[0].mxu0
        %1360 = vmatprep.mubr.bf16.mxu0 0
        %1361 = vmatmul.mubr.bf16.gmra.mrb[0].mxu0 %v1268
        %v1362 = vpop.f32.mrb[0].mxu0
        %v1363 = vadd.f32 0.0, %v1362
        %v1364 = vpop.f32.mrb[0].mxu0
        %v1365 = vpop.f32.mrb[0].mxu0
        %v1366 = vadd.f32 0.0, %v1365
        %v1367 = vpop.f32.mrb[0].mxu0
        %1368 = vmatprep.mubr.bf16.mxu0 0
        %1369 = vmatmul.mubr.bf16.gmra.mrb[0].mxu0 %v1271
        %v1370 = vpop.f32.mrb[0].mxu0
        %v1371 = vadd.f32 0.0, %v1370
        %v1372 = vpop.f32.mrb[0].mxu0
        %v1373 = vpop.f32.mrb[0].mxu0
        %v1374 = vadd.f32 0.0, %v1373
        %v1375 = vpop.f32.mrb[0].mxu0
        %1376 = vmatprep.mubr.bf16.mxu0 0
        %1377 = vmatmul.mubr.bf16.gmra.mrb[0].mxu0 %v1274
        %v1378 = vpop.f32.mrb[0].mxu0
        %v1379 = vadd.f32 0.0, %v1378
        %v1380 = vpop.f32.mrb[0].mxu0
        %v1381 = vpop.f32.mrb[0].mxu0
        %v1382 = vadd.f32 0.0, %v1381
        %v1383 = vpop.f32.mrb[0].mxu0
        %1384 = vmatprep.mubr.bf16.mxu0 0
        %1385 = vmatmul.mubr.bf16.gmra.mrb[0].mxu0 %v1277
        %v1386 = vpop.f32.mrb[0].mxu0
        %v1387 = vadd.f32 0.0, %v1386
        %v1388 = vpop.f32.mrb[0].mxu0
        %v1389 = vpop.f32.mrb[0].mxu0
        %v1390 = vadd.f32 0.0, %v1389
        %v1391 = vpop.f32.mrb[0].mxu0
        %1392 = vmatprep.mubr.bf16.mxu0 0
        %1393 = vmatmul.mubr.bf16.gmra.mrb[0].mxu0 %v1280
        %v1394 = vpop.f32.mrb[0].mxu0
        %v1395 = vadd.f32 0.0, %v1394
        %v1396 = vpop.f32.mrb[0].mxu0
        %v1397 = vpop.f32.mrb[0].mxu0
        %v1398 = vadd.f32 0.0, %v1397
        %v1399 = vpop.f32.mrb[0].mxu0
        %1400 = vmatprep.mubr.bf16.mxu0 0
        %1401 = vmatmul.mubr.bf16.gmra.mrb[0].mxu0 %v1283
        %v1402 = vpop.f32.mrb[0].mxu0
        %v1403 = vadd.f32 0.0, %v1402
        %v1404 = vpop.f32.mrb[0].mxu0
        %v1405 = vpop.f32.mrb[0].mxu0
        %v1406 = vadd.f32 0.0, %v1405
        %v1407 = vpop.f32.mrb[0].mxu0
        %1408 = vmatprep.mubr.bf16.mxu0 0
        %1409 = vmatmul.mubr.bf16.gmra.mrb[0].mxu0 %v1286
        %v1410 = vpop.f32.mrb[0].mxu0
        %v1411 = vadd.f32 0.0, %v1410
        %v1412 = vpop.f32.mrb[0].mxu0
        %v1413 = vpop.f32.mrb[0].mxu0
        %v1414 = vadd.f32 0.0, %v1413
        %v1415 = vpop.f32.mrb[0].mxu0
        %1416 = vdwg.mxu0
        %v1417 = vadd.f32 %v1121, %v1323
        %v1418 = vadd.f32 %v1122, %v1326
        %v1419 = vadd.f32 %v1123, %v1331
        %v1420 = vadd.f32 %v1124, %v1334
        %v1421 = vadd.f32 %v1125, %v1339
        %v1422 = vadd.f32 %v1126, %v1342
        %v1423 = vadd.f32 %v1127, %v1347
        %v1424 = vadd.f32 %v1128, %v1350
        %v1425 = vadd.f32 %v1129, %v1355
        %v1426 = vadd.f32 %v1130, %v1358
        %v1427 = vadd.f32 %v1131, %v1363
        %v1428 = vadd.f32 %v1132, %v1366
        %v1429 = vadd.f32 %v1133, %v1371
        %v1430 = vadd.f32 %v1134, %v1374
        %v1431 = vadd.f32 %v1135, %v1379
        %v1432 = vadd.f32 %v1136, %v1382
        %v1433 = vadd.f32 %v1137, %v1387
        %v1434 = vadd.f32 %v1138, %v1390
        %v1435 = vadd.f32 %v1139, %v1395
        %v1436 = vadd.f32 %v1140, %v1398
        %v1437 = vadd.f32 %v1141, %v1403
        %v1438 = vadd.f32 %v1142, %v1406
        %v1439 = vadd.f32 %v1143, %v1411
        %v1440 = vadd.f32 %v1144, %v1414
        %1441 = vst.msk [vmem:[#allocation2] sm:$0xff] %vm275, %v1417
        %1442 = vst.msk [vmem:[#allocation2 + $0x8] sm:$0xff] %vm275, %v1418
        %1443 = vst.msk [vmem:[#allocation2 + $0x10] sm:$0xff] %vm275, %v1419
        %1444 = vst.msk [vmem:[#allocation2 + $0x18] sm:$0xff] %vm275, %v1420
        %1445 = vst.msk [vmem:[#allocation2 + $0x20] sm:$0xff] %vm275, %v1421
        %1446 = vst.msk [vmem:[#allocation2 + $0x28] sm:$0xff] %vm275, %v1422
        %1447 = vst.msk [vmem:[#allocation2 + $0x30] sm:$0xff] %vm275, %v1423
        %1448 = vst.msk [vmem:[#allocation2 + $0x38] sm:$0xff] %vm275, %v1424
        %1449 = vst.msk [vmem:[#allocation2 + $0x40] sm:$0xff] %vm275, %v1425
        %1450 = vst.msk [vmem:[#allocation2 + $0x48] sm:$0xff] %vm275, %v1426
        %1451 = vst.msk [vmem:[#allocation2 + $0x50] sm:$0xff] %vm275, %v1427
        %1452 = vst.msk [vmem:[#allocation2 + $0x58] sm:$0xff] %vm275, %v1428
        %1453 = vst.msk [vmem:[#allocation2 + $0x60] sm:$0xff] %vm275, %v1429
        %1454 = vst.msk [vmem:[#allocation2 + $0x68] sm:$0xff] %vm275, %v1430
        %1455 = vst.msk [vmem:[#allocation2 + $0x70] sm:$0xff] %vm275, %v1431
        %1456 = vst.msk [vmem:[#allocation2 + $0x78] sm:$0xff] %vm275, %v1432
        %1457 = vst.msk [vmem:[#allocation2 + $0x80] sm:$0xff] %vm275, %v1433
        %1458 = vst.msk [vmem:[#allocation2 + $0x88] sm:$0xff] %vm275, %v1434
        %1459 = vst.msk [vmem:[#allocation2 + $0x90] sm:$0xff] %vm275, %v1435
        %1460 = vst.msk [vmem:[#allocation2 + $0x98] sm:$0xff] %vm275, %v1436
        %1461 = vst.msk [vmem:[#allocation2 + $0xa0] sm:$0xff] %vm275, %v1437
        %1462 = vst.msk [vmem:[#allocation2 + $0xa8] sm:$0xff] %vm275, %v1438
        %1463 = vst.msk [vmem:[#allocation2 + $0xb0] sm:$0xff] %vm275, %v1439
        %1464 = vst.msk [vmem:[#allocation2 + $0xb8] sm:$0xff] %vm275, %v1440
        %v1465 = vld [vmem:[#allocation2] sm:$0xff]
        %v1466 = vld [vmem:[#allocation2 + $0x8] sm:$0xff]
        %v1467 = vld [vmem:[#allocation2 + $0x10] sm:$0xff]
        %v1468 = vld [vmem:[#allocation2 + $0x18] sm:$0xff]
        %v1469 = vld [vmem:[#allocation2 + $0x20] sm:$0xff]
        %v1470 = vld [vmem:[#allocation2 + $0x28] sm:$0xff]
        %v1471 = vld [vmem:[#allocation2 + $0x30] sm:$0xff]
        %v1472 = vld [vmem:[#allocation2 + $0x38] sm:$0xff]
        %v1473 = vld [vmem:[#allocation2 + $0x40] sm:$0xff]
        %v1474 = vld [vmem:[#allocation2 + $0x48] sm:$0xff]
        %v1475 = vld [vmem:[#allocation2 + $0x50] sm:$0xff]
        %v1476 = vld [vmem:[#allocation2 + $0x58] sm:$0xff]
        %v1477 = vld [vmem:[#allocation2 + $0x60] sm:$0xff]
        %v1478 = vld [vmem:[#allocation2 + $0x68] sm:$0xff]
        %v1479 = vld [vmem:[#allocation2 + $0x70] sm:$0xff]
        %v1480 = vld [vmem:[#allocation2 + $0x78] sm:$0xff]
        %v1481 = vld [vmem:[#allocation2 + $0x80] sm:$0xff]
        %v1482 = vld [vmem:[#allocation2 + $0x88] sm:$0xff]
        %v1483 = vld [vmem:[#allocation2 + $0x90] sm:$0xff]
        %v1484 = vld [vmem:[#allocation2 + $0x98] sm:$0xff]
        %v1485 = vld [vmem:[#allocation2 + $0xa0] sm:$0xff]
        %v1486 = vld [vmem:[#allocation2 + $0xa8] sm:$0xff]
        %v1487 = vld [vmem:[#allocation2 + $0xb0] sm:$0xff]
        %v1488 = vld [vmem:[#allocation2 + $0xb8] sm:$0xff]
        %s1489 = scalar_lea.vmem %s1, 64
        %v1490 = vld [vmem:[%s1489] sm:$0xf]
        %v1491 = vld [vmem:[%s1489 + $0x4] sm:$0xf]
        %v1492 = vld [vmem:[%s1489 + $0x8] sm:$0xf]
        %v1493 = vld [vmem:[%s1489 + $0xc] sm:$0xf]
        %v1494 = vpack.c.b16 %v917, %v917
        %v1495 = vshrl.u32 %v648, 16
        %v1497 = vshll.u32 %v648, 16
        %v1499 = vrot.slane %v1497, 1
        %v1500 = vor.u32 %v1495, %v1499
        %v1501 = vshll.u32 %v649, 16
        %v1503 = vrot.slane %v1501, 1
        %v1504 = vsel %vm1151, %v1500, %v1503
        %v1505 = vshrl.u32 %v649, 16
        %v1507 = vor.u32 %v1505, %v1503
        %v1508 = vshll.u32 %v650, 16
        %v1510 = vrot.slane %v1508, 1
        %v1511 = vsel %vm1151, %v1507, %v1510
        %v1512 = vshrl.u32 %v650, 16
        %v1514 = vor.u32 %v1512, %v1510
        %v1515 = vshll.u32 %v651, 16
        %v1517 = vrot.slane %v1515, 1
        %v1518 = vsel %vm1151, %v1514, %v1517
        %v1519 = vshrl.u32 %v651, 16
        %v1521 = vor.u32 %v1519, %v1517
        %v1522 = vshll.u32 %v652, 16
        %v1524 = vrot.slane %v1522, 1
        %v1525 = vsel %vm1151, %v1521, %v1524
        %v1526 = vshrl.u32 %v652, 16
        %v1528 = vor.u32 %v1526, %v1524
        %v1529 = vshll.u32 %v653, 16
        %v1531 = vrot.slane %v1529, 1
        %v1532 = vsel %vm1151, %v1528, %v1531
        %v1533 = vshrl.u32 %v653, 16
        %v1535 = vor.u32 %v1533, %v1531
        %v1536 = vshll.u32 %v654, 16
        %v1538 = vrot.slane %v1536, 1
        %v1539 = vsel %vm1151, %v1535, %v1538
        %v1540 = vshrl.u32 %v654, 16
        %v1542 = vor.u32 %v1540, %v1538
        %v1543 = vshll.u32 %v655, 16
        %v1545 = vrot.slane %v1543, 1
        %v1546 = vsel %vm1151, %v1542, %v1545
        %v1547 = vshrl.u32 %v655, 16
        %v1549 = vor.u32 %v1547, %v1545
        %v1550 = vshll.u32 %v656, 16
        %v1552 = vrot.slane %v1550, 1
        %v1553 = vsel %vm1151, %v1549, %v1552
        %v1554 = vshrl.u32 %v656, 16
        %v1556 = vor.u32 %v1554, %v1552
        %v1557 = vshll.u32 %v657, 16
        %v1559 = vrot.slane %v1557, 1
        %v1560 = vsel %vm1151, %v1556, %v1559
        %v1561 = vshrl.u32 %v657, 16
        %v1563 = vor.u32 %v1561, %v1559
        %v1564 = vshll.u32 %v658, 16
        %v1566 = vrot.slane %v1564, 1
        %v1567 = vsel %vm1151, %v1563, %v1566
        %v1568 = vshrl.u32 %v658, 16
        %v1570 = vor.u32 %v1568, %v1566
        %v1571 = vshll.u32 %v659, 16
        %v1573 = vrot.slane %v1571, 1
        %v1574 = vsel %vm1151, %v1570, %v1573
        %v1575 = vshrl.u32 %v659, 16
        %v1577 = vor.u32 %v1575, %v1573
        %v1579 = vshll.u32 %v1494, 16
        %v1581 = vrot.slane %v1579, 1
        %v1582 = vsel %vm1151, %v1577, %v1581
        %v1587 = vunpack.c.l.b16 %v1490
        %v1588 = vunpack.c.l.b16 %v1491
        %v1589 = vunpack.c.l.b16 %v1492
        %v1590 = vunpack.c.l.b16 %v1493
        %v1591 = vpack.c.b16 %v1588, %v1587
        %v1592 = vpack.c.b16 %v1590, %v1589
        %v1596 = vsel %vm275, %v1504, 0
        %v1599 = vsel %vm275, %v1511, 0
        %v1602 = vsel %vm275, %v1518, 0
        %v1605 = vsel %vm275, %v1525, 0
        %v1608 = vsel %vm275, %v1532, 0
        %v1611 = vsel %vm275, %v1539, 0
        %v1614 = vsel %vm275, %v1546, 0
        %v1617 = vsel %vm275, %v1553, 0
        %v1620 = vsel %vm275, %v1560, 0
        %v1623 = vsel %vm275, %v1567, 0
        %v1626 = vsel %vm275, %v1574, 0
        %v1629 = vsel %vm275, %v1582, 0
        %1631 = vmatprep.subr.bf16.mxu0 0
        %1632 = vmatpush1.bf16.msra.mxu0 %v1591
        %1633 = vmatprep.subr.bf16.mxu0 0
        %1634 = vmatpush1.bf16.msra.mxu0 %v1592
        %1635 = vmatprep.subr.bf16.mxu0 0
        %1636 = vmatpush1.bf16.msra.mxu0 0
        %1637 = vmatprep.subr.bf16.mxu0 0
        %1638 = vmatpush1.bf16.msra.mxu0 0
        %1639 = vmatprep.subr.bf16.mxu0 0
        %1640 = vmatpush1.bf16.msra.mxu0 0
        %1641 = vmatprep.subr.bf16.mxu0 0
        %1642 = vmatpush1.bf16.msra.mxu0 0
        %1643 = vmatprep.subr.bf16.mxu0 0
        %1644 = vmatpush1.bf16.msra.mxu0 0
        %1645 = vmatprep.subr.bf16.mxu0 0
        %1646 = vmatpush1.bf16.msra.mxu0 0
        %1647 = vmatprep.subr.bf16.mxu0 0
        %1648 = vmatpush1.bf16.msra.mxu0 0
        %1649 = vmatprep.subr.bf16.mxu0 0
        %1650 = vmatpush1.bf16.msra.mxu0 0
        %1651 = vmatprep.subr.bf16.mxu0 0
        %1652 = vmatpush1.bf16.msra.mxu0 0
        %1653 = vmatprep.subr.bf16.mxu0 0
        %1654 = vmatpush1.bf16.msra.mxu0 0
        %1655 = vmatprep.subr.bf16.mxu0 0
        %1656 = vmatpush1.bf16.msra.mxu0 0
        %1657 = vmatprep.subr.bf16.mxu0 0
        %1658 = vmatpush1.bf16.msra.mxu0 0
        %1659 = vmatprep.subr.bf16.mxu0 0
        %1660 = vmatpush1.bf16.msra.mxu0 0
        %1661 = vmatprep.subr.bf16.mxu0 0
        %1662 = vmatpush1.bf16.msra.mxu0 0
        %1663 = vmatprep.mubr.bf16.mxu0 0
        %1664 = vmatmul.mubr.bf16.gmra.mrb[0].mxu0 %v1596
        %v1665 = vpop.f32.mrb[0].mxu0
        %v1666 = vadd.f32 0.0, %v1665
        %v1667 = vpop.f32.mrb[0].mxu0
        %v1668 = vpop.f32.mrb[0].mxu0
        %v1669 = vadd.f32 0.0, %v1668
        %v1670 = vpop.f32.mrb[0].mxu0
        %1671 = vmatprep.mubr.bf16.mxu0 0
        %1672 = vmatmul.mubr.bf16.gmra.mrb[0].mxu0 %v1599
        %v1673 = vpop.f32.mrb[0].mxu0
        %v1674 = vadd.f32 0.0, %v1673
        %v1675 = vpop.f32.mrb[0].mxu0
        %v1676 = vpop.f32.mrb[0].mxu0
        %v1677 = vadd.f32 0.0, %v1676
        %v1678 = vpop.f32.mrb[0].mxu0
        %1679 = vmatprep.mubr.bf16.mxu0 0
        %1680 = vmatmul.mubr.bf16.gmra.mrb[0].mxu0 %v1602
        %v1681 = vpop.f32.mrb[0].mxu0
        %v1682 = vadd.f32 0.0, %v1681
        %v1683 = vpop.f32.mrb[0].mxu0
        %v1684 = vpop.f32.mrb[0].mxu0
        %v1685 = vadd.f32 0.0, %v1684
        %v1686 = vpop.f32.mrb[0].mxu0
        %1687 = vmatprep.mubr.bf16.mxu0 0
        %1688 = vmatmul.mubr.bf16.gmra.mrb[0].mxu0 %v1605
        %v1689 = vpop.f32.mrb[0].mxu0
        %v1690 = vadd.f32 0.0, %v1689
        %v1691 = vpop.f32.mrb[0].mxu0
        %v1692 = vpop.f32.mrb[0].mxu0
        %v1693 = vadd.f32 0.0, %v1692
        %v1694 = vpop.f32.mrb[0].mxu0
        %1695 = vmatprep.mubr.bf16.mxu0 0
        %1696 = vmatmul.mubr.bf16.gmra.mrb[0].mxu0 %v1608
        %v1697 = vpop.f32.mrb[0].mxu0
        %v1698 = vadd.f32 0.0, %v1697
        %v1699 = vpop.f32.mrb[0].mxu0
        %v1700 = vpop.f32.mrb[0].mxu0
        %v1701 = vadd.f32 0.0, %v1700
        %v1702 = vpop.f32.mrb[0].mxu0
        %1703 = vmatprep.mubr.bf16.mxu0 0
        %1704 = vmatmul.mubr.bf16.gmra.mrb[0].mxu0 %v1611
        %v1705 = vpop.f32.mrb[0].mxu0
        %v1706 = vadd.f32 0.0, %v1705
        %v1707 = vpop.f32.mrb[0].mxu0
        %v1708 = vpop.f32.mrb[0].mxu0
        %v1709 = vadd.f32 0.0, %v1708
        %v1710 = vpop.f32.mrb[0].mxu0
        %1711 = vmatprep.mubr.bf16.mxu0 0
        %1712 = vmatmul.mubr.bf16.gmra.mrb[0].mxu0 %v1614
        %v1713 = vpop.f32.mrb[0].mxu0
        %v1714 = vadd.f32 0.0, %v1713
        %v1715 = vpop.f32.mrb[0].mxu0
        %v1716 = vpop.f32.mrb[0].mxu0
        %v1717 = vadd.f32 0.0, %v1716
        %v1718 = vpop.f32.mrb[0].mxu0
        %1719 = vmatprep.mubr.bf16.mxu0 0
        %1720 = vmatmul.mubr.bf16.gmra.mrb[0].mxu0 %v1617
        %v1721 = vpop.f32.mrb[0].mxu0
        %v1722 = vadd.f32 0.0, %v1721
        %v1723 = vpop.f32.mrb[0].mxu0
        %v1724 = vpop.f32.mrb[0].mxu0
        %v1725 = vadd.f32 0.0, %v1724
        %v1726 = vpop.f32.mrb[0].mxu0
        %1727 = vmatprep.mubr.bf16.mxu0 0
        %1728 = vmatmul.mubr.bf16.gmra.mrb[0].mxu0 %v1620
        %v1729 = vpop.f32.mrb[0].mxu0
        %v1730 = vadd.f32 0.0, %v1729
        %v1731 = vpop.f32.mrb[0].mxu0
        %v1732 = vpop.f32.mrb[0].mxu0
        %v1733 = vadd.f32 0.0, %v1732
        %v1734 = vpop.f32.mrb[0].mxu0
        %1735 = vmatprep.mubr.bf16.mxu0 0
        %1736 = vmatmul.mubr.bf16.gmra.mrb[0].mxu0 %v1623
        %v1737 = vpop.f32.mrb[0].mxu0
        %v1738 = vadd.f32 0.0, %v1737
        %v1739 = vpop.f32.mrb[0].mxu0
        %v1740 = vpop.f32.mrb[0].mxu0
        %v1741 = vadd.f32 0.0, %v1740
        %v1742 = vpop.f32.mrb[0].mxu0
        %1743 = vmatprep.mubr.bf16.mxu0 0
        %1744 = vmatmul.mubr.bf16.gmra.mrb[0].mxu0 %v1626
        %v1745 = vpop.f32.mrb[0].mxu0
        %v1746 = vadd.f32 0.0, %v1745
        %v1747 = vpop.f32.mrb[0].mxu0
        %v1748 = vpop.f32.mrb[0].mxu0
        %v1749 = vadd.f32 0.0, %v1748
        %v1750 = vpop.f32.mrb[0].mxu0
        %1751 = vmatprep.mubr.bf16.mxu0 0
        %1752 = vmatmul.mubr.bf16.gmra.mrb[0].mxu0 %v1629
        %v1753 = vpop.f32.mrb[0].mxu0
        %v1754 = vadd.f32 0.0, %v1753
        %v1755 = vpop.f32.mrb[0].mxu0
        %v1756 = vpop.f32.mrb[0].mxu0
        %v1757 = vadd.f32 0.0, %v1756
        %v1758 = vpop.f32.mrb[0].mxu0
        %1759 = vdwg.mxu0
        %v1760 = vadd.f32 %v1465, %v1666
        %v1761 = vadd.f32 %v1466, %v1669
        %v1762 = vadd.f32 %v1467, %v1674
        %v1763 = vadd.f32 %v1468, %v1677
        %v1764 = vadd.f32 %v1469, %v1682
        %v1765 = vadd.f32 %v1470, %v1685
        %v1766 = vadd.f32 %v1471, %v1690
        %v1767 = vadd.f32 %v1472, %v1693
        %v1768 = vadd.f32 %v1473, %v1698
        %v1769 = vadd.f32 %v1474, %v1701
        %v1770 = vadd.f32 %v1475, %v1706
        %v1771 = vadd.f32 %v1476, %v1709
        %v1772 = vadd.f32 %v1477, %v1714
        %v1773 = vadd.f32 %v1478, %v1717
        %v1774 = vadd.f32 %v1479, %v1722
        %v1775 = vadd.f32 %v1480, %v1725
        %v1776 = vadd.f32 %v1481, %v1730
        %v1777 = vadd.f32 %v1482, %v1733
        %v1778 = vadd.f32 %v1483, %v1738
        %v1779 = vadd.f32 %v1484, %v1741
        %v1780 = vadd.f32 %v1485, %v1746
        %v1781 = vadd.f32 %v1486, %v1749
        %v1782 = vadd.f32 %v1487, %v1754
        %v1783 = vadd.f32 %v1488, %v1757
        %1784 = vst.msk [vmem:[#allocation2] sm:$0xff] %vm275, %v1760
        %1785 = vst.msk [vmem:[#allocation2 + $0x8] sm:$0xff] %vm275, %v1761
        %1786 = vst.msk [vmem:[#allocation2 + $0x10] sm:$0xff] %vm275, %v1762
        %1787 = vst.msk [vmem:[#allocation2 + $0x18] sm:$0xff] %vm275, %v1763
        %1788 = vst.msk [vmem:[#allocation2 + $0x20] sm:$0xff] %vm275, %v1764
        %1789 = vst.msk [vmem:[#allocation2 + $0x28] sm:$0xff] %vm275, %v1765
        %1790 = vst.msk [vmem:[#allocation2 + $0x30] sm:$0xff] %vm275, %v1766
        %1791 = vst.msk [vmem:[#allocation2 + $0x38] sm:$0xff] %vm275, %v1767
        %1792 = vst.msk [vmem:[#allocation2 + $0x40] sm:$0xff] %vm275, %v1768
        %1793 = vst.msk [vmem:[#allocation2 + $0x48] sm:$0xff] %vm275, %v1769
        %1794 = vst.msk [vmem:[#allocation2 + $0x50] sm:$0xff] %vm275, %v1770
        %1795 = vst.msk [vmem:[#allocation2 + $0x58] sm:$0xff] %vm275, %v1771
        %1796 = vst.msk [vmem:[#allocation2 + $0x60] sm:$0xff] %vm275, %v1772
        %1797 = vst.msk [vmem:[#allocation2 + $0x68] sm:$0xff] %vm275, %v1773
        %1798 = vst.msk [vmem:[#allocation2 + $0x70] sm:$0xff] %vm275, %v1774
        %1799 = vst.msk [vmem:[#allocation2 + $0x78] sm:$0xff] %vm275, %v1775
        %1800 = vst.msk [vmem:[#allocation2 + $0x80] sm:$0xff] %vm275, %v1776
        %1801 = vst.msk [vmem:[#allocation2 + $0x88] sm:$0xff] %vm275, %v1777
        %1802 = vst.msk [vmem:[#allocation2 + $0x90] sm:$0xff] %vm275, %v1778
        %1803 = vst.msk [vmem:[#allocation2 + $0x98] sm:$0xff] %vm275, %v1779
        %1804 = vst.msk [vmem:[#allocation2 + $0xa0] sm:$0xff] %vm275, %v1780
        %1805 = vst.msk [vmem:[#allocation2 + $0xa8] sm:$0xff] %vm275, %v1781
        %1806 = vst.msk [vmem:[#allocation2 + $0xb0] sm:$0xff] %vm275, %v1782
        %1807 = vst.msk [vmem:[#allocation2 + $0xb8] sm:$0xff] %vm275, %v1783
        %v1808 = vld [vmem:[#allocation2] sm:$0xff]
        %v1809 = vld [vmem:[#allocation2 + $0x8] sm:$0xff]
        %v1810 = vld [vmem:[#allocation2 + $0x10] sm:$0xff]
        %v1811 = vld [vmem:[#allocation2 + $0x18] sm:$0xff]
        %v1812 = vld [vmem:[#allocation2 + $0x20] sm:$0xff]
        %v1813 = vld [vmem:[#allocation2 + $0x28] sm:$0xff]
        %v1814 = vld [vmem:[#allocation2 + $0x30] sm:$0xff]
        %v1815 = vld [vmem:[#allocation2 + $0x38] sm:$0xff]
        %v1816 = vld [vmem:[#allocation2 + $0x40] sm:$0xff]
        %v1817 = vld [vmem:[#allocation2 + $0x48] sm:$0xff]
        %v1818 = vld [vmem:[#allocation2 + $0x50] sm:$0xff]
        %v1819 = vld [vmem:[#allocation2 + $0x58] sm:$0xff]
        %v1820 = vld [vmem:[#allocation2 + $0x60] sm:$0xff]
        %v1821 = vld [vmem:[#allocation2 + $0x68] sm:$0xff]
        %v1822 = vld [vmem:[#allocation2 + $0x70] sm:$0xff]
        %v1823 = vld [vmem:[#allocation2 + $0x78] sm:$0xff]
        %v1824 = vld [vmem:[#allocation2 + $0x80] sm:$0xff]
        %v1825 = vld [vmem:[#allocation2 + $0x88] sm:$0xff]
        %v1826 = vld [vmem:[#allocation2 + $0x90] sm:$0xff]
        %v1827 = vld [vmem:[#allocation2 + $0x98] sm:$0xff]
        %v1828 = vld [vmem:[#allocation2 + $0xa0] sm:$0xff]
        %v1829 = vld [vmem:[#allocation2 + $0xa8] sm:$0xff]
        %v1830 = vld [vmem:[#allocation2 + $0xb0] sm:$0xff]
        %v1831 = vld [vmem:[#allocation2 + $0xb8] sm:$0xff]
        %s1832 = scalar_lea.vmem %s1, 112
        %v1833 = vld [vmem:[%s1832] sm:$0xf]
        %v1834 = vld [vmem:[%s1832 + $0x4] sm:$0xf]
        %v1835 = vld [vmem:[%s1832 + $0x8] sm:$0xf]
        %v1836 = vld [vmem:[%s1832 + $0xc] sm:$0xf]
        %v1838 = vunpack.c.l.b16 %v274
        %v1839 = vpack.c.b16 %v1838, %v1838
        %v1840 = vshll.u32 %v920, 16
        %v1842 = vrot.slane %v1840, 1
        %v1843 = vsel %vm1151, %v1234, %v1842
        %v1844 = vshrl.u32 %v920, 16
        %v1846 = vor.u32 %v1844, %v1842
        %v1847 = vshll.u32 %v921, 16
        %v1849 = vrot.slane %v1847, 1
        %v1850 = vsel %vm1151, %v1846, %v1849
        %v1851 = vshrl.u32 %v921, 16
        %v1853 = vor.u32 %v1851, %v1849
        %v1854 = vshll.u32 %v922, 16
        %v1856 = vrot.slane %v1854, 1
        %v1857 = vsel %vm1151, %v1853, %v1856
        %v1858 = vshrl.u32 %v922, 16
        %v1860 = vor.u32 %v1858, %v1856
        %v1862 = vshll.u32 %v1839, 16
        %v1864 = vrot.slane %v1862, 1
        %v1865 = vsel %vm1151, %v1860, %v1864
        %v1870 = vunpack.c.l.b16 %v1833
        %v1871 = vunpack.c.l.b16 %v1834
        %v1872 = vunpack.c.l.b16 %v1835
        %v1873 = vunpack.c.l.b16 %v1836
        %v1874 = vpack.c.b16 %v1871, %v1870
        %v1875 = vpack.c.b16 %v1873, %v1872
        %v1879 = vsel %vm275, %v1843, 0
        %v1882 = vsel %vm275, %v1850, 0
        %v1885 = vsel %vm275, %v1857, 0
        %v1888 = vsel %vm275, %v1865, 0
        %1890 = vmatprep.subr.bf16.mxu0 0
        %1891 = vmatpush1.bf16.msra.mxu0 %v1874
        %1892 = vmatprep.subr.bf16.mxu0 0
        %1893 = vmatpush1.bf16.msra.mxu0 %v1875
        %1894 = vmatprep.subr.bf16.mxu0 0
        %1895 = vmatpush1.bf16.msra.mxu0 0
        %1896 = vmatprep.subr.bf16.mxu0 0
        %1897 = vmatpush1.bf16.msra.mxu0 0
        %1898 = vmatprep.subr.bf16.mxu0 0
        %1899 = vmatpush1.bf16.msra.mxu0 0
        %1900 = vmatprep.subr.bf16.mxu0 0
        %1901 = vmatpush1.bf16.msra.mxu0 0
        %1902 = vmatprep.subr.bf16.mxu0 0
        %1903 = vmatpush1.bf16.msra.mxu0 0
        %1904 = vmatprep.subr.bf16.mxu0 0
        %1905 = vmatpush1.bf16.msra.mxu0 0
        %1906 = vmatprep.subr.bf16.mxu0 0
        %1907 = vmatpush1.bf16.msra.mxu0 0
        %1908 = vmatprep.subr.bf16.mxu0 0
        %1909 = vmatpush1.bf16.msra.mxu0 0
        %1910 = vmatprep.subr.bf16.mxu0 0
        %1911 = vmatpush1.bf16.msra.mxu0 0
        %1912 = vmatprep.subr.bf16.mxu0 0
        %1913 = vmatpush1.bf16.msra.mxu0 0
        %1914 = vmatprep.subr.bf16.mxu0 0
        %1915 = vmatpush1.bf16.msra.mxu0 0
        %1916 = vmatprep.subr.bf16.mxu0 0
        %1917 = vmatpush1.bf16.msra.mxu0 0
        %1918 = vmatprep.subr.bf16.mxu0 0
        %1919 = vmatpush1.bf16.msra.mxu0 0
        %1920 = vmatprep.subr.bf16.mxu0 0
        %1921 = vmatpush1.bf16.msra.mxu0 0
        %1922 = vmatprep.mubr.bf16.mxu0 0
        %1923 = vmatmul.mubr.bf16.gmra.mrb[0].mxu0 %v1262
        %v1924 = vpop.f32.mrb[0].mxu0
        %v1925 = vadd.f32 0.0, %v1924
        %v1926 = vpop.f32.mrb[0].mxu0
        %v1927 = vpop.f32.mrb[0].mxu0
        %v1928 = vadd.f32 0.0, %v1927
        %v1929 = vpop.f32.mrb[0].mxu0
        %1930 = vmatprep.mubr.bf16.mxu0 0
        %1931 = vmatmul.mubr.bf16.gmra.mrb[0].mxu0 %v1265
        %v1932 = vpop.f32.mrb[0].mxu0
        %v1933 = vadd.f32 0.0, %v1932
        %v1934 = vpop.f32.mrb[0].mxu0
        %v1935 = vpop.f32.mrb[0].mxu0
        %v1936 = vadd.f32 0.0, %v1935
        %v1937 = vpop.f32.mrb[0].mxu0
        %1938 = vmatprep.mubr.bf16.mxu0 0
        %1939 = vmatmul.mubr.bf16.gmra.mrb[0].mxu0 %v1268
        %v1940 = vpop.f32.mrb[0].mxu0
        %v1941 = vadd.f32 0.0, %v1940
        %v1942 = vpop.f32.mrb[0].mxu0
        %v1943 = vpop.f32.mrb[0].mxu0
        %v1944 = vadd.f32 0.0, %v1943
        %v1945 = vpop.f32.mrb[0].mxu0
        %1946 = vmatprep.mubr.bf16.mxu0 0
        %1947 = vmatmul.mubr.bf16.gmra.mrb[0].mxu0 %v1271
        %v1948 = vpop.f32.mrb[0].mxu0
        %v1949 = vadd.f32 0.0, %v1948
        %v1950 = vpop.f32.mrb[0].mxu0
        %v1951 = vpop.f32.mrb[0].mxu0
        %v1952 = vadd.f32 0.0, %v1951
        %v1953 = vpop.f32.mrb[0].mxu0
        %1954 = vmatprep.mubr.bf16.mxu0 0
        %1955 = vmatmul.mubr.bf16.gmra.mrb[0].mxu0 %v1274
        %v1956 = vpop.f32.mrb[0].mxu0
        %v1957 = vadd.f32 0.0, %v1956
        %v1958 = vpop.f32.mrb[0].mxu0
        %v1959 = vpop.f32.mrb[0].mxu0
        %v1960 = vadd.f32 0.0, %v1959
        %v1961 = vpop.f32.mrb[0].mxu0
        %1962 = vmatprep.mubr.bf16.mxu0 0
        %1963 = vmatmul.mubr.bf16.gmra.mrb[0].mxu0 %v1277
        %v1964 = vpop.f32.mrb[0].mxu0
        %v1965 = vadd.f32 0.0, %v1964
        %v1966 = vpop.f32.mrb[0].mxu0
        %v1967 = vpop.f32.mrb[0].mxu0
        %v1968 = vadd.f32 0.0, %v1967
        %v1969 = vpop.f32.mrb[0].mxu0
        %1970 = vmatprep.mubr.bf16.mxu0 0
        %1971 = vmatmul.mubr.bf16.gmra.mrb[0].mxu0 %v1280
        %v1972 = vpop.f32.mrb[0].mxu0
        %v1973 = vadd.f32 0.0, %v1972
        %v1974 = vpop.f32.mrb[0].mxu0
        %v1975 = vpop.f32.mrb[0].mxu0
        %v1976 = vadd.f32 0.0, %v1975
        %v1977 = vpop.f32.mrb[0].mxu0
        %1978 = vmatprep.mubr.bf16.mxu0 0
        %1979 = vmatmul.mubr.bf16.gmra.mrb[0].mxu0 %v1283
        %v1980 = vpop.f32.mrb[0].mxu0
        %v1981 = vadd.f32 0.0, %v1980
        %v1982 = vpop.f32.mrb[0].mxu0
        %v1983 = vpop.f32.mrb[0].mxu0
        %v1984 = vadd.f32 0.0, %v1983
        %v1985 = vpop.f32.mrb[0].mxu0
        %1986 = vmatprep.mubr.bf16.mxu0 0
        %1987 = vmatmul.mubr.bf16.gmra.mrb[0].mxu0 %v1879
        %v1988 = vpop.f32.mrb[0].mxu0
        %v1989 = vadd.f32 0.0, %v1988
        %v1990 = vpop.f32.mrb[0].mxu0
        %v1991 = vpop.f32.mrb[0].mxu0
        %v1992 = vadd.f32 0.0, %v1991
        %v1993 = vpop.f32.mrb[0].mxu0
        %1994 = vmatprep.mubr.bf16.mxu0 0
        %1995 = vmatmul.mubr.bf16.gmra.mrb[0].mxu0 %v1882
        %v1996 = vpop.f32.mrb[0].mxu0
        %v1997 = vadd.f32 0.0, %v1996
        %v1998 = vpop.f32.mrb[0].mxu0
        %v1999 = vpop.f32.mrb[0].mxu0
        %v2000 = vadd.f32 0.0, %v1999
        %v2001 = vpop.f32.mrb[0].mxu0
        %2002 = vmatprep.mubr.bf16.mxu0 0
        %2003 = vmatmul.mubr.bf16.gmra.mrb[0].mxu0 %v1885
        %v2004 = vpop.f32.mrb[0].mxu0
        %v2005 = vadd.f32 0.0, %v2004
        %v2006 = vpop.f32.mrb[0].mxu0
        %v2007 = vpop.f32.mrb[0].mxu0
        %v2008 = vadd.f32 0.0, %v2007
        %v2009 = vpop.f32.mrb[0].mxu0
        %2010 = vmatprep.mubr.bf16.mxu0 0
        %2011 = vmatmul.mubr.bf16.gmra.mrb[0].mxu0 %v1888
        %v2012 = vpop.f32.mrb[0].mxu0
        %v2013 = vadd.f32 0.0, %v2012
        %v2014 = vpop.f32.mrb[0].mxu0
        %v2015 = vpop.f32.mrb[0].mxu0
        %v2016 = vadd.f32 0.0, %v2015
        %v2017 = vpop.f32.mrb[0].mxu0
        %2018 = vdwg.mxu0
        %v2019 = vadd.f32 %v1808, %v1925
        %v2020 = vadd.f32 %v1809, %v1928
        %v2021 = vadd.f32 %v1810, %v1933
        %v2022 = vadd.f32 %v1811, %v1936
        %v2023 = vadd.f32 %v1812, %v1941
        %v2024 = vadd.f32 %v1813, %v1944
        %v2025 = vadd.f32 %v1814, %v1949
        %v2026 = vadd.f32 %v1815, %v1952
        %v2027 = vadd.f32 %v1816, %v1957
        %v2028 = vadd.f32 %v1817, %v1960
        %v2029 = vadd.f32 %v1818, %v1965
        %v2030 = vadd.f32 %v1819, %v1968
        %v2031 = vadd.f32 %v1820, %v1973
        %v2032 = vadd.f32 %v1821, %v1976
        %v2033 = vadd.f32 %v1822, %v1981
        %v2034 = vadd.f32 %v1823, %v1984
        %v2035 = vadd.f32 %v1824, %v1989
        %v2036 = vadd.f32 %v1825, %v1992
        %v2037 = vadd.f32 %v1826, %v1997
        %v2038 = vadd.f32 %v1827, %v2000
        %v2039 = vadd.f32 %v1828, %v2005
        %v2040 = vadd.f32 %v1829, %v2008
        %v2041 = vadd.f32 %v1830, %v2013
        %v2042 = vadd.f32 %v1831, %v2016
        %2043 = vst.msk [vmem:[#allocation2] sm:$0xff] %vm275, %v2019
        %2044 = vst.msk [vmem:[#allocation2 + $0x8] sm:$0xff] %vm275, %v2020
        %2045 = vst.msk [vmem:[#allocation2 + $0x10] sm:$0xff] %vm275, %v2021
        %2046 = vst.msk [vmem:[#allocation2 + $0x18] sm:$0xff] %vm275, %v2022
        %2047 = vst.msk [vmem:[#allocation2 + $0x20] sm:$0xff] %vm275, %v2023
        %2048 = vst.msk [vmem:[#allocation2 + $0x28] sm:$0xff] %vm275, %v2024
        %2049 = vst.msk [vmem:[#allocation2 + $0x30] sm:$0xff] %vm275, %v2025
        %2050 = vst.msk [vmem:[#allocation2 + $0x38] sm:$0xff] %vm275, %v2026
        %2051 = vst.msk [vmem:[#allocation2 + $0x40] sm:$0xff] %vm275, %v2027
        %2052 = vst.msk [vmem:[#allocation2 + $0x48] sm:$0xff] %vm275, %v2028
        %2053 = vst.msk [vmem:[#allocation2 + $0x50] sm:$0xff] %vm275, %v2029
        %2054 = vst.msk [vmem:[#allocation2 + $0x58] sm:$0xff] %vm275, %v2030
        %2055 = vst.msk [vmem:[#allocation2 + $0x60] sm:$0xff] %vm275, %v2031
        %2056 = vst.msk [vmem:[#allocation2 + $0x68] sm:$0xff] %vm275, %v2032
        %2057 = vst.msk [vmem:[#allocation2 + $0x70] sm:$0xff] %vm275, %v2033
        %2058 = vst.msk [vmem:[#allocation2 + $0x78] sm:$0xff] %vm275, %v2034
        %2059 = vst.msk [vmem:[#allocation2 + $0x80] sm:$0xff] %vm275, %v2035
        %2060 = vst.msk [vmem:[#allocation2 + $0x88] sm:$0xff] %vm275, %v2036
        %2061 = vst.msk [vmem:[#allocation2 + $0x90] sm:$0xff] %vm275, %v2037
        %2062 = vst.msk [vmem:[#allocation2 + $0x98] sm:$0xff] %vm275, %v2038
        %2063 = vst.msk [vmem:[#allocation2 + $0xa0] sm:$0xff] %vm275, %v2039
        %2064 = vst.msk [vmem:[#allocation2 + $0xa8] sm:$0xff] %vm275, %v2040
        %2065 = vst.msk [vmem:[#allocation2 + $0xb0] sm:$0xff] %vm275, %v2041
        %2066 = vst.msk [vmem:[#allocation2 + $0xb8] sm:$0xff] %vm275, %v2042
        %v2067 = vld [vmem:[#allocation2] sm:$0xff]
        %v2068 = vld [vmem:[#allocation2 + $0x8] sm:$0xff]
        %v2069 = vld [vmem:[#allocation2 + $0x10] sm:$0xff]
        %v2070 = vld [vmem:[#allocation2 + $0x18] sm:$0xff]
        %v2071 = vld [vmem:[#allocation2 + $0x20] sm:$0xff]
        %v2072 = vld [vmem:[#allocation2 + $0x28] sm:$0xff]
        %v2073 = vld [vmem:[#allocation2 + $0x30] sm:$0xff]
        %v2074 = vld [vmem:[#allocation2 + $0x38] sm:$0xff]
        %v2075 = vld [vmem:[#allocation2 + $0x40] sm:$0xff]
        %v2076 = vld [vmem:[#allocation2 + $0x48] sm:$0xff]
        %v2077 = vld [vmem:[#allocation2 + $0x50] sm:$0xff]
        %v2078 = vld [vmem:[#allocation2 + $0x58] sm:$0xff]
        %v2079 = vld [vmem:[#allocation2 + $0x60] sm:$0xff]
        %v2080 = vld [vmem:[#allocation2 + $0x68] sm:$0xff]
        %v2081 = vld [vmem:[#allocation2 + $0x70] sm:$0xff]
        %v2082 = vld [vmem:[#allocation2 + $0x78] sm:$0xff]
        %v2083 = vld [vmem:[#allocation2 + $0x80] sm:$0xff]
        %v2084 = vld [vmem:[#allocation2 + $0x88] sm:$0xff]
        %v2085 = vld [vmem:[#allocation2 + $0x90] sm:$0xff]
        %v2086 = vld [vmem:[#allocation2 + $0x98] sm:$0xff]
        %v2087 = vld [vmem:[#allocation2 + $0xa0] sm:$0xff]
        %v2088 = vld [vmem:[#allocation2 + $0xa8] sm:$0xff]
        %v2089 = vld [vmem:[#allocation2 + $0xb0] sm:$0xff]
        %v2090 = vld [vmem:[#allocation2 + $0xb8] sm:$0xff]
        %s2091 = scalar_lea.vmem %s1, 32
        %v2092 = vld [vmem:[%s2091] sm:$0xf]
        %v2093 = vld [vmem:[%s2091 + $0x4] sm:$0xf]
        %v2094 = vld [vmem:[%s2091 + $0x8] sm:$0xf]
        %v2095 = vld [vmem:[%s2091 + $0xc] sm:$0xf]
        %vm2096 = vcmask 1046528
        %v2097 = vrot.slane %v376, 1
        %v2098 = vrot.slane %v377, 1
        %v2099 = vsel %vm2096, %v2097, %v2098
        %v2100 = vrot.slane %v378, 1
        %v2101 = vsel %vm2096, %v2098, %v2100
        %v2102 = vrot.slane %v379, 1
        %v2103 = vsel %vm2096, %v2100, %v2102
        %v2104 = vrot.slane %v380, 1
        %v2105 = vsel %vm2096, %v2102, %v2104
        %v2106 = vrot.slane %v381, 1
        %v2107 = vsel %vm2096, %v2104, %v2106
        %v2108 = vrot.slane %v382, 1
        %v2109 = vsel %vm2096, %v2106, %v2108
        %v2110 = vrot.slane %v383, 1
        %v2111 = vsel %vm2096, %v2108, %v2110
        %v2112 = vrot.slane %v384, 1
        %v2113 = vsel %vm2096, %v2110, %v2112
        %v2114 = vrot.slane %v385, 1
        %v2115 = vsel %vm2096, %v2112, %v2114
        %v2116 = vrot.slane %v386, 1
        %v2117 = vsel %vm2096, %v2114, %v2116
        %v2118 = vrot.slane %v387, 1
        %v2119 = vsel %vm2096, %v2116, %v2118
        %v2120 = vrot.slane %v1150, 1
        %v2121 = vsel %vm2096, %v2118, %v2120
        %v2126 = vunpack.c.l.b16 %v2092
        %v2127 = vunpack.c.l.b16 %v2093
        %v2128 = vunpack.c.l.b16 %v2094
        %v2129 = vunpack.c.l.b16 %v2095
        %v2130 = vpack.c.b16 %v2127, %v2126
        %v2131 = vpack.c.b16 %v2129, %v2128
        %v2135 = vsel %vm275, %v2099, 0
        %v2138 = vsel %vm275, %v2101, 0
        %v2141 = vsel %vm275, %v2103, 0
        %v2144 = vsel %vm275, %v2105, 0
        %v2147 = vsel %vm275, %v2107, 0
        %v2150 = vsel %vm275, %v2109, 0
        %v2153 = vsel %vm275, %v2111, 0
        %v2156 = vsel %vm275, %v2113, 0
        %v2159 = vsel %vm275, %v2115, 0
        %v2162 = vsel %vm275, %v2117, 0
        %v2165 = vsel %vm275, %v2119, 0
        %v2168 = vsel %vm275, %v2121, 0
        %2170 = vmatprep.subr.bf16.mxu0 0
        %2171 = vmatpush1.bf16.msra.mxu0 %v2130
        %2172 = vmatprep.subr.bf16.mxu0 0
        %2173 = vmatpush1.bf16.msra.mxu0 %v2131
        %2174 = vmatprep.subr.bf16.mxu0 0
        %2175 = vmatpush1.bf16.msra.mxu0 0
        %2176 = vmatprep.subr.bf16.mxu0 0
        %2177 = vmatpush1.bf16.msra.mxu0 0
        %2178 = vmatprep.subr.bf16.mxu0 0
        %2179 = vmatpush1.bf16.msra.mxu0 0
        %2180 = vmatprep.subr.bf16.mxu0 0
        %2181 = vmatpush1.bf16.msra.mxu0 0
        %2182 = vmatprep.subr.bf16.mxu0 0
        %2183 = vmatpush1.bf16.msra.mxu0 0
        %2184 = vmatprep.subr.bf16.mxu0 0
        %2185 = vmatpush1.bf16.msra.mxu0 0
        %2186 = vmatprep.subr.bf16.mxu0 0
        %2187 = vmatpush1.bf16.msra.mxu0 0
        %2188 = vmatprep.subr.bf16.mxu0 0
        %2189 = vmatpush1.bf16.msra.mxu0 0
        %2190 = vmatprep.subr.bf16.mxu0 0
        %2191 = vmatpush1.bf16.msra.mxu0 0
        %2192 = vmatprep.subr.bf16.mxu0 0
        %2193 = vmatpush1.bf16.msra.mxu0 0
        %2194 = vmatprep.subr.bf16.mxu0 0
        %2195 = vmatpush1.bf16.msra.mxu0 0
        %2196 = vmatprep.subr.bf16.mxu0 0
        %2197 = vmatpush1.bf16.msra.mxu0 0
        %2198 = vmatprep.subr.bf16.mxu0 0
        %2199 = vmatpush1.bf16.msra.mxu0 0
        %2200 = vmatprep.subr.bf16.mxu0 0
        %2201 = vmatpush1.bf16.msra.mxu0 0
        %2202 = vmatprep.mubr.bf16.mxu0 0
        %2203 = vmatmul.mubr.bf16.gmra.mrb[0].mxu0 %v2135
        %v2204 = vpop.f32.mrb[0].mxu0
        %v2205 = vadd.f32 0.0, %v2204
        %v2206 = vpop.f32.mrb[0].mxu0
        %v2207 = vpop.f32.mrb[0].mxu0
        %v2208 = vadd.f32 0.0, %v2207
        %v2209 = vpop.f32.mrb[0].mxu0
        %2210 = vmatprep.mubr.bf16.mxu0 0
        %2211 = vmatmul.mubr.bf16.gmra.mrb[0].mxu0 %v2138
        %v2212 = vpop.f32.mrb[0].mxu0
        %v2213 = vadd.f32 0.0, %v2212
        %v2214 = vpop.f32.mrb[0].mxu0
        %v2215 = vpop.f32.mrb[0].mxu0
        %v2216 = vadd.f32 0.0, %v2215
        %v2217 = vpop.f32.mrb[0].mxu0
        %2218 = vmatprep.mubr.bf16.mxu0 0
        %2219 = vmatmul.mubr.bf16.gmra.mrb[0].mxu0 %v2141
        %v2220 = vpop.f32.mrb[0].mxu0
        %v2221 = vadd.f32 0.0, %v2220
        %v2222 = vpop.f32.mrb[0].mxu0
        %v2223 = vpop.f32.mrb[0].mxu0
        %v2224 = vadd.f32 0.0, %v2223
        %v2225 = vpop.f32.mrb[0].mxu0
        %2226 = vmatprep.mubr.bf16.mxu0 0
        %2227 = vmatmul.mubr.bf16.gmra.mrb[0].mxu0 %v2144
        %v2228 = vpop.f32.mrb[0].mxu0
        %v2229 = vadd.f32 0.0, %v2228
        %v2230 = vpop.f32.mrb[0].mxu0
        %v2231 = vpop.f32.mrb[0].mxu0
        %v2232 = vadd.f32 0.0, %v2231
        %v2233 = vpop.f32.mrb[0].mxu0
        %2234 = vmatprep.mubr.bf16.mxu0 0
        %2235 = vmatmul.mubr.bf16.gmra.mrb[0].mxu0 %v2147
        %v2236 = vpop.f32.mrb[0].mxu0
        %v2237 = vadd.f32 0.0, %v2236
        %v2238 = vpop.f32.mrb[0].mxu0
        %v2239 = vpop.f32.mrb[0].mxu0
        %v2240 = vadd.f32 0.0, %v2239
        %v2241 = vpop.f32.mrb[0].mxu0
        %2242 = vmatprep.mubr.bf16.mxu0 0
        %2243 = vmatmul.mubr.bf16.gmra.mrb[0].mxu0 %v2150
        %v2244 = vpop.f32.mrb[0].mxu0
        %v2245 = vadd.f32 0.0, %v2244
        %v2246 = vpop.f32.mrb[0].mxu0
        %v2247 = vpop.f32.mrb[0].mxu0
        %v2248 = vadd.f32 0.0, %v2247
        %v2249 = vpop.f32.mrb[0].mxu0
        %2250 = vmatprep.mubr.bf16.mxu0 0
        %2251 = vmatmul.mubr.bf16.gmra.mrb[0].mxu0 %v2153
        %v2252 = vpop.f32.mrb[0].mxu0
        %v2253 = vadd.f32 0.0, %v2252
        %v2254 = vpop.f32.mrb[0].mxu0
        %v2255 = vpop.f32.mrb[0].mxu0
        %v2256 = vadd.f32 0.0, %v2255
        %v2257 = vpop.f32.mrb[0].mxu0
        %2258 = vmatprep.mubr.bf16.mxu0 0
        %2259 = vmatmul.mubr.bf16.gmra.mrb[0].mxu0 %v2156
        %v2260 = vpop.f32.mrb[0].mxu0
        %v2261 = vadd.f32 0.0, %v2260
        %v2262 = vpop.f32.mrb[0].mxu0
        %v2263 = vpop.f32.mrb[0].mxu0
        %v2264 = vadd.f32 0.0, %v2263
        %v2265 = vpop.f32.mrb[0].mxu0
        %2266 = vmatprep.mubr.bf16.mxu0 0
        %2267 = vmatmul.mubr.bf16.gmra.mrb[0].mxu0 %v2159
        %v2268 = vpop.f32.mrb[0].mxu0
        %v2269 = vadd.f32 0.0, %v2268
        %v2270 = vpop.f32.mrb[0].mxu0
        %v2271 = vpop.f32.mrb[0].mxu0
        %v2272 = vadd.f32 0.0, %v2271
        %v2273 = vpop.f32.mrb[0].mxu0
        %2274 = vmatprep.mubr.bf16.mxu0 0
        %2275 = vmatmul.mubr.bf16.gmra.mrb[0].mxu0 %v2162
        %v2276 = vpop.f32.mrb[0].mxu0
        %v2277 = vadd.f32 0.0, %v2276
        %v2278 = vpop.f32.mrb[0].mxu0
        %v2279 = vpop.f32.mrb[0].mxu0
        %v2280 = vadd.f32 0.0, %v2279
        %v2281 = vpop.f32.mrb[0].mxu0
        %2282 = vmatprep.mubr.bf16.mxu0 0
        %2283 = vmatmul.mubr.bf16.gmra.mrb[0].mxu0 %v2165
        %v2284 = vpop.f32.mrb[0].mxu0
        %v2285 = vadd.f32 0.0, %v2284
        %v2286 = vpop.f32.mrb[0].mxu0
        %v2287 = vpop.f32.mrb[0].mxu0
        %v2288 = vadd.f32 0.0, %v2287
        %v2289 = vpop.f32.mrb[0].mxu0
        %2290 = vmatprep.mubr.bf16.mxu0 0
        %2291 = vmatmul.mubr.bf16.gmra.mrb[0].mxu0 %v2168
        %v2292 = vpop.f32.mrb[0].mxu0
        %v2293 = vadd.f32 0.0, %v2292
        %v2294 = vpop.f32.mrb[0].mxu0
        %v2295 = vpop.f32.mrb[0].mxu0
        %v2296 = vadd.f32 0.0, %v2295
        %v2297 = vpop.f32.mrb[0].mxu0
        %2298 = vdwg.mxu0
        %v2299 = vadd.f32 %v2067, %v2205
        %v2300 = vadd.f32 %v2068, %v2208
        %v2301 = vadd.f32 %v2069, %v2213
        %v2302 = vadd.f32 %v2070, %v2216
        %v2303 = vadd.f32 %v2071, %v2221
        %v2304 = vadd.f32 %v2072, %v2224
        %v2305 = vadd.f32 %v2073, %v2229
        %v2306 = vadd.f32 %v2074, %v2232
        %v2307 = vadd.f32 %v2075, %v2237
        %v2308 = vadd.f32 %v2076, %v2240
        %v2309 = vadd.f32 %v2077, %v2245
        %v2310 = vadd.f32 %v2078, %v2248
        %v2311 = vadd.f32 %v2079, %v2253
        %v2312 = vadd.f32 %v2080, %v2256
        %v2313 = vadd.f32 %v2081, %v2261
        %v2314 = vadd.f32 %v2082, %v2264
        %v2315 = vadd.f32 %v2083, %v2269
        %v2316 = vadd.f32 %v2084, %v2272
        %v2317 = vadd.f32 %v2085, %v2277
        %v2318 = vadd.f32 %v2086, %v2280
        %v2319 = vadd.f32 %v2087, %v2285
        %v2320 = vadd.f32 %v2088, %v2288
        %v2321 = vadd.f32 %v2089, %v2293
        %v2322 = vadd.f32 %v2090, %v2296
        %2323 = vst.msk [vmem:[#allocation2] sm:$0xff] %vm275, %v2299
        %2324 = vst.msk [vmem:[#allocation2 + $0x8] sm:$0xff] %vm275, %v2300
        %2325 = vst.msk [vmem:[#allocation2 + $0x10] sm:$0xff] %vm275, %v2301
        %2326 = vst.msk [vmem:[#allocation2 + $0x18] sm:$0xff] %vm275, %v2302
        %2327 = vst.msk [vmem:[#allocation2 + $0x20] sm:$0xff] %vm275, %v2303
        %2328 = vst.msk [vmem:[#allocation2 + $0x28] sm:$0xff] %vm275, %v2304
        %2329 = vst.msk [vmem:[#allocation2 + $0x30] sm:$0xff] %vm275, %v2305
        %2330 = vst.msk [vmem:[#allocation2 + $0x38] sm:$0xff] %vm275, %v2306
        %2331 = vst.msk [vmem:[#allocation2 + $0x40] sm:$0xff] %vm275, %v2307
        %2332 = vst.msk [vmem:[#allocation2 + $0x48] sm:$0xff] %vm275, %v2308
        %2333 = vst.msk [vmem:[#allocation2 + $0x50] sm:$0xff] %vm275, %v2309
        %2334 = vst.msk [vmem:[#allocation2 + $0x58] sm:$0xff] %vm275, %v2310
        %2335 = vst.msk [vmem:[#allocation2 + $0x60] sm:$0xff] %vm275, %v2311
        %2336 = vst.msk [vmem:[#allocation2 + $0x68] sm:$0xff] %vm275, %v2312
        %2337 = vst.msk [vmem:[#allocation2 + $0x70] sm:$0xff] %vm275, %v2313
        %2338 = vst.msk [vmem:[#allocation2 + $0x78] sm:$0xff] %vm275, %v2314
        %2339 = vst.msk [vmem:[#allocation2 + $0x80] sm:$0xff] %vm275, %v2315
        %2340 = vst.msk [vmem:[#allocation2 + $0x88] sm:$0xff] %vm275, %v2316
        %2341 = vst.msk [vmem:[#allocation2 + $0x90] sm:$0xff] %vm275, %v2317
        %2342 = vst.msk [vmem:[#allocation2 + $0x98] sm:$0xff] %vm275, %v2318
        %2343 = vst.msk [vmem:[#allocation2 + $0xa0] sm:$0xff] %vm275, %v2319
        %2344 = vst.msk [vmem:[#allocation2 + $0xa8] sm:$0xff] %vm275, %v2320
        %2345 = vst.msk [vmem:[#allocation2 + $0xb0] sm:$0xff] %vm275, %v2321
        %2346 = vst.msk [vmem:[#allocation2 + $0xb8] sm:$0xff] %vm275, %v2322
        %v2347 = vld [vmem:[#allocation2] sm:$0xff]
        %v2348 = vld [vmem:[#allocation2 + $0x8] sm:$0xff]
        %v2349 = vld [vmem:[#allocation2 + $0x10] sm:$0xff]
        %v2350 = vld [vmem:[#allocation2 + $0x18] sm:$0xff]
        %v2351 = vld [vmem:[#allocation2 + $0x20] sm:$0xff]
        %v2352 = vld [vmem:[#allocation2 + $0x28] sm:$0xff]
        %v2353 = vld [vmem:[#allocation2 + $0x30] sm:$0xff]
        %v2354 = vld [vmem:[#allocation2 + $0x38] sm:$0xff]
        %v2355 = vld [vmem:[#allocation2 + $0x40] sm:$0xff]
        %v2356 = vld [vmem:[#allocation2 + $0x48] sm:$0xff]
        %v2357 = vld [vmem:[#allocation2 + $0x50] sm:$0xff]
        %v2358 = vld [vmem:[#allocation2 + $0x58] sm:$0xff]
        %v2359 = vld [vmem:[#allocation2 + $0x60] sm:$0xff]
        %v2360 = vld [vmem:[#allocation2 + $0x68] sm:$0xff]
        %v2361 = vld [vmem:[#allocation2 + $0x70] sm:$0xff]
        %v2362 = vld [vmem:[#allocation2 + $0x78] sm:$0xff]
        %v2363 = vld [vmem:[#allocation2 + $0x80] sm:$0xff]
        %v2364 = vld [vmem:[#allocation2 + $0x88] sm:$0xff]
        %v2365 = vld [vmem:[#allocation2 + $0x90] sm:$0xff]
        %v2366 = vld [vmem:[#allocation2 + $0x98] sm:$0xff]
        %v2367 = vld [vmem:[#allocation2 + $0xa0] sm:$0xff]
        %v2368 = vld [vmem:[#allocation2 + $0xa8] sm:$0xff]
        %v2369 = vld [vmem:[#allocation2 + $0xb0] sm:$0xff]
        %v2370 = vld [vmem:[#allocation2 + $0xb8] sm:$0xff]
        %s2371 = scalar_lea.vmem %s1, 80
        %v2372 = vld [vmem:[%s2371] sm:$0xf]
        %v2373 = vld [vmem:[%s2371 + $0x4] sm:$0xf]
        %v2374 = vld [vmem:[%s2371 + $0x8] sm:$0xf]
        %v2375 = vld [vmem:[%s2371 + $0xc] sm:$0xf]
        %v2376 = vrot.slane %v648, 1
        %v2377 = vrot.slane %v649, 1
        %v2378 = vsel %vm2096, %v2376, %v2377
        %v2379 = vrot.slane %v650, 1
        %v2380 = vsel %vm2096, %v2377, %v2379
        %v2381 = vrot.slane %v651, 1
        %v2382 = vsel %vm2096, %v2379, %v2381
        %v2383 = vrot.slane %v652, 1
        %v2384 = vsel %vm2096, %v2381, %v2383
        %v2385 = vrot.slane %v653, 1
        %v2386 = vsel %vm2096, %v2383, %v2385
        %v2387 = vrot.slane %v654, 1
        %v2388 = vsel %vm2096, %v2385, %v2387
        %v2389 = vrot.slane %v655, 1
        %v2390 = vsel %vm2096, %v2387, %v2389
        %v2391 = vrot.slane %v656, 1
        %v2392 = vsel %vm2096, %v2389, %v2391
        %v2393 = vrot.slane %v657, 1
        %v2394 = vsel %vm2096, %v2391, %v2393
        %v2395 = vrot.slane %v658, 1
        %v2396 = vsel %vm2096, %v2393, %v2395
        %v2397 = vrot.slane %v659, 1
        %v2398 = vsel %vm2096, %v2395, %v2397
        %v2399 = vrot.slane %v1494, 1
        %v2400 = vsel %vm2096, %v2397, %v2399
        %v2405 = vunpack.c.l.b16 %v2372
        %v2406 = vunpack.c.l.b16 %v2373
        %v2407 = vunpack.c.l.b16 %v2374
        %v2408 = vunpack.c.l.b16 %v2375
        %v2409 = vpack.c.b16 %v2406, %v2405
        %v2410 = vpack.c.b16 %v2408, %v2407
        %v2414 = vsel %vm275, %v2378, 0
        %v2417 = vsel %vm275, %v2380, 0
        %v2420 = vsel %vm275, %v2382, 0
        %v2423 = vsel %vm275, %v2384, 0
        %v2426 = vsel %vm275, %v2386, 0
        %v2429 = vsel %vm275, %v2388, 0
        %v2432 = vsel %vm275, %v2390, 0
        %v2435 = vsel %vm275, %v2392, 0
        %v2438 = vsel %vm275, %v2394, 0
        %v2441 = vsel %vm275, %v2396, 0
        %v2444 = vsel %vm275, %v2398, 0
        %v2447 = vsel %vm275, %v2400, 0
        %2449 = vmatprep.subr.bf16.mxu0 0
        %2450 = vmatpush1.bf16.msra.mxu0 %v2409
        %2451 = vmatprep.subr.bf16.mxu0 0
        %2452 = vmatpush1.bf16.msra.mxu0 %v2410
        %2453 = vmatprep.subr.bf16.mxu0 0
        %2454 = vmatpush1.bf16.msra.mxu0 0
        %2455 = vmatprep.subr.bf16.mxu0 0
        %2456 = vmatpush1.bf16.msra.mxu0 0
        %2457 = vmatprep.subr.bf16.mxu0 0
        %2458 = vmatpush1.bf16.msra.mxu0 0
        %2459 = vmatprep.subr.bf16.mxu0 0
        %2460 = vmatpush1.bf16.msra.mxu0 0
        %2461 = vmatprep.subr.bf16.mxu0 0
        %2462 = vmatpush1.bf16.msra.mxu0 0
        %2463 = vmatprep.subr.bf16.mxu0 0
        %2464 = vmatpush1.bf16.msra.mxu0 0
        %2465 = vmatprep.subr.bf16.mxu0 0
        %2466 = vmatpush1.bf16.msra.mxu0 0
        %2467 = vmatprep.subr.bf16.mxu0 0
        %2468 = vmatpush1.bf16.msra.mxu0 0
        %2469 = vmatprep.subr.bf16.mxu0 0
        %2470 = vmatpush1.bf16.msra.mxu0 0
        %2471 = vmatprep.subr.bf16.mxu0 0
        %2472 = vmatpush1.bf16.msra.mxu0 0
        %2473 = vmatprep.subr.bf16.mxu0 0
        %2474 = vmatpush1.bf16.msra.mxu0 0
        %2475 = vmatprep.subr.bf16.mxu0 0
        %2476 = vmatpush1.bf16.msra.mxu0 0
        %2477 = vmatprep.subr.bf16.mxu0 0
        %2478 = vmatpush1.bf16.msra.mxu0 0
        %2479 = vmatprep.subr.bf16.mxu0 0
        %2480 = vmatpush1.bf16.msra.mxu0 0
        %2481 = vmatprep.mubr.bf16.mxu0 0
        %2482 = vmatmul.mubr.bf16.gmra.mrb[0].mxu0 %v2414
        %v2483 = vpop.f32.mrb[0].mxu0
        %v2484 = vadd.f32 0.0, %v2483
        %v2485 = vpop.f32.mrb[0].mxu0
        %v2486 = vpop.f32.mrb[0].mxu0
        %v2487 = vadd.f32 0.0, %v2486
        %v2488 = vpop.f32.mrb[0].mxu0
        %2489 = vmatprep.mubr.bf16.mxu0 0
        %2490 = vmatmul.mubr.bf16.gmra.mrb[0].mxu0 %v2417
        %v2491 = vpop.f32.mrb[0].mxu0
        %v2492 = vadd.f32 0.0, %v2491
        %v2493 = vpop.f32.mrb[0].mxu0
        %v2494 = vpop.f32.mrb[0].mxu0
        %v2495 = vadd.f32 0.0, %v2494
        %v2496 = vpop.f32.mrb[0].mxu0
        %2497 = vmatprep.mubr.bf16.mxu0 0
        %2498 = vmatmul.mubr.bf16.gmra.mrb[0].mxu0 %v2420
        %v2499 = vpop.f32.mrb[0].mxu0
        %v2500 = vadd.f32 0.0, %v2499
        %v2501 = vpop.f32.mrb[0].mxu0
        %v2502 = vpop.f32.mrb[0].mxu0
        %v2503 = vadd.f32 0.0, %v2502
        %v2504 = vpop.f32.mrb[0].mxu0
        %2505 = vmatprep.mubr.bf16.mxu0 0
        %2506 = vmatmul.mubr.bf16.gmra.mrb[0].mxu0 %v2423
        %v2507 = vpop.f32.mrb[0].mxu0
        %v2508 = vadd.f32 0.0, %v2507
        %v2509 = vpop.f32.mrb[0].mxu0
        %v2510 = vpop.f32.mrb[0].mxu0
        %v2511 = vadd.f32 0.0, %v2510
        %v2512 = vpop.f32.mrb[0].mxu0
        %2513 = vmatprep.mubr.bf16.mxu0 0
        %2514 = vmatmul.mubr.bf16.gmra.mrb[0].mxu0 %v2426
        %v2515 = vpop.f32.mrb[0].mxu0
        %v2516 = vadd.f32 0.0, %v2515
        %v2517 = vpop.f32.mrb[0].mxu0
        %v2518 = vpop.f32.mrb[0].mxu0
        %v2519 = vadd.f32 0.0, %v2518
        %v2520 = vpop.f32.mrb[0].mxu0
        %2521 = vmatprep.mubr.bf16.mxu0 0
        %2522 = vmatmul.mubr.bf16.gmra.mrb[0].mxu0 %v2429
        %v2523 = vpop.f32.mrb[0].mxu0
        %v2524 = vadd.f32 0.0, %v2523
        %v2525 = vpop.f32.mrb[0].mxu0
        %v2526 = vpop.f32.mrb[0].mxu0
        %v2527 = vadd.f32 0.0, %v2526
        %v2528 = vpop.f32.mrb[0].mxu0
        %2529 = vmatprep.mubr.bf16.mxu0 0
        %2530 = vmatmul.mubr.bf16.gmra.mrb[0].mxu0 %v2432
        %v2531 = vpop.f32.mrb[0].mxu0
        %v2532 = vadd.f32 0.0, %v2531
        %v2533 = vpop.f32.mrb[0].mxu0
        %v2534 = vpop.f32.mrb[0].mxu0
        %v2535 = vadd.f32 0.0, %v2534
        %v2536 = vpop.f32.mrb[0].mxu0
        %2537 = vmatprep.mubr.bf16.mxu0 0
        %2538 = vmatmul.mubr.bf16.gmra.mrb[0].mxu0 %v2435
        %v2539 = vpop.f32.mrb[0].mxu0
        %v2540 = vadd.f32 0.0, %v2539
        %v2541 = vpop.f32.mrb[0].mxu0
        %v2542 = vpop.f32.mrb[0].mxu0
        %v2543 = vadd.f32 0.0, %v2542
        %v2544 = vpop.f32.mrb[0].mxu0
        %2545 = vmatprep.mubr.bf16.mxu0 0
        %2546 = vmatmul.mubr.bf16.gmra.mrb[0].mxu0 %v2438
        %v2547 = vpop.f32.mrb[0].mxu0
        %v2548 = vadd.f32 0.0, %v2547
        %v2549 = vpop.f32.mrb[0].mxu0
        %v2550 = vpop.f32.mrb[0].mxu0
        %v2551 = vadd.f32 0.0, %v2550
        %v2552 = vpop.f32.mrb[0].mxu0
        %2553 = vmatprep.mubr.bf16.mxu0 0
        %2554 = vmatmul.mubr.bf16.gmra.mrb[0].mxu0 %v2441
        %v2555 = vpop.f32.mrb[0].mxu0
        %v2556 = vadd.f32 0.0, %v2555
        %v2557 = vpop.f32.mrb[0].mxu0
        %v2558 = vpop.f32.mrb[0].mxu0
        %v2559 = vadd.f32 0.0, %v2558
        %v2560 = vpop.f32.mrb[0].mxu0
        %2561 = vmatprep.mubr.bf16.mxu0 0
        %2562 = vmatmul.mubr.bf16.gmra.mrb[0].mxu0 %v2444
        %v2563 = vpop.f32.mrb[0].mxu0
        %v2564 = vadd.f32 0.0, %v2563
        %v2565 = vpop.f32.mrb[0].mxu0
        %v2566 = vpop.f32.mrb[0].mxu0
        %v2567 = vadd.f32 0.0, %v2566
        %v2568 = vpop.f32.mrb[0].mxu0
        %2569 = vmatprep.mubr.bf16.mxu0 0
        %2570 = vmatmul.mubr.bf16.gmra.mrb[0].mxu0 %v2447
        %v2571 = vpop.f32.mrb[0].mxu0
        %v2572 = vadd.f32 0.0, %v2571
        %v2573 = vpop.f32.mrb[0].mxu0
        %v2574 = vpop.f32.mrb[0].mxu0
        %v2575 = vadd.f32 0.0, %v2574
        %v2576 = vpop.f32.mrb[0].mxu0
        %2577 = vdwg.mxu0
        %v2578 = vadd.f32 %v2347, %v2484
        %v2579 = vadd.f32 %v2348, %v2487
        %v2580 = vadd.f32 %v2349, %v2492
        %v2581 = vadd.f32 %v2350, %v2495
        %v2582 = vadd.f32 %v2351, %v2500
        %v2583 = vadd.f32 %v2352, %v2503
        %v2584 = vadd.f32 %v2353, %v2508
        %v2585 = vadd.f32 %v2354, %v2511
        %v2586 = vadd.f32 %v2355, %v2516
        %v2587 = vadd.f32 %v2356, %v2519
        %v2588 = vadd.f32 %v2357, %v2524
        %v2589 = vadd.f32 %v2358, %v2527
        %v2590 = vadd.f32 %v2359, %v2532
        %v2591 = vadd.f32 %v2360, %v2535
        %v2592 = vadd.f32 %v2361, %v2540
        %v2593 = vadd.f32 %v2362, %v2543
        %v2594 = vadd.f32 %v2363, %v2548
        %v2595 = vadd.f32 %v2364, %v2551
        %v2596 = vadd.f32 %v2365, %v2556
        %v2597 = vadd.f32 %v2366, %v2559
        %v2598 = vadd.f32 %v2367, %v2564
        %v2599 = vadd.f32 %v2368, %v2567
        %v2600 = vadd.f32 %v2369, %v2572
        %v2601 = vadd.f32 %v2370, %v2575
        %2602 = vst.msk [vmem:[#allocation2] sm:$0xff] %vm275, %v2578
        %2603 = vst.msk [vmem:[#allocation2 + $0x8] sm:$0xff] %vm275, %v2579
        %2604 = vst.msk [vmem:[#allocation2 + $0x10] sm:$0xff] %vm275, %v2580
        %2605 = vst.msk [vmem:[#allocation2 + $0x18] sm:$0xff] %vm275, %v2581
        %2606 = vst.msk [vmem:[#allocation2 + $0x20] sm:$0xff] %vm275, %v2582
        %2607 = vst.msk [vmem:[#allocation2 + $0x28] sm:$0xff] %vm275, %v2583
        %2608 = vst.msk [vmem:[#allocation2 + $0x30] sm:$0xff] %vm275, %v2584
        %2609 = vst.msk [vmem:[#allocation2 + $0x38] sm:$0xff] %vm275, %v2585
        %2610 = vst.msk [vmem:[#allocation2 + $0x40] sm:$0xff] %vm275, %v2586
        %2611 = vst.msk [vmem:[#allocation2 + $0x48] sm:$0xff] %vm275, %v2587
        %2612 = vst.msk [vmem:[#allocation2 + $0x50] sm:$0xff] %vm275, %v2588
        %2613 = vst.msk [vmem:[#allocation2 + $0x58] sm:$0xff] %vm275, %v2589
        %2614 = vst.msk [vmem:[#allocation2 + $0x60] sm:$0xff] %vm275, %v2590
        %2615 = vst.msk [vmem:[#allocation2 + $0x68] sm:$0xff] %vm275, %v2591
        %2616 = vst.msk [vmem:[#allocation2 + $0x70] sm:$0xff] %vm275, %v2592
        %2617 = vst.msk [vmem:[#allocation2 + $0x78] sm:$0xff] %vm275, %v2593
        %2618 = vst.msk [vmem:[#allocation2 + $0x80] sm:$0xff] %vm275, %v2594
        %2619 = vst.msk [vmem:[#allocation2 + $0x88] sm:$0xff] %vm275, %v2595
        %2620 = vst.msk [vmem:[#allocation2 + $0x90] sm:$0xff] %vm275, %v2596
        %2621 = vst.msk [vmem:[#allocation2 + $0x98] sm:$0xff] %vm275, %v2597
        %2622 = vst.msk [vmem:[#allocation2 + $0xa0] sm:$0xff] %vm275, %v2598
        %2623 = vst.msk [vmem:[#allocation2 + $0xa8] sm:$0xff] %vm275, %v2599
        %2624 = vst.msk [vmem:[#allocation2 + $0xb0] sm:$0xff] %vm275, %v2600
        %2625 = vst.msk [vmem:[#allocation2 + $0xb8] sm:$0xff] %vm275, %v2601
        %v2626 = vld [vmem:[#allocation2] sm:$0xff]
        %v2627 = vld [vmem:[#allocation2 + $0x8] sm:$0xff]
        %v2628 = vld [vmem:[#allocation2 + $0x10] sm:$0xff]
        %v2629 = vld [vmem:[#allocation2 + $0x18] sm:$0xff]
        %v2630 = vld [vmem:[#allocation2 + $0x20] sm:$0xff]
        %v2631 = vld [vmem:[#allocation2 + $0x28] sm:$0xff]
        %v2632 = vld [vmem:[#allocation2 + $0x30] sm:$0xff]
        %v2633 = vld [vmem:[#allocation2 + $0x38] sm:$0xff]
        %v2634 = vld [vmem:[#allocation2 + $0x40] sm:$0xff]
        %v2635 = vld [vmem:[#allocation2 + $0x48] sm:$0xff]
        %v2636 = vld [vmem:[#allocation2 + $0x50] sm:$0xff]
        %v2637 = vld [vmem:[#allocation2 + $0x58] sm:$0xff]
        %v2638 = vld [vmem:[#allocation2 + $0x60] sm:$0xff]
        %v2639 = vld [vmem:[#allocation2 + $0x68] sm:$0xff]
        %v2640 = vld [vmem:[#allocation2 + $0x70] sm:$0xff]
        %v2641 = vld [vmem:[#allocation2 + $0x78] sm:$0xff]
        %v2642 = vld [vmem:[#allocation2 + $0x80] sm:$0xff]
        %v2643 = vld [vmem:[#allocation2 + $0x88] sm:$0xff]
        %v2644 = vld [vmem:[#allocation2 + $0x90] sm:$0xff]
        %v2645 = vld [vmem:[#allocation2 + $0x98] sm:$0xff]
        %v2646 = vld [vmem:[#allocation2 + $0xa0] sm:$0xff]
        %v2647 = vld [vmem:[#allocation2 + $0xa8] sm:$0xff]
        %v2648 = vld [vmem:[#allocation2 + $0xb0] sm:$0xff]
        %v2649 = vld [vmem:[#allocation2 + $0xb8] sm:$0xff]
        %s2650 = scalar_lea.vmem %s1, 128
        %v2651 = vld [vmem:[%s2650] sm:$0xf]
        %v2652 = vld [vmem:[%s2650 + $0x4] sm:$0xf]
        %v2653 = vld [vmem:[%s2650 + $0x8] sm:$0xf]
        %v2654 = vld [vmem:[%s2650 + $0xc] sm:$0xf]
        %v2655 = vrot.slane %v920, 1
        %v2656 = vsel %vm2096, %v2118, %v2655
        %v2657 = vrot.slane %v921, 1
        %v2658 = vsel %vm2096, %v2655, %v2657
        %v2659 = vrot.slane %v922, 1
        %v2660 = vsel %vm2096, %v2657, %v2659
        %v2661 = vrot.slane %v1839, 1
        %v2662 = vsel %vm2096, %v2659, %v2661
        %v2667 = vunpack.c.l.b16 %v2651
        %v2668 = vunpack.c.l.b16 %v2652
        %v2669 = vunpack.c.l.b16 %v2653
        %v2670 = vunpack.c.l.b16 %v2654
        %v2671 = vpack.c.b16 %v2668, %v2667
        %v2672 = vpack.c.b16 %v2670, %v2669
        %v2676 = vsel %vm275, %v2656, 0
        %v2679 = vsel %vm275, %v2658, 0
        %v2682 = vsel %vm275, %v2660, 0
        %v2685 = vsel %vm275, %v2662, 0
        %2687 = vmatprep.subr.bf16.mxu0 0
        %2688 = vmatpush1.bf16.msra.mxu0 %v2671
        %2689 = vmatprep.subr.bf16.mxu0 0
        %2690 = vmatpush1.bf16.msra.mxu0 %v2672
        %2691 = vmatprep.subr.bf16.mxu0 0
        %2692 = vmatpush1.bf16.msra.mxu0 0
        %2693 = vmatprep.subr.bf16.mxu0 0
        %2694 = vmatpush1.bf16.msra.mxu0 0
        %2695 = vmatprep.subr.bf16.mxu0 0
        %2696 = vmatpush1.bf16.msra.mxu0 0
        %2697 = vmatprep.subr.bf16.mxu0 0
        %2698 = vmatpush1.bf16.msra.mxu0 0
        %2699 = vmatprep.subr.bf16.mxu0 0
        %2700 = vmatpush1.bf16.msra.mxu0 0
        %2701 = vmatprep.subr.bf16.mxu0 0
        %2702 = vmatpush1.bf16.msra.mxu0 0
        %2703 = vmatprep.subr.bf16.mxu0 0
        %2704 = vmatpush1.bf16.msra.mxu0 0
        %2705 = vmatprep.subr.bf16.mxu0 0
        %2706 = vmatpush1.bf16.msra.mxu0 0
        %2707 = vmatprep.subr.bf16.mxu0 0
        %2708 = vmatpush1.bf16.msra.mxu0 0
        %2709 = vmatprep.subr.bf16.mxu0 0
        %2710 = vmatpush1.bf16.msra.mxu0 0
        %2711 = vmatprep.subr.bf16.mxu0 0
        %2712 = vmatpush1.bf16.msra.mxu0 0
        %2713 = vmatprep.subr.bf16.mxu0 0
        %2714 = vmatpush1.bf16.msra.mxu0 0
        %2715 = vmatprep.subr.bf16.mxu0 0
        %2716 = vmatpush1.bf16.msra.mxu0 0
        %2717 = vmatprep.subr.bf16.mxu0 0
        %2718 = vmatpush1.bf16.msra.mxu0 0
        %2719 = vmatprep.mubr.bf16.mxu0 0
        %2720 = vmatmul.mubr.bf16.gmra.mrb[0].mxu0 %v2144
        %v2721 = vpop.f32.mrb[0].mxu0
        %v2722 = vadd.f32 0.0, %v2721
        %v2723 = vpop.f32.mrb[0].mxu0
        %v2724 = vpop.f32.mrb[0].mxu0
        %v2725 = vadd.f32 0.0, %v2724
        %v2726 = vpop.f32.mrb[0].mxu0
        %2727 = vmatprep.mubr.bf16.mxu0 0
        %2728 = vmatmul.mubr.bf16.gmra.mrb[0].mxu0 %v2147
        %v2729 = vpop.f32.mrb[0].mxu0
        %v2730 = vadd.f32 0.0, %v2729
        %v2731 = vpop.f32.mrb[0].mxu0
        %v2732 = vpop.f32.mrb[0].mxu0
        %v2733 = vadd.f32 0.0, %v2732
        %v2734 = vpop.f32.mrb[0].mxu0
        %2735 = vmatprep.mubr.bf16.mxu0 0
        %2736 = vmatmul.mubr.bf16.gmra.mrb[0].mxu0 %v2150
        %v2737 = vpop.f32.mrb[0].mxu0
        %v2738 = vadd.f32 0.0, %v2737
        %v2739 = vpop.f32.mrb[0].mxu0
        %v2740 = vpop.f32.mrb[0].mxu0
        %v2741 = vadd.f32 0.0, %v2740
        %v2742 = vpop.f32.mrb[0].mxu0
        %2743 = vmatprep.mubr.bf16.mxu0 0
        %2744 = vmatmul.mubr.bf16.gmra.mrb[0].mxu0 %v2153
        %v2745 = vpop.f32.mrb[0].mxu0
        %v2746 = vadd.f32 0.0, %v2745
        %v2747 = vpop.f32.mrb[0].mxu0
        %v2748 = vpop.f32.mrb[0].mxu0
        %v2749 = vadd.f32 0.0, %v2748
        %v2750 = vpop.f32.mrb[0].mxu0
        %2751 = vmatprep.mubr.bf16.mxu0 0
        %2752 = vmatmul.mubr.bf16.gmra.mrb[0].mxu0 %v2156
        %v2753 = vpop.f32.mrb[0].mxu0
        %v2754 = vadd.f32 0.0, %v2753
        %v2755 = vpop.f32.mrb[0].mxu0
        %v2756 = vpop.f32.mrb[0].mxu0
        %v2757 = vadd.f32 0.0, %v2756
        %v2758 = vpop.f32.mrb[0].mxu0
        %2759 = vmatprep.mubr.bf16.mxu0 0
        %2760 = vmatmul.mubr.bf16.gmra.mrb[0].mxu0 %v2159
        %v2761 = vpop.f32.mrb[0].mxu0
        %v2762 = vadd.f32 0.0, %v2761
        %v2763 = vpop.f32.mrb[0].mxu0
        %v2764 = vpop.f32.mrb[0].mxu0
        %v2765 = vadd.f32 0.0, %v2764
        %v2766 = vpop.f32.mrb[0].mxu0
        %2767 = vmatprep.mubr.bf16.mxu0 0
        %2768 = vmatmul.mubr.bf16.gmra.mrb[0].mxu0 %v2162
        %v2769 = vpop.f32.mrb[0].mxu0
        %v2770 = vadd.f32 0.0, %v2769
        %v2771 = vpop.f32.mrb[0].mxu0
        %v2772 = vpop.f32.mrb[0].mxu0
        %v2773 = vadd.f32 0.0, %v2772
        %v2774 = vpop.f32.mrb[0].mxu0
        %2775 = vmatprep.mubr.bf16.mxu0 0
        %2776 = vmatmul.mubr.bf16.gmra.mrb[0].mxu0 %v2165
        %v2777 = vpop.f32.mrb[0].mxu0
        %v2778 = vadd.f32 0.0, %v2777
        %v2779 = vpop.f32.mrb[0].mxu0
        %v2780 = vpop.f32.mrb[0].mxu0
        %v2781 = vadd.f32 0.0, %v2780
        %v2782 = vpop.f32.mrb[0].mxu0
        %2783 = vmatprep.mubr.bf16.mxu0 0
        %2784 = vmatmul.mubr.bf16.gmra.mrb[0].mxu0 %v2676
        %v2785 = vpop.f32.mrb[0].mxu0
        %v2786 = vadd.f32 0.0, %v2785
        %v2787 = vpop.f32.mrb[0].mxu0
        %v2788 = vpop.f32.mrb[0].mxu0
        %v2789 = vadd.f32 0.0, %v2788
        %v2790 = vpop.f32.mrb[0].mxu0
        %2791 = vmatprep.mubr.bf16.mxu0 0
        %2792 = vmatmul.mubr.bf16.gmra.mrb[0].mxu0 %v2679
        %v2793 = vpop.f32.mrb[0].mxu0
        %v2794 = vadd.f32 0.0, %v2793
        %v2795 = vpop.f32.mrb[0].mxu0
        %v2796 = vpop.f32.mrb[0].mxu0
        %v2797 = vadd.f32 0.0, %v2796
        %v2798 = vpop.f32.mrb[0].mxu0
        %2799 = vmatprep.mubr.bf16.mxu0 0
        %2800 = vmatmul.mubr.bf16.gmra.mrb[0].mxu0 %v2682
        %v2801 = vpop.f32.mrb[0].mxu0
        %v2802 = vadd.f32 0.0, %v2801
        %v2803 = vpop.f32.mrb[0].mxu0
        %v2804 = vpop.f32.mrb[0].mxu0
        %v2805 = vadd.f32 0.0, %v2804
        %v2806 = vpop.f32.mrb[0].mxu0
        %2807 = vmatprep.mubr.bf16.mxu0 0
        %2808 = vmatmul.mubr.bf16.gmra.mrb[0].mxu0 %v2685
        %v2809 = vpop.f32.mrb[0].mxu0
        %v2810 = vadd.f32 0.0, %v2809
        %v2811 = vpop.f32.mrb[0].mxu0
        %v2812 = vpop.f32.mrb[0].mxu0
        %v2813 = vadd.f32 0.0, %v2812
        %v2814 = vpop.f32.mrb[0].mxu0
        %2815 = vdwg.mxu0
        %v2816 = vadd.f32 %v2626, %v2722
        %v2817 = vadd.f32 %v2627, %v2725
        %v2818 = vadd.f32 %v2628, %v2730
        %v2819 = vadd.f32 %v2629, %v2733
        %v2820 = vadd.f32 %v2630, %v2738
        %v2821 = vadd.f32 %v2631, %v2741
        %v2822 = vadd.f32 %v2632, %v2746
        %v2823 = vadd.f32 %v2633, %v2749
        %v2824 = vadd.f32 %v2634, %v2754
        %v2825 = vadd.f32 %v2635, %v2757
        %v2826 = vadd.f32 %v2636, %v2762
        %v2827 = vadd.f32 %v2637, %v2765
        %v2828 = vadd.f32 %v2638, %v2770
        %v2829 = vadd.f32 %v2639, %v2773
        %v2830 = vadd.f32 %v2640, %v2778
        %v2831 = vadd.f32 %v2641, %v2781
        %v2832 = vadd.f32 %v2642, %v2786
        %v2833 = vadd.f32 %v2643, %v2789
        %v2834 = vadd.f32 %v2644, %v2794
        %v2835 = vadd.f32 %v2645, %v2797
        %v2836 = vadd.f32 %v2646, %v2802
        %v2837 = vadd.f32 %v2647, %v2805
        %v2838 = vadd.f32 %v2648, %v2810
        %v2839 = vadd.f32 %v2649, %v2813
        %2840 = vst.msk [vmem:[#allocation2] sm:$0xff] %vm275, %v2816
        %2841 = vst.msk [vmem:[#allocation2 + $0x8] sm:$0xff] %vm275, %v2817
        %2842 = vst.msk [vmem:[#allocation2 + $0x10] sm:$0xff] %vm275, %v2818
        %2843 = vst.msk [vmem:[#allocation2 + $0x18] sm:$0xff] %vm275, %v2819
        %2844 = vst.msk [vmem:[#allocation2 + $0x20] sm:$0xff] %vm275, %v2820
        %2845 = vst.msk [vmem:[#allocation2 + $0x28] sm:$0xff] %vm275, %v2821
        %2846 = vst.msk [vmem:[#allocation2 + $0x30] sm:$0xff] %vm275, %v2822
        %2847 = vst.msk [vmem:[#allocation2 + $0x38] sm:$0xff] %vm275, %v2823
        %2848 = vst.msk [vmem:[#allocation2 + $0x40] sm:$0xff] %vm275, %v2824
        %2849 = vst.msk [vmem:[#allocation2 + $0x48] sm:$0xff] %vm275, %v2825
        %2850 = vst.msk [vmem:[#allocation2 + $0x50] sm:$0xff] %vm275, %v2826
        %2851 = vst.msk [vmem:[#allocation2 + $0x58] sm:$0xff] %vm275, %v2827
        %2852 = vst.msk [vmem:[#allocation2 + $0x60] sm:$0xff] %vm275, %v2828
        %2853 = vst.msk [vmem:[#allocation2 + $0x68] sm:$0xff] %vm275, %v2829
        %2854 = vst.msk [vmem:[#allocation2 + $0x70] sm:$0xff] %vm275, %v2830
        %2855 = vst.msk [vmem:[#allocation2 + $0x78] sm:$0xff] %vm275, %v2831
        %2856 = vst.msk [vmem:[#allocation2 + $0x80] sm:$0xff] %vm275, %v2832
        %2857 = vst.msk [vmem:[#allocation2 + $0x88] sm:$0xff] %vm275, %v2833
        %2858 = vst.msk [vmem:[#allocation2 + $0x90] sm:$0xff] %vm275, %v2834
        %2859 = vst.msk [vmem:[#allocation2 + $0x98] sm:$0xff] %vm275, %v2835
        %2860 = vst.msk [vmem:[#allocation2 + $0xa0] sm:$0xff] %vm275, %v2836
        %2861 = vst.msk [vmem:[#allocation2 + $0xa8] sm:$0xff] %vm275, %v2837
        %2862 = vst.msk [vmem:[#allocation2 + $0xb0] sm:$0xff] %vm275, %v2838
        %2863 = vst.msk [vmem:[#allocation2 + $0xb8] sm:$0xff] %vm275, %v2839
        %v2864 = vld [vmem:[#allocation2] sm:$0xff]
        %v2865 = vld [vmem:[#allocation2 + $0x8] sm:$0xff]
        %v2866 = vld [vmem:[#allocation2 + $0x10] sm:$0xff]
        %v2867 = vld [vmem:[#allocation2 + $0x18] sm:$0xff]
        %v2868 = vld [vmem:[#allocation2 + $0x20] sm:$0xff]
        %v2869 = vld [vmem:[#allocation2 + $0x28] sm:$0xff]
        %v2870 = vld [vmem:[#allocation2 + $0x30] sm:$0xff]
        %v2871 = vld [vmem:[#allocation2 + $0x38] sm:$0xff]
        %v2872 = vld [vmem:[#allocation2 + $0x40] sm:$0xff]
        %v2873 = vld [vmem:[#allocation2 + $0x48] sm:$0xff]
        %v2874 = vld [vmem:[#allocation2 + $0x50] sm:$0xff]
        %v2875 = vld [vmem:[#allocation2 + $0x58] sm:$0xff]
        %v2876 = vld [vmem:[#allocation2 + $0x60] sm:$0xff]
        %v2877 = vld [vmem:[#allocation2 + $0x68] sm:$0xff]
        %v2878 = vld [vmem:[#allocation2 + $0x70] sm:$0xff]
        %v2879 = vld [vmem:[#allocation2 + $0x78] sm:$0xff]
        %v2880 = vld [vmem:[#allocation2 + $0x80] sm:$0xff]
        %v2881 = vld [vmem:[#allocation2 + $0x88] sm:$0xff]
        %v2882 = vld [vmem:[#allocation2 + $0x90] sm:$0xff]
        %v2883 = vld [vmem:[#allocation2 + $0x98] sm:$0xff]
        %v2884 = vld [vmem:[#allocation2 + $0xa0] sm:$0xff]
        %v2885 = vld [vmem:[#allocation2 + $0xa8] sm:$0xff]
        %v2886 = vld [vmem:[#allocation2 + $0xb0] sm:$0xff]
        %v2887 = vld [vmem:[#allocation2 + $0xb8] sm:$0xff]
        %v2888 = vld [vmem:[%s2] sm:$0x1]
        %v2890 = vlaneseq
        %v2891 = vshrl.u32 %v2890, 7
        %v2892 = vsub.s32 0, %v2891
        %v2893 = vrot.slane %v2888, %v2892
        %v2895 = vadd.f32 %v2864, %v2893
        %v2896 = vadd.f32 %v2865, %v2893
        %v2897 = vadd.f32 %v2866, %v2893
        %v2898 = vadd.f32 %v2867, %v2893
        %v2899 = vadd.f32 %v2868, %v2893
        %v2900 = vadd.f32 %v2869, %v2893
        %v2901 = vadd.f32 %v2870, %v2893
        %v2902 = vadd.f32 %v2871, %v2893
        %v2903 = vadd.f32 %v2872, %v2893
        %v2904 = vadd.f32 %v2873, %v2893
        %v2905 = vadd.f32 %v2874, %v2893
        %v2906 = vadd.f32 %v2875, %v2893
        %v2907 = vadd.f32 %v2876, %v2893
        %v2908 = vadd.f32 %v2877, %v2893
        %v2909 = vadd.f32 %v2878, %v2893
        %v2910 = vadd.f32 %v2879, %v2893
        %v2911 = vadd.f32 %v2880, %v2893
        %v2912 = vadd.f32 %v2881, %v2893
        %v2913 = vadd.f32 %v2882, %v2893
        %v2914 = vadd.f32 %v2883, %v2893
        %v2915 = vadd.f32 %v2884, %v2893
        %v2916 = vadd.f32 %v2885, %v2893
        %v2917 = vadd.f32 %v2886, %v2893
        %v2918 = vadd.f32 %v2887, %v2893
        %v2919 = vmax.f32 %v2895, 0.0
        %v2920 = vmax.f32 %v2896, 0.0
        %v2921 = vmax.f32 %v2897, 0.0
        %v2922 = vmax.f32 %v2898, 0.0
        %v2923 = vmax.f32 %v2899, 0.0
        %v2924 = vmax.f32 %v2900, 0.0
        %v2925 = vmax.f32 %v2901, 0.0
        %v2926 = vmax.f32 %v2902, 0.0
        %v2927 = vmax.f32 %v2903, 0.0
        %v2928 = vmax.f32 %v2904, 0.0
        %v2929 = vmax.f32 %v2905, 0.0
        %v2930 = vmax.f32 %v2906, 0.0
        %v2931 = vmax.f32 %v2907, 0.0
        %v2932 = vmax.f32 %v2908, 0.0
        %v2933 = vmax.f32 %v2909, 0.0
        %v2934 = vmax.f32 %v2910, 0.0
        %v2935 = vmax.f32 %v2911, 0.0
        %v2936 = vmax.f32 %v2912, 0.0
        %v2937 = vmax.f32 %v2913, 0.0
        %v2938 = vmax.f32 %v2914, 0.0
        %v2939 = vmax.f32 %v2915, 0.0
        %v2940 = vmax.f32 %v2916, 0.0
        %v2941 = vmax.f32 %v2917, 0.0
        %v2942 = vmax.f32 %v2918, 0.0
        %v2943 = vpack.c.bf16 %v2920, %v2919
        %v2944 = vpack.c.bf16 %v2922, %v2921
        %v2945 = vpack.c.bf16 %v2924, %v2923
        %v2946 = vpack.c.bf16 %v2926, %v2925
        %v2947 = vpack.c.bf16 %v2928, %v2927
        %v2948 = vpack.c.bf16 %v2930, %v2929
        %v2949 = vpack.c.bf16 %v2932, %v2931
        %v2950 = vpack.c.bf16 %v2934, %v2933
        %v2951 = vpack.c.bf16 %v2936, %v2935
        %v2952 = vpack.c.bf16 %v2938, %v2937
        %v2953 = vpack.c.bf16 %v2940, %v2939
        %v2954 = vpack.c.bf16 %v2942, %v2941
        %v2955 = vld [vmem:[%s3] sm:$0xf]
        %v2956 = vld [vmem:[%s3 + $0x4] sm:$0xf]
        %v2957 = vld [vmem:[%s3 + $0x8] sm:$0xf]
        %v2958 = vld [vmem:[%s3 + $0xc] sm:$0xf]
        %v2959 = vld [vmem:[%s4] sm:$0x1]
        %v2961 = vlaneseq
        %v2962 = vshrl.u32 %v2961, 7
        %v2963 = vsub.s32 0, %v2962
        %v2964 = vrot.slane %v2959, %v2963
        %v2970 = vunpack.c.l.b16 %v2955
        %v2971 = vunpack.c.l.b16 %v2956
        %v2972 = vunpack.c.l.b16 %v2957
        %v2973 = vunpack.c.l.b16 %v2958
        %v2974 = vpack.c.b16 %v2971, %v2970
        %v2975 = vpack.c.b16 %v2973, %v2972
        %v2979 = vsel %vm275, %v2943, 0
        %v2982 = vsel %vm275, %v2944, 0
        %v2985 = vsel %vm275, %v2945, 0
        %v2988 = vsel %vm275, %v2946, 0
        %v2991 = vsel %vm275, %v2947, 0
        %v2994 = vsel %vm275, %v2948, 0
        %v2997 = vsel %vm275, %v2949, 0
        %v3000 = vsel %vm275, %v2950, 0
        %v3003 = vsel %vm275, %v2951, 0
        %v3006 = vsel %vm275, %v2952, 0
        %v3009 = vsel %vm275, %v2953, 0
        %v3012 = vsel %vm275, %v2954, 0
        %3014 = vmatprep.subr.bf16.mxu0 0
        %3015 = vmatpush1.bf16.msra.mxu0 %v2974
        %3016 = vmatprep.subr.bf16.mxu0 0
        %3017 = vmatpush1.bf16.msra.mxu0 %v2975
        %3018 = vmatprep.subr.bf16.mxu0 0
        %3019 = vmatpush1.bf16.msra.mxu0 0
        %3020 = vmatprep.subr.bf16.mxu0 0
        %3021 = vmatpush1.bf16.msra.mxu0 0
        %3022 = vmatprep.subr.bf16.mxu0 0
        %3023 = vmatpush1.bf16.msra.mxu0 0
        %3024 = vmatprep.subr.bf16.mxu0 0
        %3025 = vmatpush1.bf16.msra.mxu0 0
        %3026 = vmatprep.subr.bf16.mxu0 0
        %3027 = vmatpush1.bf16.msra.mxu0 0
        %3028 = vmatprep.subr.bf16.mxu0 0
        %3029 = vmatpush1.bf16.msra.mxu0 0
        %3030 = vmatprep.subr.bf16.mxu0 0
        %3031 = vmatpush1.bf16.msra.mxu0 0
        %3032 = vmatprep.subr.bf16.mxu0 0
        %3033 = vmatpush1.bf16.msra.mxu0 0
        %3034 = vmatprep.subr.bf16.mxu0 0
        %3035 = vmatpush1.bf16.msra.mxu0 0
        %3036 = vmatprep.subr.bf16.mxu0 0
        %3037 = vmatpush1.bf16.msra.mxu0 0
        %3038 = vmatprep.subr.bf16.mxu0 0
        %3039 = vmatpush1.bf16.msra.mxu0 0
        %3040 = vmatprep.subr.bf16.mxu0 0
        %3041 = vmatpush1.bf16.msra.mxu0 0
        %3042 = vmatprep.subr.bf16.mxu0 0
        %3043 = vmatpush1.bf16.msra.mxu0 0
        %3044 = vmatprep.subr.bf16.mxu0 0
        %3045 = vmatpush1.bf16.msra.mxu0 0
        %3046 = vmatprep.mubr.bf16.mxu0 0
        %3047 = vmatmul.mubr.bf16.gmra.mrb[0].mxu0 %v2979
        %v3048 = vpop.f32.mrb[0].mxu0
        %v3049 = vadd.f32 %v2964, %v3048
        %v3050 = vpop.f32.mrb[0].mxu0
        %v3051 = vpop.f32.mrb[0].mxu0
        %v3052 = vadd.f32 %v2964, %v3051
        %v3053 = vpop.f32.mrb[0].mxu0
        %3054 = vmatprep.mubr.bf16.mxu0 0
        %3055 = vmatmul.mubr.bf16.gmra.mrb[0].mxu0 %v2982
        %v3056 = vpop.f32.mrb[0].mxu0
        %v3057 = vadd.f32 %v2964, %v3056
        %v3058 = vpop.f32.mrb[0].mxu0
        %v3059 = vpop.f32.mrb[0].mxu0
        %v3060 = vadd.f32 %v2964, %v3059
        %v3061 = vpop.f32.mrb[0].mxu0
        %3062 = vmatprep.mubr.bf16.mxu0 0
        %3063 = vmatmul.mubr.bf16.gmra.mrb[0].mxu0 %v2985
        %v3064 = vpop.f32.mrb[0].mxu0
        %v3065 = vadd.f32 %v2964, %v3064
        %v3066 = vpop.f32.mrb[0].mxu0
        %v3067 = vpop.f32.mrb[0].mxu0
        %v3068 = vadd.f32 %v2964, %v3067
        %v3069 = vpop.f32.mrb[0].mxu0
        %3070 = vmatprep.mubr.bf16.mxu0 0
        %3071 = vmatmul.mubr.bf16.gmra.mrb[0].mxu0 %v2988
        %v3072 = vpop.f32.mrb[0].mxu0
        %v3073 = vadd.f32 %v2964, %v3072
        %v3074 = vpop.f32.mrb[0].mxu0
        %v3075 = vpop.f32.mrb[0].mxu0
        %v3076 = vadd.f32 %v2964, %v3075
        %v3077 = vpop.f32.mrb[0].mxu0
        %3078 = vmatprep.mubr.bf16.mxu0 0
        %3079 = vmatmul.mubr.bf16.gmra.mrb[0].mxu0 %v2991
        %v3080 = vpop.f32.mrb[0].mxu0
        %v3081 = vadd.f32 %v2964, %v3080
        %v3082 = vpop.f32.mrb[0].mxu0
        %v3083 = vpop.f32.mrb[0].mxu0
        %v3084 = vadd.f32 %v2964, %v3083
        %v3085 = vpop.f32.mrb[0].mxu0
        %3086 = vmatprep.mubr.bf16.mxu0 0
        %3087 = vmatmul.mubr.bf16.gmra.mrb[0].mxu0 %v2994
        %v3088 = vpop.f32.mrb[0].mxu0
        %v3089 = vadd.f32 %v2964, %v3088
        %v3090 = vpop.f32.mrb[0].mxu0
        %v3091 = vpop.f32.mrb[0].mxu0
        %v3092 = vadd.f32 %v2964, %v3091
        %v3093 = vpop.f32.mrb[0].mxu0
        %3094 = vmatprep.mubr.bf16.mxu0 0
        %3095 = vmatmul.mubr.bf16.gmra.mrb[0].mxu0 %v2997
        %v3096 = vpop.f32.mrb[0].mxu0
        %v3097 = vadd.f32 %v2964, %v3096
        %v3098 = vpop.f32.mrb[0].mxu0
        %v3099 = vpop.f32.mrb[0].mxu0
        %v3100 = vadd.f32 %v2964, %v3099
        %v3101 = vpop.f32.mrb[0].mxu0
        %3102 = vmatprep.mubr.bf16.mxu0 0
        %3103 = vmatmul.mubr.bf16.gmra.mrb[0].mxu0 %v3000
        %v3104 = vpop.f32.mrb[0].mxu0
        %v3105 = vadd.f32 %v2964, %v3104
        %v3106 = vpop.f32.mrb[0].mxu0
        %v3107 = vpop.f32.mrb[0].mxu0
        %v3108 = vadd.f32 %v2964, %v3107
        %v3109 = vpop.f32.mrb[0].mxu0
        %3110 = vmatprep.mubr.bf16.mxu0 0
        %3111 = vmatmul.mubr.bf16.gmra.mrb[0].mxu0 %v3003
        %v3112 = vpop.f32.mrb[0].mxu0
        %v3113 = vadd.f32 %v2964, %v3112
        %v3114 = vpop.f32.mrb[0].mxu0
        %v3115 = vpop.f32.mrb[0].mxu0
        %v3116 = vadd.f32 %v2964, %v3115
        %v3117 = vpop.f32.mrb[0].mxu0
        %3118 = vmatprep.mubr.bf16.mxu0 0
        %3119 = vmatmul.mubr.bf16.gmra.mrb[0].mxu0 %v3006
        %v3120 = vpop.f32.mrb[0].mxu0
        %v3121 = vadd.f32 %v2964, %v3120
        %v3122 = vpop.f32.mrb[0].mxu0
        %v3123 = vpop.f32.mrb[0].mxu0
        %v3124 = vadd.f32 %v2964, %v3123
        %v3125 = vpop.f32.mrb[0].mxu0
        %3126 = vmatprep.mubr.bf16.mxu0 0
        %3127 = vmatmul.mubr.bf16.gmra.mrb[0].mxu0 %v3009
        %v3128 = vpop.f32.mrb[0].mxu0
        %v3129 = vadd.f32 %v2964, %v3128
        %v3130 = vpop.f32.mrb[0].mxu0
        %v3131 = vpop.f32.mrb[0].mxu0
        %v3132 = vadd.f32 %v2964, %v3131
        %v3133 = vpop.f32.mrb[0].mxu0
        %3134 = vmatprep.mubr.bf16.mxu0 0
        %3135 = vmatmul.mubr.bf16.gmra.mrb[0].mxu0 %v3012
        %v3136 = vpop.f32.mrb[0].mxu0
        %v3137 = vadd.f32 %v2964, %v3136
        %v3138 = vpop.f32.mrb[0].mxu0
        %v3139 = vpop.f32.mrb[0].mxu0
        %v3140 = vadd.f32 %v2964, %v3139
        %v3141 = vpop.f32.mrb[0].mxu0
        %3142 = vdwg.mxu0
        %3143 = vst [vmem:[%s231] sm:$0xff] %v3049
        %3144 = vst [vmem:[%s231 + $0x8] sm:$0xff] %v3052
        %3145 = vst [vmem:[%s231 + $0x10] sm:$0xff] %v3057
        %3146 = vst [vmem:[%s231 + $0x18] sm:$0xff] %v3060
        %3147 = vst [vmem:[%s231 + $0x20] sm:$0xff] %v3065
        %3148 = vst [vmem:[%s231 + $0x28] sm:$0xff] %v3068
        %3149 = vst [vmem:[%s231 + $0x30] sm:$0xff] %v3073
        %3150 = vst [vmem:[%s231 + $0x38] sm:$0xff] %v3076
        %3151 = vst [vmem:[%s231 + $0x40] sm:$0xff] %v3081
        %3152 = vst [vmem:[%s231 + $0x48] sm:$0xff] %v3084
        %3153 = vst [vmem:[%s231 + $0x50] sm:$0xff] %v3089
        %3154 = vst [vmem:[%s231 + $0x58] sm:$0xff] %v3092
        %3155 = vst [vmem:[%s231 + $0x60] sm:$0xff] %v3097
        %3156 = vst [vmem:[%s231 + $0x68] sm:$0xff] %v3100
        %3157 = vst [vmem:[%s231 + $0x70] sm:$0xff] %v3105
        %3158 = vst [vmem:[%s231 + $0x78] sm:$0xff] %v3108
        %3159 = vst [vmem:[%s231 + $0x80] sm:$0xff] %v3113
        %3160 = vst [vmem:[%s231 + $0x88] sm:$0xff] %v3116
        %3161 = vst [vmem:[%s231 + $0x90] sm:$0xff] %v3121
        %3162 = vst [vmem:[%s231 + $0x98] sm:$0xff] %v3124
        %3163 = vst [vmem:[%s231 + $0xa0] sm:$0xff] %v3129
        %3164 = vst [vmem:[%s231 + $0xa8] sm:$0xff] %v3132
        %3165 = vst [vmem:[%s231 + $0xb0] sm:$0xff] %v3137
        %3166 = vst [vmem:[%s231 + $0xb8] sm:$0xff] %v3140
        %s3167 = sand.u32 %s151, 1
        %s3168 = scalar_lea.sflag [#allocation4], %s3167
        %s3169 = sand.u32 %s151, 1
        %s3170 = smul.addr %s3169, 192
        %s3171 = scalar_lea.vmem [#allocation3], %s3170
        // Predicated region
        $region41: #{tpu_custom_call.1} parent=39 // pred_check
          %p3172 = pneg %p161
        $region42: #{tpu_custom_call.1} parent=39 // pred_check_branch
          %3174 = sbr.rel (%p3172) target = $region44
        $region43: #{tpu_custom_call.1} parent=39 // pred_region
          %s3175 = smul.u32 24, %s24
          %s3177 = ssub.s32 3072, 3072
          %3178 = vsyncadd %s3168, %s3177
          %s3179 = smul.addr %s23, 48
          %s3180 = sadd.s32 %s3175, %s3179
          %s3181 = smul.addr %s3180, 128
          %s3182 = scalar_lea.hbm %s5, %s3181
          %s3183 = sshll.u32 %s3171, 4
          %s3184 = int_to_ptr.vmem [resolvable:$true] %s3183
          %3189 = dma.vmem_to_hbm [thread:$0]  %s3184, 3072, %s3182, %s3168, 128, 128, 8
        $region44: #{tpu_custom_call.1} parent=39 // pred_fallthru
          _
      $region40: #{tpu_custom_call.1} parent=5 // pred_fallthru
        _
      %p3190 = scmp.le.s32.totalorder 2, %s14
      // Predicated region
      $region45: #{tpu_custom_call.1} parent=5 // pred_check
        %p3191 = pneg %p3190
      $region46: #{tpu_custom_call.1} parent=5 // pred_check_branch
        %3193 = sbr.rel (%p3191) target = $region48
      $region47: #{tpu_custom_call.1} parent=5 // pred_region
        %s3194 = ssub.s32 %s14, 2
        // Predicated region
        $region49: #{tpu_custom_call.1} parent=47 // pred_check
          %p3195 = pneg %p167
        $region50: #{tpu_custom_call.1} parent=47 // pred_check_branch
          %3197 = sbr.rel (%p3195) target = $region52
        $region51: #{tpu_custom_call.1} parent=47 // pred_region
          %s3198 = sand.u32 %s152, 1
          %s3199 = scalar_lea.sflag [#allocation4], %s3198
          %s3200 = sand.u32 %s152, 1
          %s3201 = smul.addr %s3200, 192
          %s3202 = scalar_lea.vmem [#allocation3], %s3201
          %3203 = dma.done %s3199, 3072
        $region52: #{tpu_custom_call.1} parent=47 // pred_fallthru
          _
      $region48: #{tpu_custom_call.1} parent=5 // pred_fallthru
        _
    $region6: #{tpu_custom_call.1} parent=1 // loop_footer
      %s18 = sadd.s32 1, %s14
    $region7: #{tpu_custom_call.1} parent=1 // loop_footer_branch
      %13 = sbr.rel target = $region3
    $region8: #{tpu_custom_call.1} parent=1 // loop_exit
      _
    %3204 = vsyncpa [#allocation4], 1
    %s3205 = scalar_lea.sflag [#allocation4], 1
    %3206 = vsyncpa %s3205, 1

</llo_original>
